<compile_context>
chip_gen: v7x
topology: tpu7x:2x2x1
jax: 0.10.0
libtpu: 0.0.40
codegen_flags: <defaults>
</compile_context>

<pallas_src>
import functools

import jax
import jax.numpy as jnp
from jax.experimental import pallas as pl
from jax.experimental.pallas import tpu as pltpu


# ---------------------------------------------------------------------------
# In-kernel helpers
# ---------------------------------------------------------------------------

def _shift_time(x, offset):
    """xs[:, t] = x[:, t + offset], zero-filled outside [0, T). `offset` is static."""
    if offset == 0:
        return x
    T = x.shape[-1]
    lane = jax.lax.broadcasted_iota(jnp.int32, x.shape, dimension=x.ndim - 1)
    if offset > 0:
        rolled = pltpu.roll(x, shift=T - offset, axis=x.ndim - 1)  # rolled[t] = x[(t+offset)%T]
        return jnp.where(lane < T - offset, rolled, 0.0)
    s = -offset
    rolled = pltpu.roll(x, shift=s, axis=x.ndim - 1)               # rolled[t] = x[(t-s)%T]
    return jnp.where(lane >= s, rolled, 0.0)


def _sigmoid(x):
    return 1.0 / (1.0 + jnp.exp(-x))


# ---------------------------------------------------------------------------
# Kernels
# ---------------------------------------------------------------------------

def _init_conv_kernel(x_ref, w_ref, b_ref, o_ref, *, kernel_size, dilation):
    # x_ref: (1, 1, T)  w_ref: (K, Co, 1)  b_ref: (Co, 1)  o_ref: (1, Co, T)
    x = x_ref[0]                       # (1, T)
    half = (kernel_size - 1) // 2
    acc = jnp.zeros(o_ref.shape[1:], jnp.float32)
    for k in range(kernel_size):
        xs = _shift_time(x, (k - half) * dilation)     # (1, T)
        acc = acc + w_ref[k] * xs                      # (Co,1)*(1,T) -> (Co,T)
    o_ref[0] = (acc + b_ref[...]).astype(o_ref.dtype)


def _wave_block_kernel(h_ref, c0w_ref, c0b_ref, fw_ref, fb_ref, gw_ref, gb_ref,
                       rw_ref, rb_ref, o_ref, *, num_layers, kernel_size):
    # h_ref: (1, C, T); weights: c0w (C,C), fw/gw (L*K, C, C), rw (L, C, C); biases (.., C, 1)
    h = h_ref[0]                                                        # (C, T)
    x = jnp.dot(c0w_ref[...], h, preferred_element_type=jnp.float32) + c0b_ref[...]
    res = x
    half = (kernel_size - 1) // 2
    for j in range(num_layers):                                         # static unroll
        d = 2 ** j
        f = jnp.zeros_like(x)
        g = jnp.zeros_like(x)
        for k in range(kernel_size):
            xs = _shift_time(x, (k - half) * d)
            f = f + jnp.dot(fw_ref[j * kernel_size + k], xs,
                            preferred_element_type=jnp.float32)
            g = g + jnp.dot(gw_ref[j * kernel_size + k], xs,
                            preferred_element_type=jnp.float32)
        f = f + fb_ref[j]
        g = g + gb_ref[j]
        z = jnp.tanh(f) * _sigmoid(g)
        x = jnp.dot(rw_ref[j], z, preferred_element_type=jnp.float32) + rb_ref[j]
        res = res + x
    o_ref[0] = res.astype(o_ref.dtype)


def _pool_kernel(x_ref, p_ref, o_ref):
    # x_ref: (1, C, T)  p_ref: (T, S)  o_ref: (1, C, S)
    o_ref[0] = jnp.dot(x_ref[0], p_ref[...],
                       preferred_element_type=jnp.float32).astype(o_ref.dtype)


# ---------------------------------------------------------------------------
# Wrappers (pallas_call)
# ---------------------------------------------------------------------------

def _full_spec(shape):
    rank = len(shape)
    return pl.BlockSpec(shape, lambda n, _r=rank: (0,) * _r)


def init_conv_pallas(x, w, b, *, kernel_size=3, dilation=1):
    # x: (N, 1, T)  w: (K, Co, 1)  b: (Co, 1)
    N, Ci, T = x.shape
    K, Co, _ = w.shape
    assert Ci == 1
    kern = functools.partial(_init_conv_kernel, kernel_size=kernel_size, dilation=dilation)
    return pl.pallas_call(
        kern,
        grid=(N,),
        in_specs=[
            pl.BlockSpec((1, Ci, T), lambda n: (n, 0, 0)),
            _full_spec((K, Co, 1)),
            _full_spec((Co, 1)),
        ],
        out_specs=pl.BlockSpec((1, Co, T), lambda n: (n, 0, 0)),
        out_shape=jax.ShapeDtypeStruct((N, Co, T), jnp.float32),
        compiler_params=pltpu.CompilerParams(dimension_semantics=("parallel",)),
    )(x, w, b)


def wave_block_pallas(h, blk, *, num_layers, kernel_size=3):
    # h: (N, C, T)
    N, C, T = h.shape
    LK = num_layers * kernel_size
    kern = functools.partial(_wave_block_kernel, num_layers=num_layers,
                             kernel_size=kernel_size)
    return pl.pallas_call(
        kern,
        grid=(N,),
        in_specs=[
            pl.BlockSpec((1, C, T), lambda n: (n, 0, 0)),
            _full_spec((C, C)), _full_spec((C, 1)),
            _full_spec((LK, C, C)), _full_spec((num_layers, C, 1)),
            _full_spec((LK, C, C)), _full_spec((num_layers, C, 1)),
            _full_spec((num_layers, C, C)), _full_spec((num_layers, C, 1)),
        ],
        out_specs=pl.BlockSpec((1, C, T), lambda n: (n, 0, 0)),
        out_shape=jax.ShapeDtypeStruct((N, C, T), jnp.float32),
        compiler_params=pltpu.CompilerParams(dimension_semantics=("parallel",)),
    )(h, blk["c0w"], blk["c0b"], blk["fw"], blk["fb"], blk["gw"], blk["gb"],
      blk["rw"], blk["rb"])


def _adaptive_pool_matrix(T, S):
    """Exact F.adaptive_avg_pool1d(T -> S) expressed as a (T, S) matrix."""
    cols = []
    for i in range(S):
        start = (i * T) // S
        end = -((-(i + 1) * T) // S)   # ceil((i+1)*T/S)
        col = jnp.zeros((T,), jnp.float32).at[start:end].set(1.0 / (end - start))
        cols.append(col)
    return jnp.stack(cols, axis=1)


def adaptive_avg_pool_time_pallas(x, out_size):
    # x: (M, C, T) -> (M, C, out_size)
    M, C, T = x.shape
    P = _adaptive_pool_matrix(T, out_size)
    return pl.pallas_call(
        _pool_kernel,
        grid=(M,),
        in_specs=[
            pl.BlockSpec((1, C, T), lambda n: (n, 0, 0)),
            _full_spec((T, out_size)),
        ],
        out_specs=pl.BlockSpec((1, C, out_size), lambda n: (n, 0, 0)),
        out_shape=jax.ShapeDtypeStruct((M, C, out_size), jnp.float32),
        compiler_params=pltpu.CompilerParams(dimension_semantics=("parallel",)),
    )(x, P)


# ---------------------------------------------------------------------------
# WavegramEncoder forward + parameter init
# ---------------------------------------------------------------------------

def init_wavegram_params(key, base_filters, wave_layers, kernel_size=3):
    F = base_filters
    K = kernel_size
    keys = jax.random.split(key, 2 + len(wave_layers))

    def nrm(k, shape, fan_in):
        return jax.random.normal(k, shape, jnp.float32) / jnp.sqrt(float(fan_in))

    params = {
        "init_w": nrm(keys[0], (K, F, 1), K),
        "init_b": 0.1 * jax.random.normal(keys[1], (F, 1), jnp.float32),
        "blocks": [],
    }
    for i, L in enumerate(wave_layers):
        bk = jax.random.split(keys[2 + i], 8)
        params["blocks"].append({
            "c0w": nrm(bk[0], (F, F), F),
            "c0b": 0.1 * jax.random.normal(bk[1], (F, 1), jnp.float32),
            "fw": nrm(bk[2], (L * K, F, F), F * K),
            "fb": 0.1 * jax.random.normal(bk[3], (L, F, 1), jnp.float32),
            "gw": nrm(bk[4], (L * K, F, F), F * K),
            "gb": 0.1 * jax.random.normal(bk[5], (L, F, 1), jnp.float32),
            "rw": nrm(bk[6], (L, F, F), F),
            "rb": 0.1 * jax.random.normal(bk[7], (L, F, 1), jnp.float32),
        })
    return params


def wavegram_encoder_forward(params, x, *, wave_layers, base_filters, output_size,
                             kernel_size=3):
    B, Cin, T = x.shape
    F = base_filters
    n_stages = len(wave_layers)
    # separate_channel=True: each input channel runs through the network independently.
    xs = x.reshape(B * Cin, 1, T).astype(jnp.float32)
    h = init_conv_pallas(xs, params["init_w"], params["init_b"],
                         kernel_size=kernel_size, dilation=1)              # (B*Cin, F, T)
    outs = []
    for i, L in enumerate(wave_layers):
        outs.append(wave_block_pallas(h, params["blocks"][i],
                                      num_layers=L, kernel_size=kernel_size))
    img = jnp.stack(outs, axis=1)                                          # (B*Cin, S_t, F, T)
    pooled = adaptive_avg_pool_time_pallas(
        img.reshape(B * Cin * n_stages, F, T), output_size)                # (.., F, out)
    pooled = pooled.reshape(B, Cin, n_stages, F, output_size)
    # TODO(synk): exact separate_channel merge order of the reference WaveNetSpectrogram is
    # not included in the spec; per-input-channel spectrograms are stacked along frequency.
    return pooled.transpose(0, 2, 1, 3, 4).reshape(B, n_stages, Cin * F, output_size)


# ---------------------------------------------------------------------------
# Pure-JAX reference (same math) for correctness check
# ---------------------------------------------------------------------------

def _ref_shift(x, offset):
    if offset == 0:
        return x
    T = x.shape[-1]
    if offset > 0:
        pad = jnp.zeros(x.shape[:-1] + (offset,), x.dtype)
        return jnp.concatenate([x[..., offset:], pad], axis=-1)
    s = -offset
    pad = jnp.zeros(x.shape[:-1] + (s,), x.dtype)
    return jnp.concatenate([pad, x[..., :T - s]], axis=-1)


def _ref_conv1d(x, w, b, dilation):
    # x (N, Ci, T), w (K, Co, Ci), b (Co, 1)
    K = w.shape[0]
    half = (K - 1) // 2
    terms = [jnp.einsum("oc,nct->not", w[k], _ref_shift(x, (k - half) * dilation))
             for k in range(K)]
    return sum(terms) + b[None]


def _ref_wave_block(h, blk, num_layers, kernel_size):
    C = h.shape[1]
    fw = blk["fw"].reshape(num_layers, kernel_size, C, C)
    gw = blk["gw"].reshape(num_layers, kernel_size, C, C)
    x = jnp.einsum("oc,nct->not", blk["c0w"], h) + blk["c0b"][None]
    res = x
    for j in range(num_layers):
        d = 2 ** j
        f = _ref_conv1d(x, fw[j], blk["fb"][j], d)
        g = _ref_conv1d(x, gw[j], blk["gb"][j], d)
        z = jnp.tanh(f) * _sigmoid(g)
        x = jnp.einsum("oc,nct->not", blk["rw"][j], z) + blk["rb"][j][None]
        res = res + x
    return res


def ref_forward(params, x, *, wave_layers, base_filters, output_size, kernel_size=3):
    B, Cin, T = x.shape
    F = base_filters
    n_stages = len(wave_layers)
    xs = x.reshape(B * Cin, 1, T).astype(jnp.float32)
    h = _ref_conv1d(xs, params["init_w"], params["init_b"], 1)
    outs = [_ref_wave_block(h, params["blocks"][i], L, kernel_size)
            for i, L in enumerate(wave_layers)]
    img = jnp.stack(outs, axis=1)
    P = _adaptive_pool_matrix(T, output_size)
    pooled = jnp.einsum("nct,ts->ncs", img.reshape(B * Cin * n_stages, F, T), P)
    pooled = pooled.reshape(B, Cin, n_stages, F, output_size)
    return pooled.transpose(0, 2, 1, 3, 4).reshape(B, n_stages, Cin * F, output_size)


# ---------------------------------------------------------------------------
# Demo / self-test (small config consistent with the module)
# ---------------------------------------------------------------------------

if __name__ == "__main__":
    B, Cin, T = 2, 4, 256          # T is a multiple of 128 (lane-dense)
    base_filters = 16              # multiple of 8 (f32 sublanes)
    wave_layers = (2, 2, 2)        # small version of the default (10,)*8
    output_size = 8                # small version of the default 320

    key = jax.random.PRNGKey(0)
    kx, kp = jax.random.split(key)
    x = jax.random.normal(kx, (B, Cin, T), jnp.float32)
    params = init_wavegram_params(kp, base_filters, wave_layers)

    fwd = jax.jit(functools.partial(
        wavegram_encoder_forward, wave_layers=wave_layers,
        base_filters=base_filters, output_size=output_size))

    out = jax.block_until_ready(fwd(params, x))
    assert out.shape == (B, len(wave_layers), Cin * base_filters, output_size), out.shape
    assert bool(jnp.all(jnp.isfinite(out)))

    ref = jax.block_until_ready(ref_forward(
        params, x, wave_layers=wave_layers,
        base_filters=base_filters, output_size=output_size))
    err = float(jnp.max(jnp.abs(out - ref)) / (jnp.max(jnp.abs(ref)) + 1e-6))
    assert err < 5e-2, f"max relative error too large: {err}"

    print("KERNEL_OK")
</pallas_src>

<mosaic_0001>
module attributes {stable_mosaic.version = 11 : i64} {
  func.func @_init_conv_kernel(%arg0: i32, %arg1: memref<1x1x256xf32, #tpu.memory_space<vmem>>, %arg2: memref<3x16x1xf32, #tpu.memory_space<vmem>>, %arg3: memref<16x1xf32, #tpu.memory_space<vmem>>, %arg4: memref<1x16x256xf32, #tpu.memory_space<vmem>>) attributes {dimension_semantics = [#tpu.dimension_semantics<parallel>], iteration_bounds = array<i64: 8>, scalar_prefetch = 0 : i64, scratch_operands = 0 : i64, tpu.core_type = #tpu.core_type<tc>, window_params = [{transform_indices = @transform_0, window_bounds = array<i64: 1, 1, 256>}, {pipeline_mode = #tpu.pipeline_mode<synchronous>, transform_indices = @transform_1, window_bounds = array<i64: 3, 16, 1>}, {pipeline_mode = #tpu.pipeline_mode<synchronous>, transform_indices = @transform_2, window_bounds = array<i64: 16, 1>}, {transform_indices = @transform_3, window_bounds = array<i64: 1, 16, 256>}]} {
    %c0 = arith.constant 0 : index
    %c0_0 = arith.constant 0 : index
    %c0_1 = arith.constant 0 : index
    %0 = vector.load %arg1[%c0, %c0_0, %c0_1] : memref<1x1x256xf32, #tpu.memory_space<vmem>>, vector<1x1x256xf32>
    %1 = vector.shape_cast %0 : vector<1x1x256xf32> to vector<1x256xf32>
    %cst = arith.constant 0.000000e+00 : f32
    %2 = vector.broadcast %cst : f32 to vector<16x256xf32>
    %3 = tpu.iota {dimensions = array<i32: 1>} : vector<1x256xi32>
    %c1_i32 = arith.constant 1 : i32
    %4 = tpu.dynamic_rotate %1 by %c1_i32 dim 1 : vector<1x256xf32>, i32 -> vector<1x256xf32>
    %c1_i32_2 = arith.constant 1 : i32
    %5 = vector.broadcast %c1_i32_2 : i32 to vector<1x256xi32>
    %6 = arith.cmpi sge, %3, %5 : vector<1x256xi32>
    %cst_3 = arith.constant 0.000000e+00 : f32
    %7 = vector.broadcast %cst_3 : f32 to vector<1x256xf32>
    %8 = arith.select %6, %4, %7 : vector<1x256xi1>, vector<1x256xf32>
    %c0_4 = arith.constant 0 : index
    %c0_5 = arith.constant 0 : index
    %c0_6 = arith.constant 0 : index
    %9 = vector.load %arg2[%c0_4, %c0_5, %c0_6] : memref<3x16x1xf32, #tpu.memory_space<vmem>>, vector<1x16x1xf32>
    %10 = vector.shape_cast %9 : vector<1x16x1xf32> to vector<16x1xf32>
    %11 = vector.broadcast %10 : vector<16x1xf32> to vector<16x256xf32>
    %12 = vector.broadcast %8 : vector<1x256xf32> to vector<16x256xf32>
    %13 = arith.mulf %11, %12 : vector<16x256xf32>
    %14 = arith.addf %2, %13 : vector<16x256xf32>
    %c1 = arith.constant 1 : index
    %c0_7 = arith.constant 0 : index
    %c0_8 = arith.constant 0 : index
    %15 = vector.load %arg2[%c1, %c0_7, %c0_8] : memref<3x16x1xf32, #tpu.memory_space<vmem>>, vector<1x16x1xf32>
    %16 = vector.shape_cast %15 : vector<1x16x1xf32> to vector<16x1xf32>
    %17 = vector.broadcast %16 : vector<16x1xf32> to vector<16x256xf32>
    %18 = vector.broadcast %1 : vector<1x256xf32> to vector<16x256xf32>
    %19 = arith.mulf %17, %18 : vector<16x256xf32>
    %20 = arith.addf %14, %19 : vector<16x256xf32>
    %21 = tpu.iota {dimensions = array<i32: 1>} : vector<1x256xi32>
    %c255_i32 = arith.constant 255 : i32
    %22 = tpu.dynamic_rotate %1 by %c255_i32 dim 1 : vector<1x256xf32>, i32 -> vector<1x256xf32>
    %c255_i32_9 = arith.constant 255 : i32
    %23 = vector.broadcast %c255_i32_9 : i32 to vector<1x256xi32>
    %24 = arith.cmpi slt, %21, %23 : vector<1x256xi32>
    %cst_10 = arith.constant 0.000000e+00 : f32
    %25 = vector.broadcast %cst_10 : f32 to vector<1x256xf32>
    %26 = arith.select %24, %22, %25 : vector<1x256xi1>, vector<1x256xf32>
    %c2 = arith.constant 2 : index
    %c0_11 = arith.constant 0 : index
    %c0_12 = arith.constant 0 : index
    %27 = vector.load %arg2[%c2, %c0_11, %c0_12] : memref<3x16x1xf32, #tpu.memory_space<vmem>>, vector<1x16x1xf32>
    %28 = vector.shape_cast %27 : vector<1x16x1xf32> to vector<16x1xf32>
    %29 = vector.broadcast %28 : vector<16x1xf32> to vector<16x256xf32>
    %30 = vector.broadcast %26 : vector<1x256xf32> to vector<16x256xf32>
    %31 = arith.mulf %29, %30 : vector<16x256xf32>
    %32 = arith.addf %20, %31 : vector<16x256xf32>
    %c0_13 = arith.constant 0 : index
    %c0_14 = arith.constant 0 : index
    %33 = vector.load %arg3[%c0_13, %c0_14] : memref<16x1xf32, #tpu.memory_space<vmem>>, vector<16x1xf32>
    %34 = vector.broadcast %33 : vector<16x1xf32> to vector<16x256xf32>
    %35 = arith.addf %32, %34 : vector<16x256xf32>
    %c0_15 = arith.constant 0 : index
    %c0_16 = arith.constant 0 : index
    %c0_17 = arith.constant 0 : index
    %36 = vector.load %arg4[%c0_15, %c0_16, %c0_17] : memref<1x16x256xf32, #tpu.memory_space<vmem>>, vector<1x16x256xf32>
    %37 = vector.shape_cast %36 : vector<1x16x256xf32> to vector<16x256xf32>
    %38 = vector.shape_cast %35 : vector<16x256xf32> to vector<1x16x256xf32>
    tpu.vector_store %arg4[%c0_15, %c0_16, %c0_17], %38 {strides = array<i32>} : memref<1x16x256xf32, #tpu.memory_space<vmem>>, vector<1x16x256xf32>,
    return
  }
  func.func @transform_0(%arg0: i32) -> (i32, i32, i32) {
    %c0_i32 = arith.constant 0 : i32
    %c0_i32_0 = arith.constant 0 : i32
    %c0_i32_1 = arith.constant 0 : i32
    return %arg0, %c0_i32, %c0_i32_0 : i32, i32, i32
  }
  func.func @transform_1(%arg0: i32) -> (i32, i32, i32) {
    %c0_i32 = arith.constant 0 : i32
    %c0_i32_0 = arith.constant 0 : i32
    %c0_i32_1 = arith.constant 0 : i32
    %c0_i32_2 = arith.constant 0 : i32
    return %c0_i32, %c0_i32_0, %c0_i32_1 : i32, i32, i32
  }
  func.func @transform_2(%arg0: i32) -> (i32, i32) {
    %c0_i32 = arith.constant 0 : i32
    %c0_i32_0 = arith.constant 0 : i32
    %c0_i32_1 = arith.constant 0 : i32
    return %c0_i32, %c0_i32_0 : i32, i32
  }
  func.func @transform_3(%arg0: i32) -> (i32, i32, i32) {
    %c0_i32 = arith.constant 0 : i32
    %c0_i32_0 = arith.constant 0 : i32
    %c0_i32_1 = arith.constant 0 : i32
    return %arg0, %c0_i32, %c0_i32_0 : i32, i32, i32
  }
}

module attributes {stable_mosaic.version = 11 : i64} {
  func.func @_wave_block_kernel(%arg0: i32, %arg1: memref<1x16x256xf32, #tpu.memory_space<vmem>>, %arg2: memref<16x16xf32, #tpu.memory_space<vmem>>, %arg3: memref<16x1xf32, #tpu.memory_space<vmem>>, %arg4: memref<6x16x16xf32, #tpu.memory_space<vmem>>, %arg5: memref<2x16x1xf32, #tpu.memory_space<vmem>>, %arg6: memref<6x16x16xf32, #tpu.memory_space<vmem>>, %arg7: memref<2x16x1xf32, #tpu.memory_space<vmem>>, %arg8: memref<2x16x16xf32, #tpu.memory_space<vmem>>, %arg9: memref<2x16x1xf32, #tpu.memory_space<vmem>>, %arg10: memref<1x16x256xf32, #tpu.memory_space<vmem>>) attributes {dimension_semantics = [#tpu.dimension_semantics<parallel>], iteration_bounds = array<i64: 8>, scalar_prefetch = 0 : i64, scratch_operands = 0 : i64, tpu.core_type = #tpu.core_type<tc>, window_params = [{transform_indices = @transform_0, window_bounds = array<i64: 1, 16, 256>}, {pipeline_mode = #tpu.pipeline_mode<synchronous>, transform_indices = @transform_1, window_bounds = array<i64: 16, 16>}, {pipeline_mode = #tpu.pipeline_mode<synchronous>, transform_indices = @transform_2, window_bounds = array<i64: 16, 1>}, {pipeline_mode = #tpu.pipeline_mode<synchronous>, transform_indices = @transform_3, window_bounds = array<i64: 6, 16, 16>}, {pipeline_mode = #tpu.pipeline_mode<synchronous>, transform_indices = @transform_4, window_bounds = array<i64: 2, 16, 1>}, {pipeline_mode = #tpu.pipeline_mode<synchronous>, transform_indices = @transform_5, window_bounds = array<i64: 6, 16, 16>}, {pipeline_mode = #tpu.pipeline_mode<synchronous>, transform_indices = @transform_6, window_bounds = array<i64: 2, 16, 1>}, {pipeline_mode = #tpu.pipeline_mode<synchronous>, transform_indices = @transform_7, window_bounds = array<i64: 2, 16, 16>}, {pipeline_mode = #tpu.pipeline_mode<synchronous>, transform_indices = @transform_8, window_bounds = array<i64: 2, 16, 1>}, {transform_indices = @transform_9, window_bounds = array<i64: 1, 16, 256>}]} {
    %c0 = arith.constant 0 : index
    %c0_0 = arith.constant 0 : index
    %c0_1 = arith.constant 0 : index
    %0 = vector.load %arg1[%c0, %c0_0, %c0_1] : memref<1x16x256xf32, #tpu.memory_space<vmem>>, vector<1x16x256xf32>
    %1 = vector.shape_cast %0 : vector<1x16x256xf32> to vector<16x256xf32>
    %c0_2 = arith.constant 0 : index
    %c0_3 = arith.constant 0 : index
    %2 = vector.load %arg2[%c0_2, %c0_3] : memref<16x16xf32, #tpu.memory_space<vmem>>, vector<16x16xf32>
    %cst = arith.constant dense<0.000000e+00> : vector<16x256xf32>
    %3 = tpu.matmul %2, %1, %cst {dimension_numbers = #tpu.dot_dimension_numbers<[1], [0], [0], [1], [0, 0, 1, 1], [], []>} : vector<16x16xf32>, vector<16x256xf32>, vector<16x256xf32> -> vector<16x256xf32>
    %c0_4 = arith.constant 0 : index
    %c0_5 = arith.constant 0 : index
    %4 = vector.load %arg3[%c0_4, %c0_5] : memref<16x1xf32, #tpu.memory_space<vmem>>, vector<16x1xf32>
    %5 = vector.broadcast %4 : vector<16x1xf32> to vector<16x256xf32>
    %6 = arith.addf %3, %5 : vector<16x256xf32>
    %cst_6 = arith.constant 0.000000e+00 : f32
    %7 = vector.broadcast %cst_6 : f32 to vector<16x256xf32>
    %cst_7 = arith.constant 0.000000e+00 : f32
    %8 = vector.broadcast %cst_7 : f32 to vector<16x256xf32>
    %9 = tpu.iota {dimensions = array<i32: 1>} : vector<16x256xi32>
    %c1_i32 = arith.constant 1 : i32
    %10 = tpu.dynamic_rotate %6 by %c1_i32 dim 1 : vector<16x256xf32>, i32 -> vector<16x256xf32>
    %c1_i32_8 = arith.constant 1 : i32
    %11 = vector.broadcast %c1_i32_8 : i32 to vector<16x256xi32>
    %12 = arith.cmpi sge, %9, %11 : vector<16x256xi32>
    %cst_9 = arith.constant 0.000000e+00 : f32
    %13 = vector.broadcast %cst_9 : f32 to vector<16x256xf32>
    %14 = arith.select %12, %10, %13 : vector<16x256xi1>, vector<16x256xf32>
    %c0_10 = arith.constant 0 : index
    %c0_11 = arith.constant 0 : index
    %c0_12 = arith.constant 0 : index
    %15 = vector.load %arg4[%c0_10, %c0_11, %c0_12] : memref<6x16x16xf32, #tpu.memory_space<vmem>>, vector<1x16x16xf32>
    %16 = vector.shape_cast %15 : vector<1x16x16xf32> to vector<16x16xf32>
    %cst_13 = arith.constant dense<0.000000e+00> : vector<16x256xf32>
    %17 = tpu.matmul %16, %14, %cst_13 {dimension_numbers = #tpu.dot_dimension_numbers<[1], [0], [0], [1], [0, 0, 1, 1], [], []>} : vector<16x16xf32>, vector<16x256xf32>, vector<16x256xf32> -> vector<16x256xf32>
    %18 = arith.addf %7, %17 : vector<16x256xf32>
    %c0_14 = arith.constant 0 : index
    %c0_15 = arith.constant 0 : index
    %c0_16 = arith.constant 0 : index
    %19 = vector.load %arg6[%c0_14, %c0_15, %c0_16] : memref<6x16x16xf32, #tpu.memory_space<vmem>>, vector<1x16x16xf32>
    %20 = vector.shape_cast %19 : vector<1x16x16xf32> to vector<16x16xf32>
    %cst_17 = arith.constant dense<0.000000e+00> : vector<16x256xf32>
    %21 = tpu.matmul %20, %14, %cst_17 {dimension_numbers = #tpu.dot_dimension_numbers<[1], [0], [0], [1], [0, 0, 1, 1], [], []>} : vector<16x16xf32>, vector<16x256xf32>, vector<16x256xf32> -> vector<16x256xf32>
    %22 = arith.addf %8, %21 : vector<16x256xf32>
    %c1 = arith.constant 1 : index
    %c0_18 = arith.constant 0 : index
    %c0_19 = arith.constant 0 : index
    %23 = vector.load %arg4[%c1, %c0_18, %c0_19] : memref<6x16x16xf32, #tpu.memory_space<vmem>>, vector<1x16x16xf32>
    %24 = vector.shape_cast %23 : vector<1x16x16xf32> to vector<16x16xf32>
    %cst_20 = arith.constant dense<0.000000e+00> : vector<16x256xf32>
    %25 = tpu.matmul %24, %6, %cst_20 {dimension_numbers = #tpu.dot_dimension_numbers<[1], [0], [0], [1], [0, 0, 1, 1], [], []>} : vector<16x16xf32>, vector<16x256xf32>, vector<16x256xf32> -> vector<16x256xf32>
    %26 = arith.addf %18, %25 : vector<16x256xf32>
    %c1_21 = arith.constant 1 : index
    %c0_22 = arith.constant 0 : index
    %c0_23 = arith.constant 0 : index
    %27 = vector.load %arg6[%c1_21, %c0_22, %c0_23] : memref<6x16x16xf32, #tpu.memory_space<vmem>>, vector<1x16x16xf32>
    %28 = vector.shape_cast %27 : vector<1x16x16xf32> to vector<16x16xf32>
    %cst_24 = arith.constant dense<0.000000e+00> : vector<16x256xf32>
    %29 = tpu.matmul %28, %6, %cst_24 {dimension_numbers = #tpu.dot_dimension_numbers<[1], [0], [0], [1], [0, 0, 1, 1], [], []>} : vector<16x16xf32>, vector<16x256xf32>, vector<16x256xf32> -> vector<16x256xf32>
    %30 = arith.addf %22, %29 : vector<16x256xf32>
    %31 = tpu.iota {dimensions = array<i32: 1>} : vector<16x256xi32>
    %c255_i32 = arith.constant 255 : i32
    %32 = tpu.dynamic_rotate %6 by %c255_i32 dim 1 : vector<16x256xf32>, i32 -> vector<16x256xf32>
    %c255_i32_25 = arith.constant 255 : i32
    %33 = vector.broadcast %c255_i32_25 : i32 to vector<16x256xi32>
    %34 = arith.cmpi slt, %31, %33 : vector<16x256xi32>
    %cst_26 = arith.constant 0.000000e+00 : f32
    %35 = vector.broadcast %cst_26 : f32 to vector<16x256xf32>
    %36 = arith.select %34, %32, %35 : vector<16x256xi1>, vector<16x256xf32>
    %c2 = arith.constant 2 : index
    %c0_27 = arith.constant 0 : index
    %c0_28 = arith.constant 0 : index
    %37 = vector.load %arg4[%c2, %c0_27, %c0_28] : memref<6x16x16xf32, #tpu.memory_space<vmem>>, vector<1x16x16xf32>
    %38 = vector.shape_cast %37 : vector<1x16x16xf32> to vector<16x16xf32>
    %cst_29 = arith.constant dense<0.000000e+00> : vector<16x256xf32>
    %39 = tpu.matmul %38, %36, %cst_29 {dimension_numbers = #tpu.dot_dimension_numbers<[1], [0], [0], [1], [0, 0, 1, 1], [], []>} : vector<16x16xf32>, vector<16x256xf32>, vector<16x256xf32> -> vector<16x256xf32>
    %40 = arith.addf %26, %39 : vector<16x256xf32>
    %c2_30 = arith.constant 2 : index
    %c0_31 = arith.constant 0 : index
    %c0_32 = arith.constant 0 : index
    %41 = vector.load %arg6[%c2_30, %c0_31, %c0_32] : memref<6x16x16xf32, #tpu.memory_space<vmem>>, vector<1x16x16xf32>
    %42 = vector.shape_cast %41 : vector<1x16x16xf32> to vector<16x16xf32>
    %cst_33 = arith.constant dense<0.000000e+00> : vector<16x256xf32>
    %43 = tpu.matmul %42, %36, %cst_33 {dimension_numbers = #tpu.dot_dimension_numbers<[1], [0], [0], [1], [0, 0, 1, 1], [], []>} : vector<16x16xf32>, vector<16x256xf32>, vector<16x256xf32> -> vector<16x256xf32>
    %44 = arith.addf %30, %43 : vector<16x256xf32>
    %c0_34 = arith.constant 0 : index
    %c0_35 = arith.constant 0 : index
    %c0_36 = arith.constant 0 : index
    %45 = vector.load %arg5[%c0_34, %c0_35, %c0_36] : memref<2x16x1xf32, #tpu.memory_space<vmem>>, vector<1x16x1xf32>
    %46 = vector.shape_cast %45 : vector<1x16x1xf32> to vector<16x1xf32>
    %47 = vector.broadcast %46 : vector<16x1xf32> to vector<16x256xf32>
    %48 = arith.addf %40, %47 : vector<16x256xf32>
    %c0_37 = arith.constant 0 : index
    %c0_38 = arith.constant 0 : index
    %c0_39 = arith.constant 0 : index
    %49 = vector.load %arg7[%c0_37, %c0_38, %c0_39] : memref<2x16x1xf32, #tpu.memory_space<vmem>>, vector<1x16x1xf32>
    %50 = vector.shape_cast %49 : vector<1x16x1xf32> to vector<16x1xf32>
    %51 = vector.broadcast %50 : vector<16x1xf32> to vector<16x256xf32>
    %52 = arith.addf %44, %51 : vector<16x256xf32>
    %53 = math.tanh %48 : vector<16x256xf32>
    %cst_40 = arith.constant 0.000000e+00 : f32
    %54 = vector.broadcast %cst_40 : f32 to vector<16x256xf32>
    %55 = arith.subf %54, %52 : vector<16x256xf32>
    %56 = math.exp %55 : vector<16x256xf32>
    %cst_41 = arith.constant 1.000000e+00 : f32
    %57 = vector.broadcast %cst_41 : f32 to vector<16x256xf32>
    %58 = arith.addf %57, %56 : vector<16x256xf32>
    %cst_42 = arith.constant 1.000000e+00 : f32
    %59 = vector.broadcast %cst_42 : f32 to vector<16x256xf32>
    %60 = arith.divf %59, %58 : vector<16x256xf32>
    %61 = arith.mulf %53, %60 : vector<16x256xf32>
    %c0_43 = arith.constant 0 : index
    %c0_44 = arith.constant 0 : index
    %c0_45 = arith.constant 0 : index
    %62 = vector.load %arg8[%c0_43, %c0_44, %c0_45] : memref<2x16x16xf32, #tpu.memory_space<vmem>>, vector<1x16x16xf32>
    %63 = vector.shape_cast %62 : vector<1x16x16xf32> to vector<16x16xf32>
    %cst_46 = arith.constant dense<0.000000e+00> : vector<16x256xf32>
    %64 = tpu.matmul %63, %61, %cst_46 {dimension_numbers = #tpu.dot_dimension_numbers<[1], [0], [0], [1], [0, 0, 1, 1], [], []>} : vector<16x16xf32>, vector<16x256xf32>, vector<16x256xf32> -> vector<16x256xf32>
    %c0_47 = arith.constant 0 : index
    %c0_48 = arith.constant 0 : index
    %c0_49 = arith.constant 0 : index
    %65 = vector.load %arg9[%c0_47, %c0_48, %c0_49] : memref<2x16x1xf32, #tpu.memory_space<vmem>>, vector<1x16x1xf32>
    %66 = vector.shape_cast %65 : vector<1x16x1xf32> to vector<16x1xf32>
    %67 = vector.broadcast %66 : vector<16x1xf32> to vector<16x256xf32>
    %68 = arith.addf %64, %67 : vector<16x256xf32>
    %69 = arith.addf %6, %68 : vector<16x256xf32>
    %cst_50 = arith.constant 0.000000e+00 : f32
    %70 = vector.broadcast %cst_50 : f32 to vector<16x256xf32>
    %cst_51 = arith.constant 0.000000e+00 : f32
    %71 = vector.broadcast %cst_51 : f32 to vector<16x256xf32>
    %72 = tpu.iota {dimensions = array<i32: 1>} : vector<16x256xi32>
    %c2_i32 = arith.constant 2 : i32
    %73 = tpu.dynamic_rotate %68 by %c2_i32 dim 1 : vector<16x256xf32>, i32 -> vector<16x256xf32>
    %c2_i32_52 = arith.constant 2 : i32
    %74 = vector.broadcast %c2_i32_52 : i32 to vector<16x256xi32>
    %75 = arith.cmpi sge, %72, %74 : vector<16x256xi32>
    %cst_53 = arith.constant 0.000000e+00 : f32
    %76 = vector.broadcast %cst_53 : f32 to vector<16x256xf32>
    %77 = arith.select %75, %73, %76 : vector<16x256xi1>, vector<16x256xf32>
    %c3 = arith.constant 3 : index
    %c0_54 = arith.constant 0 : index
    %c0_55 = arith.constant 0 : index
    %78 = vector.load %arg4[%c3, %c0_54, %c0_55] : memref<6x16x16xf32, #tpu.memory_space<vmem>>, vector<1x16x16xf32>
    %79 = vector.shape_cast %78 : vector<1x16x16xf32> to vector<16x16xf32>
    %cst_56 = arith.constant dense<0.000000e+00> : vector<16x256xf32>
    %80 = tpu.matmul %79, %77, %cst_56 {dimension_numbers = #tpu.dot_dimension_numbers<[1], [0], [0], [1], [0, 0, 1, 1], [], []>} : vector<16x16xf32>, vector<16x256xf32>, vector<16x256xf32> -> vector<16x256xf32>
    %81 = arith.addf %70, %80 : vector<16x256xf32>
    %c3_57 = arith.constant 3 : index
    %c0_58 = arith.constant 0 : index
    %c0_59 = arith.constant 0 : index
    %82 = vector.load %arg6[%c3_57, %c0_58, %c0_59] : memref<6x16x16xf32, #tpu.memory_space<vmem>>, vector<1x16x16xf32>
    %83 = vector.shape_cast %82 : vector<1x16x16xf32> to vector<16x16xf32>
    %cst_60 = arith.constant dense<0.000000e+00> : vector<16x256xf32>
    %84 = tpu.matmul %83, %77, %cst_60 {dimension_numbers = #tpu.dot_dimension_numbers<[1], [0], [0], [1], [0, 0, 1, 1], [], []>} : vector<16x16xf32>, vector<16x256xf32>, vector<16x256xf32> -> vector<16x256xf32>
    %85 = arith.addf %71, %84 : vector<16x256xf32>
    %c4 = arith.constant 4 : index
    %c0_61 = arith.constant 0 : index
    %c0_62 = arith.constant 0 : index
    %86 = vector.load %arg4[%c4, %c0_61, %c0_62] : memref<6x16x16xf32, #tpu.memory_space<vmem>>, vector<1x16x16xf32>
    %87 = vector.shape_cast %86 : vector<1x16x16xf32> to vector<16x16xf32>
    %cst_63 = arith.constant dense<0.000000e+00> : vector<16x256xf32>
    %88 = tpu.matmul %87, %68, %cst_63 {dimension_numbers = #tpu.dot_dimension_numbers<[1], [0], [0], [1], [0, 0, 1, 1], [], []>} : vector<16x16xf32>, vector<16x256xf32>, vector<16x256xf32> -> vector<16x256xf32>
    %89 = arith.addf %81, %88 : vector<16x256xf32>
    %c4_64 = arith.constant 4 : index
    %c0_65 = arith.constant 0 : index
    %c0_66 = arith.constant 0 : index
    %90 = vector.load %arg6[%c4_64, %c0_65, %c0_66] : memref<6x16x16xf32, #tpu.memory_space<vmem>>, vector<1x16x16xf32>
    %91 = vector.shape_cast %90 : vector<1x16x16xf32> to vector<16x16xf32>
    %cst_67 = arith.constant dense<0.000000e+00> : vector<16x256xf32>
    %92 = tpu.matmul %91, %68, %cst_67 {dimension_numbers = #tpu.dot_dimension_numbers<[1], [0], [0], [1], [0, 0, 1, 1], [], []>} : vector<16x16xf32>, vector<16x256xf32>, vector<16x256xf32> -> vector<16x256xf32>
    %93 = arith.addf %85, %92 : vector<16x256xf32>
    %94 = tpu.iota {dimensions = array<i32: 1>} : vector<16x256xi32>
    %c254_i32 = arith.constant 254 : i32
    %95 = tpu.dynamic_rotate %68 by %c254_i32 dim 1 : vector<16x256xf32>, i32 -> vector<16x256xf32>
    %c254_i32_68 = arith.constant 254 : i32
    %96 = vector.broadcast %c254_i32_68 : i32 to vector<16x256xi32>
    %97 = arith.cmpi slt, %94, %96 : vector<16x256xi32>
    %cst_69 = arith.constant 0.000000e+00 : f32
    %98 = vector.broadcast %cst_69 : f32 to vector<16x256xf32>
    %99 = arith.select %97, %95, %98 : vector<16x256xi1>, vector<16x256xf32>
    %c5 = arith.constant 5 : index
    %c0_70 = arith.constant 0 : index
    %c0_71 = arith.constant 0 : index
    %100 = vector.load %arg4[%c5, %c0_70, %c0_71] : memref<6x16x16xf32, #tpu.memory_space<vmem>>, vector<1x16x16xf32>
    %101 = vector.shape_cast %100 : vector<1x16x16xf32> to vector<16x16xf32>
    %cst_72 = arith.constant dense<0.000000e+00> : vector<16x256xf32>
    %102 = tpu.matmul %101, %99, %cst_72 {dimension_numbers = #tpu.dot_dimension_numbers<[1], [0], [0], [1], [0, 0, 1, 1], [], []>} : vector<16x16xf32>, vector<16x256xf32>, vector<16x256xf32> -> vector<16x256xf32>
    %103 = arith.addf %89, %102 : vector<16x256xf32>
    %c5_73 = arith.constant 5 : index
    %c0_74 = arith.constant 0 : index
    %c0_75 = arith.constant 0 : index
    %104 = vector.load %arg6[%c5_73, %c0_74, %c0_75] : memref<6x16x16xf32, #tpu.memory_space<vmem>>, vector<1x16x16xf32>
    %105 = vector.shape_cast %104 : vector<1x16x16xf32> to vector<16x16xf32>
    %cst_76 = arith.constant dense<0.000000e+00> : vector<16x256xf32>
    %106 = tpu.matmul %105, %99, %cst_76 {dimension_numbers = #tpu.dot_dimension_numbers<[1], [0], [0], [1], [0, 0, 1, 1], [], []>} : vector<16x16xf32>, vector<16x256xf32>, vector<16x256xf32> -> vector<16x256xf32>
    %107 = arith.addf %93, %106 : vector<16x256xf32>
    %c1_77 = arith.constant 1 : index
    %c0_78 = arith.constant 0 : index
    %c0_79 = arith.constant 0 : index
    %108 = vector.load %arg5[%c1_77, %c0_78, %c0_79] : memref<2x16x1xf32, #tpu.memory_space<vmem>>, vector<1x16x1xf32>
    %109 = vector.shape_cast %108 : vector<1x16x1xf32> to vector<16x1xf32>
    %110 = vector.broadcast %109 : vector<16x1xf32> to vector<16x256xf32>
    %111 = arith.addf %103, %110 : vector<16x256xf32>
    %c1_80 = arith.constant 1 : index
    %c0_81 = arith.constant 0 : index
    %c0_82 = arith.constant 0 : index
    %112 = vector.load %arg7[%c1_80, %c0_81, %c0_82] : memref<2x16x1xf32, #tpu.memory_space<vmem>>, vector<1x16x1xf32>
    %113 = vector.shape_cast %112 : vector<1x16x1xf32> to vector<16x1xf32>
    %114 = vector.broadcast %113 : vector<16x1xf32> to vector<16x256xf32>
    %115 = arith.addf %107, %114 : vector<16x256xf32>
    %116 = math.tanh %111 : vector<16x256xf32>
    %cst_83 = arith.constant 0.000000e+00 : f32
    %117 = vector.broadcast %cst_83 : f32 to vector<16x256xf32>
    %118 = arith.subf %117, %115 : vector<16x256xf32>
    %119 = math.exp %118 : vector<16x256xf32>
    %cst_84 = arith.constant 1.000000e+00 : f32
    %120 = vector.broadcast %cst_84 : f32 to vector<16x256xf32>
    %121 = arith.addf %120, %119 : vector<16x256xf32>
    %cst_85 = arith.constant 1.000000e+00 : f32
    %122 = vector.broadcast %cst_85 : f32 to vector<16x256xf32>
    %123 = arith.divf %122, %121 : vector<16x256xf32>
    %124 = arith.mulf %116, %123 : vector<16x256xf32>
    %c1_86 = arith.constant 1 : index
    %c0_87 = arith.constant 0 : index
    %c0_88 = arith.constant 0 : index
    %125 = vector.load %arg8[%c1_86, %c0_87, %c0_88] : memref<2x16x16xf32, #tpu.memory_space<vmem>>, vector<1x16x16xf32>
    %126 = vector.shape_cast %125 : vector<1x16x16xf32> to vector<16x16xf32>
    %cst_89 = arith.constant dense<0.000000e+00> : vector<16x256xf32>
    %127 = tpu.matmul %126, %124, %cst_89 {dimension_numbers = #tpu.dot_dimension_numbers<[1], [0], [0], [1], [0, 0, 1, 1], [], []>} : vector<16x16xf32>, vector<16x256xf32>, vector<16x256xf32> -> vector<16x256xf32>
    %c1_90 = arith.constant 1 : index
    %c0_91 = arith.constant 0 : index
    %c0_92 = arith.constant 0 : index
    %128 = vector.load %arg9[%c1_90, %c0_91, %c0_92] : memref<2x16x1xf32, #tpu.memory_space<vmem>>, vector<1x16x1xf32>
    %129 = vector.shape_cast %128 : vector<1x16x1xf32> to vector<16x1xf32>
    %130 = vector.broadcast %129 : vector<16x1xf32> to vector<16x256xf32>
    %131 = arith.addf %127, %130 : vector<16x256xf32>
    %132 = arith.addf %69, %131 : vector<16x256xf32>
    %c0_93 = arith.constant 0 : index
    %c0_94 = arith.constant 0 : index
    %c0_95 = arith.constant 0 : index
    %133 = vector.load %arg10[%c0_93, %c0_94, %c0_95] : memref<1x16x256xf32, #tpu.memory_space<vmem>>, vector<1x16x256xf32>
    %134 = vector.shape_cast %133 : vector<1x16x256xf32> to vector<16x256xf32>
    %135 = vector.shape_cast %132 : vector<16x256xf32> to vector<1x16x256xf32>
    tpu.vector_store %arg10[%c0_93, %c0_94, %c0_95], %135 {strides = array<i32>} : memref<1x16x256xf32, #tpu.memory_space<vmem>>, vector<1x16x256xf32>,
    return
  }
  func.func @transform_0(%arg0: i32) -> (i32, i32, i32) {
    %c0_i32 = arith.constant 0 : i32
    %c0_i32_0 = arith.constant 0 : i32
    %c0_i32_1 = arith.constant 0 : i32
    return %arg0, %c0_i32, %c0_i32_0 : i32, i32, i32
  }
  func.func @transform_1(%arg0: i32) -> (i32, i32) {
    %c0_i32 = arith.constant 0 : i32
    %c0_i32_0 = arith.constant 0 : i32
    %c0_i32_1 = arith.constant 0 : i32
    return %c0_i32, %c0_i32_0 : i32, i32
  }
  func.func @transform_2(%arg0: i32) -> (i32, i32) {
    %c0_i32 = arith.constant 0 : i32
    %c0_i32_0 = arith.constant 0 : i32
    %c0_i32_1 = arith.constant 0 : i32
    return %c0_i32, %c0_i32_0 : i32, i32
  }
  func.func @transform_3(%arg0: i32) -> (i32, i32, i32) {
    %c0_i32 = arith.constant 0 : i32
    %c0_i32_0 = arith.constant 0 : i32
    %c0_i32_1 = arith.constant 0 : i32
    %c0_i32_2 = arith.constant 0 : i32
    return %c0_i32, %c0_i32_0, %c0_i32_1 : i32, i32, i32
  }
  func.func @transform_4(%arg0: i32) -> (i32, i32, i32) {
    %c0_i32 = arith.constant 0 : i32
    %c0_i32_0 = arith.constant 0 : i32
    %c0_i32_1 = arith.constant 0 : i32
    %c0_i32_2 = arith.constant 0 : i32
    return %c0_i32, %c0_i32_0, %c0_i32_1 : i32, i32, i32
  }
  func.func @transform_5(%arg0: i32) -> (i32, i32, i32) {
    %c0_i32 = arith.constant 0 : i32
    %c0_i32_0 = arith.constant 0 : i32
    %c0_i32_1 = arith.constant 0 : i32
    %c0_i32_2 = arith.constant 0 : i32
    return %c0_i32, %c0_i32_0, %c0_i32_1 : i32, i32, i32
  }
  func.func @transform_6(%arg0: i32) -> (i32, i32, i32) {
    %c0_i32 = arith.constant 0 : i32
    %c0_i32_0 = arith.constant 0 : i32
    %c0_i32_1 = arith.constant 0 : i32
    %c0_i32_2 = arith.constant 0 : i32
    return %c0_i32, %c0_i32_0, %c0_i32_1 : i32, i32, i32
  }
  func.func @transform_7(%arg0: i32) -> (i32, i32, i32) {
    %c0_i32 = arith.constant 0 : i32
    %c0_i32_0 = arith.constant 0 : i32
    %c0_i32_1 = arith.constant 0 : i32
    %c0_i32_2 = arith.constant 0 : i32
    return %c0_i32, %c0_i32_0, %c0_i32_1 : i32, i32, i32
  }
  func.func @transform_8(%arg0: i32) -> (i32, i32, i32) {
    %c0_i32 = arith.constant 0 : i32
    %c0_i32_0 = arith.constant 0 : i32
    %c0_i32_1 = arith.constant 0 : i32
    %c0_i32_2 = arith.constant 0 : i32
    return %c0_i32, %c0_i32_0, %c0_i32_1 : i32, i32, i32
  }
  func.func @transform_9(%arg0: i32) -> (i32, i32, i32) {
    %c0_i32 = arith.constant 0 : i32
    %c0_i32_0 = arith.constant 0 : i32
    %c0_i32_1 = arith.constant 0 : i32
    return %arg0, %c0_i32, %c0_i32_0 : i32, i32, i32
  }
}

module attributes {stable_mosaic.version = 11 : i64} {
  func.func @_pool_kernel(%arg0: i32, %arg1: memref<1x16x256xf32, #tpu.memory_space<vmem>>, %arg2: memref<256x8xf32, #tpu.memory_space<vmem>>, %arg3: memref<1x16x8xf32, #tpu.memory_space<vmem>>) attributes {dimension_semantics = [#tpu.dimension_semantics<parallel>], iteration_bounds = array<i64: 24>, scalar_prefetch = 0 : i64, scratch_operands = 0 : i64, tpu.core_type = #tpu.core_type<tc>, window_params = [{transform_indices = @transform_0, window_bounds = array<i64: 1, 16, 256>}, {pipeline_mode = #tpu.pipeline_mode<synchronous>, transform_indices = @transform_1, window_bounds = array<i64: 256, 8>}, {transform_indices = @transform_2, window_bounds = array<i64: 1, 16, 8>}]} {
    %c0 = arith.constant 0 : index
    %c0_0 = arith.constant 0 : index
    %c0_1 = arith.constant 0 : index
    %0 = vector.load %arg1[%c0, %c0_0, %c0_1] : memref<1x16x256xf32, #tpu.memory_space<vmem>>, vector<1x16x256xf32>
    %1 = vector.shape_cast %0 : vector<1x16x256xf32> to vector<16x256xf32>
    %c0_2 = arith.constant 0 : index
    %c0_3 = arith.constant 0 : index
    %2 = vector.load %arg2[%c0_2, %c0_3] : memref<256x8xf32, #tpu.memory_space<vmem>>, vector<256x8xf32>
    %cst = arith.constant dense<0.000000e+00> : vector<16x8xf32>
    %3 = tpu.matmul %1, %2, %cst {dimension_numbers = #tpu.dot_dimension_numbers<[1], [0], [0], [1], [0, 0, 1, 1], [], []>} : vector<16x256xf32>, vector<256x8xf32>, vector<16x8xf32> -> vector<16x8xf32>
    %c0_4 = arith.constant 0 : index
    %c0_5 = arith.constant 0 : index
    %c0_6 = arith.constant 0 : index
    %4 = vector.load %arg3[%c0_4, %c0_5, %c0_6] : memref<1x16x8xf32, #tpu.memory_space<vmem>>, vector<1x16x8xf32>
    %5 = vector.shape_cast %4 : vector<1x16x8xf32> to vector<16x8xf32>
    %6 = vector.shape_cast %3 : vector<16x8xf32> to vector<1x16x8xf32>
    tpu.vector_store %arg3[%c0_4, %c0_5, %c0_6], %6 {strides = array<i32>} : memref<1x16x8xf32, #tpu.memory_space<vmem>>, vector<1x16x8xf32>,
    return
  }
  func.func @transform_0(%arg0: i32) -> (i32, i32, i32) {
    %c0_i32 = arith.constant 0 : i32
    %c0_i32_0 = arith.constant 0 : i32
    %c0_i32_1 = arith.constant 0 : i32
    return %arg0, %c0_i32, %c0_i32_0 : i32, i32, i32
  }
  func.func @transform_1(%arg0: i32) -> (i32, i32) {
    %c0_i32 = arith.constant 0 : i32
    %c0_i32_0 = arith.constant 0 : i32
    %c0_i32_1 = arith.constant 0 : i32
    return %c0_i32, %c0_i32_0 : i32, i32
  }
  func.func @transform_2(%arg0: i32) -> (i32, i32, i32) {
    %c0_i32 = arith.constant 0 : i32
    %c0_i32_0 = arith.constant 0 : i32
    %c0_i32_1 = arith.constant 0 : i32
    return %arg0, %c0_i32, %c0_i32_0 : i32, i32, i32
  }
}

</mosaic_0001>

<llo_original>
// kernel: wavegram_encoder_forward.5
$region0: #{wavegram_encoder_forward.5}
  #allocation0 [shape = 'u32[]', space=smem, size = 0x4, offset = 0x4, fixed_abs, tag = 'smem constant byte address 0x4 - core index']
  #allocation1 [shape = 'u32[144,128]{1,0:T(1,128)}', space=vmem, size = 0x12000, scoped, tag = 'internal scratch']
  %s0 = inlined_call_operand.vmem [shape: f32[8,1,256], index: 0, kind: input, shape index: {}]
  %s1 = inlined_call_operand.vmem [shape: f32[3,16,1], index: 1, kind: input, shape index: {}]
  %s2 = inlined_call_operand.vmem [shape: f32[16,1], index: 2, kind: input, shape index: {}]
  %s3 = inlined_call_operand.vmem [shape: f32[8,16,256], index: 3, kind: output, shape index: {}]
  %s4 = sld [smem:[#allocation0]]
  $region45: #{wavegram_encoder_forward.5} parent=0
    _
  %s6 = ssub.s32 1, %s4
  %s7 = scalar_select 0, %s6, %s4
  loop: start=0, step=1, limit=10
  $region2: #{wavegram_encoder_forward.5} parent=0 // loop_pre_header
    _
  $region3: #{wavegram_encoder_forward.5} parent=0 // loop_header
    %s9 = sphi 0, %s13
    %p10 = scmp.ge.s32.totalorder %s9, 10
    %s19 = sphi 0, %s21
    %s22 = sphi 0, %s19
    %s23 = sphi 0, %s22
    %s39 = sphi 0, %s23
    %s43 = sphi 0, %s43
    %s45 = sphi 0, %s43
    %s46 = sphi 0, %s45
    %s60 = sphi 0, %s46
    %s64 = sphi 0, %s64
    %s66 = sphi 0, %s64
    %s67 = sphi 0, %s66
    %s81 = sphi 0, %s67
    %s87 = sphi 0, %s89
    %s90 = sphi 0, %s87
    %s91 = sphi 0, %s90
    %s107 = sphi 0, %s91
  $region4: #{wavegram_encoder_forward.5} parent=0 // loop_header_branch
    %12 = sbr.rel (%p10) target = $region8
  $region5: #{wavegram_encoder_forward.5} parent=0 // loop_body
    %s14 = ssub.s32 %s9, 1
    %s15 = ssub.s32 %s9, 2
    %s16 = sadd.s32 %s9, 1
    %s17 = ssub.s32 %s9, %s16
    %p18 = scmp.eq.s32.totalorder %s17, 0
    %s20 = sadd.s32 %s19, 1
    %s21 = scalar_select %p18, %s19, %s20
    %p24 = pneg %p18
    %p25 = scmp.eq.s32.totalorder %s9, 7
    %p26 = por %p24, %p25
    %p27 = scmp.ne.s32.totalorder %s19, %s22
    %p28 = scmp.eq.s32.totalorder %s9, 0
    %p29 = por %p27, %p28
    %p30 = scmp.ne.s32.totalorder %s19, %s22
    %p31 = scmp.eq.s32.totalorder %s14, 7
    %p32 = por %p30, %p31
    %p33 = scmp.ne.s32.totalorder %s22, %s23
    %p34 = scmp.eq.s32.totalorder %s14, 0
    %p35 = por %p33, %p34
    %p36 = scmp.ne.s32.totalorder %s22, %s23
    %p37 = scmp.eq.s32.totalorder %s15, 7
    %p38 = por %p36, %p37
    %p40 = scmp.ne.s32.totalorder %s23, %s39
    %p41 = scmp.eq.s32.totalorder %s15, 0
    %p42 = por %p40, %p41
    %s44 = sadd.s32 %s43, 1
    %p47 = scmp.eq.s32.totalorder %s9, 7
    %p48 = scmp.ne.s32.totalorder %s43, %s45
    %p49 = scmp.eq.s32.totalorder %s9, 0
    %p50 = por %p48, %p49
    %p51 = scmp.ne.s32.totalorder %s43, %s45
    %p52 = scmp.eq.s32.totalorder %s14, 7
    %p53 = por %p51, %p52
    %p54 = scmp.ne.s32.totalorder %s45, %s46
    %p55 = scmp.eq.s32.totalorder %s14, 0
    %p56 = por %p54, %p55
    %p57 = scmp.ne.s32.totalorder %s45, %s46
    %p58 = scmp.eq.s32.totalorder %s15, 7
    %p59 = por %p57, %p58
    %p61 = scmp.ne.s32.totalorder %s46, %s60
    %p62 = scmp.eq.s32.totalorder %s15, 0
    %p63 = por %p61, %p62
    %s65 = sadd.s32 %s64, 1
    %p68 = scmp.eq.s32.totalorder %s9, 7
    %p69 = scmp.ne.s32.totalorder %s64, %s66
    %p70 = scmp.eq.s32.totalorder %s9, 0
    %p71 = por %p69, %p70
    %p72 = scmp.ne.s32.totalorder %s64, %s66
    %p73 = scmp.eq.s32.totalorder %s14, 7
    %p74 = por %p72, %p73
    %p75 = scmp.ne.s32.totalorder %s66, %s67
    %p76 = scmp.eq.s32.totalorder %s14, 0
    %p77 = por %p75, %p76
    %p78 = scmp.ne.s32.totalorder %s66, %s67
    %p79 = scmp.eq.s32.totalorder %s15, 7
    %p80 = por %p78, %p79
    %p82 = scmp.ne.s32.totalorder %s67, %s81
    %p83 = scmp.eq.s32.totalorder %s15, 0
    %p84 = por %p82, %p83
    %s85 = ssub.s32 %s9, %s16
    %p86 = scmp.eq.s32.totalorder %s85, 0
    %s88 = sadd.s32 %s87, 1
    %s89 = scalar_select %p86, %s87, %s88
    %p92 = pneg %p86
    %p93 = scmp.eq.s32.totalorder %s9, 7
    %p94 = por %p92, %p93
    %p95 = scmp.ne.s32.totalorder %s87, %s90
    %p96 = scmp.eq.s32.totalorder %s9, 0
    %p97 = por %p95, %p96
    %p98 = scmp.ne.s32.totalorder %s87, %s90
    %p99 = scmp.eq.s32.totalorder %s14, 7
    %p100 = por %p98, %p99
    %p101 = scmp.ne.s32.totalorder %s90, %s91
    %p102 = scmp.eq.s32.totalorder %s14, 0
    %p103 = por %p101, %p102
    %p104 = scmp.ne.s32.totalorder %s90, %s91
    %p105 = scmp.eq.s32.totalorder %s15, 7
    %p106 = por %p104, %p105
    %p108 = scmp.ne.s32.totalorder %s91, %s107
    %p109 = scmp.eq.s32.totalorder %s15, 0
    %p110 = por %p108, %p109
    %p111 = scmp.le.s32.totalorder 1, %s9
    %p112 = scmp.lt.s32.totalorder %s9, 9
    %p113 = pnand %p111, %p112
    %p114 = pneg %p113
    // Predicated region
    $region9: #{wavegram_encoder_forward.5} parent=5 // pred_check
      _
    $region10: #{wavegram_encoder_forward.5} parent=5 // pred_check_branch
      %116 = sbr.rel (%p113) target = $region12
    $region11: #{wavegram_encoder_forward.5} parent=5 // pred_region
      %s117 = ssub.s32 %s9, 1
      // Predicated region
      $region13: #{wavegram_encoder_forward.5} parent=11 // pred_check
        %p118 = pneg %p56
      $region14: #{wavegram_encoder_forward.5} parent=11 // pred_check_branch
        %120 = sbr.rel (%p118) target = $region16
      $region15: #{wavegram_encoder_forward.5} parent=11 // pred_region
        _
      $region16: #{wavegram_encoder_forward.5} parent=11 // pred_fallthru
        _
      // Predicated region
      $region17: #{wavegram_encoder_forward.5} parent=11 // pred_check
        %p121 = pneg %p77
      $region18: #{wavegram_encoder_forward.5} parent=11 // pred_check_branch
        %123 = sbr.rel (%p121) target = $region20
      $region19: #{wavegram_encoder_forward.5} parent=11 // pred_region
        _
      $region20: #{wavegram_encoder_forward.5} parent=11 // pred_fallthru
        _
    $region12: #{wavegram_encoder_forward.5} parent=5 // pred_fallthru
      _
    %p124 = scmp.lt.s32.totalorder %s9, 8
    // Predicated region
    $region21: #{wavegram_encoder_forward.5} parent=5 // pred_check
      %p125 = pneg %p124
    $region22: #{wavegram_encoder_forward.5} parent=5 // pred_check_branch
      %127 = sbr.rel (%p125) target = $region24
    $region23: #{wavegram_encoder_forward.5} parent=5 // pred_region
      // Predicated region
      $region25: #{wavegram_encoder_forward.5} parent=23 // pred_check
        %p128 = pneg %p29
      $region26: #{wavegram_encoder_forward.5} parent=23 // pred_check_branch
        %130 = sbr.rel (%p128) target = $region28
      $region27: #{wavegram_encoder_forward.5} parent=23 // pred_region
        %p131 = scmp.lt.s32.totalorder %s9, 7
        %s132 = scalar_select %p131, %s9, 7
        %s133 = smul.addr %s132, 2
        %s134 = scalar_lea.vmem %s0, %s133
      $region28: #{wavegram_encoder_forward.5} parent=23 // pred_fallthru
        _
    $region24: #{wavegram_encoder_forward.5} parent=5 // pred_fallthru
      _
    %p135 = scmp.le.s32.totalorder 1, %s9
    %p136 = scmp.lt.s32.totalorder %s9, 9
    %p137 = pnand %p135, %p136
    %p138 = pneg %p137
    // Predicated region
    $region29: #{wavegram_encoder_forward.5} parent=5 // pred_check
      _
    $region30: #{wavegram_encoder_forward.5} parent=5 // pred_check_branch
      %140 = sbr.rel (%p137) target = $region32
    $region31: #{wavegram_encoder_forward.5} parent=5 // pred_region
      %s141 = ssub.s32 %s9, 1
      %p142 = scmp.lt.s32.totalorder %s14, 7
      %s143 = scalar_select %p142, %s14, 7
      %s144 = smul.addr %s143, 2
      %s145 = scalar_lea.vmem %s0, %s144
      %p146 = pneg %p35
      %p147 = pneg %p32
      %p148 = pneg %p56
      %p149 = pneg %p53
      %p150 = pneg %p77
      %p151 = pneg %p74
      %p152 = pneg %p103
      %p153 = pneg %p100
      %p154 = scmp.lt.s32.totalorder %s14, 7
      %s155 = scalar_select %p154, %s14, 7
      %s156 = smul.addr %s155, 4
      %s157 = smul.addr %s156, 8
      %s158 = scalar_lea.vmem %s3, %s157
      %p159 = scmp.lt.s32.totalorder %s14, 7
      %s160 = scalar_select %p159, %s14, 7
      %s161 = smul.addr %s160, 2
      %s162 = scalar_lea.vmem %s0, %s161
      %p163 = scmp.lt.s32.totalorder %s14, 7
      %s164 = scalar_select %p163, %s14, 7
      %s165 = smul.addr %s164, 4
      %s166 = smul.addr %s165, 8
      %s167 = scalar_lea.vmem %s3, %s166
      %v168 = vld [vmem:[%s162] sm:$0x3]
      %v169 = vlaneseq
      %v170 = vand.u32 %v169, 127
      %v171 = vadd.s32 %v170, 128
      %v173 = vlaneseq
      %v174 = vshrl.u32 %v173, 7
      %v175 = vsub.s32 0, %v174
      %v176 = vrot.slane %v168, %v175
      %v177 = vlaneseq
      %v178 = vshrl.u32 %v177, 7
      %v179 = vsub.s32 1, %v178
      %v180 = vrot.slane %v168, %v179
      %183 = vrot.lane.b32.xlu0 %v176, 1
      %v184 = vpop.permute.xlu0 %183
      %185 = vrot.lane.b32.xlu0 %v180, 1
      %v186 = vpop.permute.xlu0 %185
      %vm187 = vcmp.lt.s32.totalorder %v170, 1
      %v188 = vsel %vm187, %v184, %v186
      %v189 = vsel %vm187, %v186, %v184
      %vm190 = vcmp.ge.s32.totalorder %v170, 1
      %vm191 = vcmp.ge.s32.totalorder %v171, 1
      %v192 = vsel %vm190, %v189, 0.0
      %v193 = vsel %vm191, %v188, 0.0
      %v194 = vld [vmem:[%s1] sm:$0xff]
      %v195 = vld [vmem:[%s1 + $0x8] sm:$0xff]
      %197 = vset.pattern.permute.xlu0 0
      %198 = vperm.xlu0 %197, %v194
      %v199 = vpop.permute.xlu0 %198
      %202 = vset.pattern.permute.xlu0 0
      %203 = vperm.xlu0 %202, %v195
      %v204 = vpop.permute.xlu0 %203
      %v206 = vlaneseq
      %v207 = vshrl.u32 %v206, 7
      %v208 = vsub.s32 0, %v207
      %v209 = vrot.slane %v192, %v208
      %v210 = vlaneseq
      %v211 = vshrl.u32 %v210, 7
      %v212 = vsub.s32 0, %v211
      %v213 = vrot.slane %v193, %v212
      %v214 = vmul.f32 %v199, %v209
      %v215 = vmul.f32 %v199, %v213
      %v216 = vmul.f32 %v204, %v209
      %v217 = vmul.f32 %v204, %v213
      %v218 = vadd.f32 %v214, 0.0
      %v219 = vadd.f32 %v215, 0.0
      %v220 = vadd.f32 %v216, 0.0
      %v221 = vadd.f32 %v217, 0.0
      %s222 = scalar_lea.vmem %s1, 16
      %v223 = vld [vmem:[%s222] sm:$0xff]
      %v224 = vld [vmem:[%s222 + $0x8] sm:$0xff]
      %226 = vset.pattern.permute.xlu0 0
      %227 = vperm.xlu0 %226, %v223
      %v228 = vpop.permute.xlu0 %227
      %231 = vset.pattern.permute.xlu0 0
      %232 = vperm.xlu0 %231, %v224
      %v233 = vpop.permute.xlu0 %232
      %v235 = vmul.f32 %v228, %v176
      %v236 = vmul.f32 %v228, %v180
      %v237 = vmul.f32 %v233, %v176
      %v238 = vmul.f32 %v233, %v180
      %v239 = vadd.f32 %v218, %v235
      %v240 = vadd.f32 %v219, %v236
      %v241 = vadd.f32 %v220, %v237
      %v242 = vadd.f32 %v221, %v238
      %243 = vrot.lane.b32.xlu0 %v176, 127
      %v244 = vpop.permute.xlu0 %243
      %245 = vrot.lane.b32.xlu0 %v180, 127
      %v246 = vpop.permute.xlu0 %245
      %vm247 = vcmp.lt.s32.totalorder %v170, 127
      %v248 = vsel %vm247, %v244, %v246
      %v249 = vsel %vm247, %v246, %v244
      %vm250 = vcmp.lt.s32.totalorder %v170, 255
      %vm251 = vcmp.lt.s32.totalorder %v171, 255
      %v252 = vsel %vm250, %v248, 0.0
      %v253 = vsel %vm251, %v249, 0.0
      %s254 = scalar_lea.vmem %s1, 32
      %v255 = vld [vmem:[%s254] sm:$0xff]
      %v256 = vld [vmem:[%s254 + $0x8] sm:$0xff]
      %258 = vset.pattern.permute.xlu0 0
      %259 = vperm.xlu0 %258, %v255
      %v260 = vpop.permute.xlu0 %259
      %263 = vset.pattern.permute.xlu0 0
      %264 = vperm.xlu0 %263, %v256
      %v265 = vpop.permute.xlu0 %264
      %v267 = vlaneseq
      %v268 = vshrl.u32 %v267, 7
      %v269 = vsub.s32 0, %v268
      %v270 = vrot.slane %v252, %v269
      %v271 = vlaneseq
      %v272 = vshrl.u32 %v271, 7
      %v273 = vsub.s32 0, %v272
      %v274 = vrot.slane %v253, %v273
      %v275 = vmul.f32 %v260, %v270
      %v276 = vmul.f32 %v260, %v274
      %v277 = vmul.f32 %v265, %v270
      %v278 = vmul.f32 %v265, %v274
      %v279 = vadd.f32 %v239, %v275
      %v280 = vadd.f32 %v240, %v276
      %v281 = vadd.f32 %v241, %v277
      %v282 = vadd.f32 %v242, %v278
      %v283 = vld [vmem:[%s2] sm:$0xff]
      %v284 = vld [vmem:[%s2 + $0x8] sm:$0xff]
      %286 = vset.pattern.permute.xlu0 0
      %287 = vperm.xlu0 %286, %v283
      %v288 = vpop.permute.xlu0 %287
      %291 = vset.pattern.permute.xlu0 0
      %292 = vperm.xlu0 %291, %v284
      %v293 = vpop.permute.xlu0 %292
      %v295 = vadd.f32 %v279, %v288
      %v296 = vadd.f32 %v280, %v288
      %v297 = vadd.f32 %v281, %v293
      %v298 = vadd.f32 %v282, %v293
      %299 = vst [vmem:[%s167] sm:$0xff] %v295
      %300 = vst [vmem:[%s167 + $0x8] sm:$0xff] %v296
      %301 = vst [vmem:[%s167 + $0x10] sm:$0xff] %v297
      %302 = vst [vmem:[%s167 + $0x18] sm:$0xff] %v298
      %p303 = scmp.lt.s32.totalorder %s14, 7
      %s304 = scalar_select %p303, %s14, 7
      %s305 = smul.addr %s304, 4
      %s306 = smul.addr %s305, 8
      %s307 = scalar_lea.vmem %s3, %s306
      // Predicated region
      $region33: #{wavegram_encoder_forward.5} parent=31 // pred_check
        %p308 = pneg %p100
      $region34: #{wavegram_encoder_forward.5} parent=31 // pred_check_branch
        %310 = sbr.rel (%p308) target = $region36
      $region35: #{wavegram_encoder_forward.5} parent=31 // pred_region
        _
      $region36: #{wavegram_encoder_forward.5} parent=31 // pred_fallthru
        _
    $region32: #{wavegram_encoder_forward.5} parent=5 // pred_fallthru
      _
    %p311 = scmp.le.s32.totalorder 2, %s9
    // Predicated region
    $region37: #{wavegram_encoder_forward.5} parent=5 // pred_check
      %p312 = pneg %p311
    $region38: #{wavegram_encoder_forward.5} parent=5 // pred_check_branch
      %314 = sbr.rel (%p312) target = $region40
    $region39: #{wavegram_encoder_forward.5} parent=5 // pred_region
      %s315 = ssub.s32 %s9, 2
      // Predicated region
      $region41: #{wavegram_encoder_forward.5} parent=39 // pred_check
        %p316 = pneg %p106
      $region42: #{wavegram_encoder_forward.5} parent=39 // pred_check_branch
        %318 = sbr.rel (%p316) target = $region44
      $region43: #{wavegram_encoder_forward.5} parent=39 // pred_region
        %p319 = scmp.lt.s32.totalorder %s15, 7
        %s320 = scalar_select %p319, %s15, 7
        %s321 = smul.addr %s320, 4
        %s322 = smul.addr %s321, 8
        %s323 = scalar_lea.vmem %s3, %s322
      $region44: #{wavegram_encoder_forward.5} parent=39 // pred_fallthru
        _
    $region40: #{wavegram_encoder_forward.5} parent=5 // pred_fallthru
      _
  $region6: #{wavegram_encoder_forward.5} parent=0 // loop_footer
    %s13 = sadd.s32 1, %s9
  $region7: #{wavegram_encoder_forward.5} parent=0 // loop_footer_branch
    %8 = sbr.rel target = $region3
  $region8: #{wavegram_encoder_forward.5} parent=0 // loop_exit
    _

// kernel: wavegram_encoder_forward.9
$region0: #{wavegram_encoder_forward.9}
  #allocation0 [shape = 'u32[]', space=smem, size = 0x4, offset = 0x4, fixed_abs, tag = 'smem constant byte address 0x4 - core index']
  #allocation1 [shape = 'u32[144,128]{1,0:T(1,128)}', space=vmem, size = 0x12000, scoped, tag = 'internal scratch']
  %s0 = inlined_call_operand.vmem [shape: f32[24,16,256], index: 0, kind: input, shape index: {}]
  %s1 = inlined_call_operand.vmem [shape: f32[256,8], index: 1, kind: input, shape index: {}]
  %s2 = inlined_call_operand.vmem [shape: f32[24,16,8], index: 2, kind: output, shape index: {}]
  %s3 = sld [smem:[#allocation0]]
  $region41: #{wavegram_encoder_forward.9} parent=0
    _
  %s5 = ssub.s32 1, %s3
  %s6 = scalar_select 0, %s5, %s3
  loop: start=0, step=1, limit=26
  $region2: #{wavegram_encoder_forward.9} parent=0 // loop_pre_header
    _
  $region3: #{wavegram_encoder_forward.9} parent=0 // loop_header
    %s8 = sphi 0, %s12
    %p9 = scmp.ge.s32.totalorder %s8, 26
    %s18 = sphi 0, %s20
    %s21 = sphi 0, %s18
    %s22 = sphi 0, %s21
    %s38 = sphi 0, %s22
    %s42 = sphi 0, %s42
    %s44 = sphi 0, %s42
    %s45 = sphi 0, %s44
    %s59 = sphi 0, %s45
    %s65 = sphi 0, %s67
    %s68 = sphi 0, %s65
    %s69 = sphi 0, %s68
    %s85 = sphi 0, %s69
  $region4: #{wavegram_encoder_forward.9} parent=0 // loop_header_branch
    %11 = sbr.rel (%p9) target = $region8
  $region5: #{wavegram_encoder_forward.9} parent=0 // loop_body
    %s13 = ssub.s32 %s8, 1
    %s14 = ssub.s32 %s8, 2
    %s15 = sadd.s32 %s8, 1
    %s16 = ssub.s32 %s8, %s15
    %p17 = scmp.eq.s32.totalorder %s16, 0
    %s19 = sadd.s32 %s18, 1
    %s20 = scalar_select %p17, %s18, %s19
    %p23 = pneg %p17
    %p24 = scmp.eq.s32.totalorder %s8, 23
    %p25 = por %p23, %p24
    %p26 = scmp.ne.s32.totalorder %s18, %s21
    %p27 = scmp.eq.s32.totalorder %s8, 0
    %p28 = por %p26, %p27
    %p29 = scmp.ne.s32.totalorder %s18, %s21
    %p30 = scmp.eq.s32.totalorder %s13, 23
    %p31 = por %p29, %p30
    %p32 = scmp.ne.s32.totalorder %s21, %s22
    %p33 = scmp.eq.s32.totalorder %s13, 0
    %p34 = por %p32, %p33
    %p35 = scmp.ne.s32.totalorder %s21, %s22
    %p36 = scmp.eq.s32.totalorder %s14, 23
    %p37 = por %p35, %p36
    %p39 = scmp.ne.s32.totalorder %s22, %s38
    %p40 = scmp.eq.s32.totalorder %s14, 0
    %p41 = por %p39, %p40
    %s43 = sadd.s32 %s42, 1
    %p46 = scmp.eq.s32.totalorder %s8, 23
    %p47 = scmp.ne.s32.totalorder %s42, %s44
    %p48 = scmp.eq.s32.totalorder %s8, 0
    %p49 = por %p47, %p48
    %p50 = scmp.ne.s32.totalorder %s42, %s44
    %p51 = scmp.eq.s32.totalorder %s13, 23
    %p52 = por %p50, %p51
    %p53 = scmp.ne.s32.totalorder %s44, %s45
    %p54 = scmp.eq.s32.totalorder %s13, 0
    %p55 = por %p53, %p54
    %p56 = scmp.ne.s32.totalorder %s44, %s45
    %p57 = scmp.eq.s32.totalorder %s14, 23
    %p58 = por %p56, %p57
    %p60 = scmp.ne.s32.totalorder %s45, %s59
    %p61 = scmp.eq.s32.totalorder %s14, 0
    %p62 = por %p60, %p61
    %s63 = ssub.s32 %s8, %s15
    %p64 = scmp.eq.s32.totalorder %s63, 0
    %s66 = sadd.s32 %s65, 1
    %s67 = scalar_select %p64, %s65, %s66
    %p70 = pneg %p64
    %p71 = scmp.eq.s32.totalorder %s8, 23
    %p72 = por %p70, %p71
    %p73 = scmp.ne.s32.totalorder %s65, %s68
    %p74 = scmp.eq.s32.totalorder %s8, 0
    %p75 = por %p73, %p74
    %p76 = scmp.ne.s32.totalorder %s65, %s68
    %p77 = scmp.eq.s32.totalorder %s13, 23
    %p78 = por %p76, %p77
    %p79 = scmp.ne.s32.totalorder %s68, %s69
    %p80 = scmp.eq.s32.totalorder %s13, 0
    %p81 = por %p79, %p80
    %p82 = scmp.ne.s32.totalorder %s68, %s69
    %p83 = scmp.eq.s32.totalorder %s14, 23
    %p84 = por %p82, %p83
    %p86 = scmp.ne.s32.totalorder %s69, %s85
    %p87 = scmp.eq.s32.totalorder %s14, 0
    %p88 = por %p86, %p87
    %p89 = scmp.le.s32.totalorder 1, %s8
    %p90 = scmp.lt.s32.totalorder %s8, 25
    %p91 = pnand %p89, %p90
    %p92 = pneg %p91
    // Predicated region
    $region9: #{wavegram_encoder_forward.9} parent=5 // pred_check
      _
    $region10: #{wavegram_encoder_forward.9} parent=5 // pred_check_branch
      %94 = sbr.rel (%p91) target = $region12
    $region11: #{wavegram_encoder_forward.9} parent=5 // pred_region
      %s95 = ssub.s32 %s8, 1
      // Predicated region
      $region13: #{wavegram_encoder_forward.9} parent=11 // pred_check
        %p96 = pneg %p55
      $region14: #{wavegram_encoder_forward.9} parent=11 // pred_check_branch
        %98 = sbr.rel (%p96) target = $region16
      $region15: #{wavegram_encoder_forward.9} parent=11 // pred_region
        _
      $region16: #{wavegram_encoder_forward.9} parent=11 // pred_fallthru
        _
    $region12: #{wavegram_encoder_forward.9} parent=5 // pred_fallthru
      _
    %p99 = scmp.lt.s32.totalorder %s8, 24
    // Predicated region
    $region17: #{wavegram_encoder_forward.9} parent=5 // pred_check
      %p100 = pneg %p99
    $region18: #{wavegram_encoder_forward.9} parent=5 // pred_check_branch
      %102 = sbr.rel (%p100) target = $region20
    $region19: #{wavegram_encoder_forward.9} parent=5 // pred_region
      // Predicated region
      $region21: #{wavegram_encoder_forward.9} parent=19 // pred_check
        %p103 = pneg %p28
      $region22: #{wavegram_encoder_forward.9} parent=19 // pred_check_branch
        %105 = sbr.rel (%p103) target = $region24
      $region23: #{wavegram_encoder_forward.9} parent=19 // pred_region
        %p106 = scmp.lt.s32.totalorder %s8, 23
        %s107 = scalar_select %p106, %s8, 23
        %s108 = smul.addr %s107, 4
        %s109 = smul.addr %s108, 8
        %s110 = scalar_lea.vmem %s0, %s109
      $region24: #{wavegram_encoder_forward.9} parent=19 // pred_fallthru
        _
    $region20: #{wavegram_encoder_forward.9} parent=5 // pred_fallthru
      _
    %p111 = scmp.le.s32.totalorder 1, %s8
    %p112 = scmp.lt.s32.totalorder %s8, 25
    %p113 = pnand %p111, %p112
    %p114 = pneg %p113
    // Predicated region
    $region25: #{wavegram_encoder_forward.9} parent=5 // pred_check
      _
    $region26: #{wavegram_encoder_forward.9} parent=5 // pred_check_branch
      %116 = sbr.rel (%p113) target = $region28
    $region27: #{wavegram_encoder_forward.9} parent=5 // pred_region
      %s117 = ssub.s32 %s8, 1
      %p118 = scmp.lt.s32.totalorder %s13, 23
      %s119 = scalar_select %p118, %s13, 23
      %s120 = smul.addr %s119, 4
      %s121 = smul.addr %s120, 8
      %s122 = scalar_lea.vmem %s0, %s121
      %p123 = pneg %p34
      %p124 = pneg %p31
      %p125 = pneg %p55
      %p126 = pneg %p52
      %p127 = pneg %p81
      %p128 = pneg %p78
      %p129 = scmp.lt.s32.totalorder %s13, 23
      %s130 = scalar_select %p129, %s13, 23
      %s131 = smul.addr %s130, 2
      %s132 = smul.addr %s131, 8
      %s133 = scalar_lea.vmem %s2, %s132
      %p134 = scmp.lt.s32.totalorder %s13, 23
      %s135 = scalar_select %p134, %s13, 23
      %s136 = smul.addr %s135, 4
      %s137 = smul.addr %s136, 8
      %s138 = scalar_lea.vmem %s0, %s137
      %p139 = scmp.lt.s32.totalorder %s13, 23
      %s140 = scalar_select %p139, %s13, 23
      %s141 = smul.addr %s140, 2
      %s142 = smul.addr %s141, 8
      %s143 = scalar_lea.vmem %s2, %s142
      %v144 = vld [vmem:[%s138] sm:$0xff]
      %v145 = vld [vmem:[%s138 + $0x8] sm:$0xff]
      %v146 = vld [vmem:[%s138 + $0x10] sm:$0xff]
      %v147 = vld [vmem:[%s138 + $0x18] sm:$0xff]
      %v148 = vld [vmem:[%s1] sm:$0xff]
      %v149 = vld [vmem:[%s1 + $0x8] sm:$0xff]
      %v150 = vld [vmem:[%s1 + $0x10] sm:$0xff]
      %v151 = vld [vmem:[%s1 + $0x18] sm:$0xff]
      %v152 = vld [vmem:[%s1 + $0x20] sm:$0xff]
      %v153 = vld [vmem:[%s1 + $0x28] sm:$0xff]
      %v154 = vld [vmem:[%s1 + $0x30] sm:$0xff]
      %v155 = vld [vmem:[%s1 + $0x38] sm:$0xff]
      %v156 = vld [vmem:[%s1 + $0x40] sm:$0xff]
      %v157 = vld [vmem:[%s1 + $0x48] sm:$0xff]
      %v158 = vld [vmem:[%s1 + $0x50] sm:$0xff]
      %v159 = vld [vmem:[%s1 + $0x58] sm:$0xff]
      %v160 = vld [vmem:[%s1 + $0x60] sm:$0xff]
      %v161 = vld [vmem:[%s1 + $0x68] sm:$0xff]
      %v162 = vld [vmem:[%s1 + $0x70] sm:$0xff]
      %v163 = vld [vmem:[%s1 + $0x78] sm:$0xff]
      %v164 = vld [vmem:[%s1 + $0x80] sm:$0xff]
      %v165 = vld [vmem:[%s1 + $0x88] sm:$0xff]
      %v166 = vld [vmem:[%s1 + $0x90] sm:$0xff]
      %v167 = vld [vmem:[%s1 + $0x98] sm:$0xff]
      %v168 = vld [vmem:[%s1 + $0xa0] sm:$0xff]
      %v169 = vld [vmem:[%s1 + $0xa8] sm:$0xff]
      %v170 = vld [vmem:[%s1 + $0xb0] sm:$0xff]
      %v171 = vld [vmem:[%s1 + $0xb8] sm:$0xff]
      %v172 = vld [vmem:[%s1 + $0xc0] sm:$0xff]
      %v173 = vld [vmem:[%s1 + $0xc8] sm:$0xff]
      %v174 = vld [vmem:[%s1 + $0xd0] sm:$0xff]
      %v175 = vld [vmem:[%s1 + $0xd8] sm:$0xff]
      %v176 = vld [vmem:[%s1 + $0xe0] sm:$0xff]
      %v177 = vld [vmem:[%s1 + $0xe8] sm:$0xff]
      %v178 = vld [vmem:[%s1 + $0xf0] sm:$0xff]
      %v179 = vld [vmem:[%s1 + $0xf8] sm:$0xff]
      %180 = vmatprep.subr.mxu0 0.0
      %181 = vmatpush1.msra.mxu0 %v148
      %182 = vmatprep.subr.mxu0 0.0
      %183 = vmatpush1.msra.mxu0 %v149
      %184 = vmatprep.subr.mxu0 0.0
      %185 = vmatpush1.msra.mxu0 %v150
      %186 = vmatprep.subr.mxu0 0.0
      %187 = vmatpush1.msra.mxu0 %v151
      %188 = vmatprep.subr.mxu0 0.0
      %189 = vmatpush1.msra.mxu0 %v152
      %190 = vmatprep.subr.mxu0 0.0
      %191 = vmatpush1.msra.mxu0 %v153
      %192 = vmatprep.subr.mxu0 0.0
      %193 = vmatpush1.msra.mxu0 %v154
      %194 = vmatprep.subr.mxu0 0.0
      %195 = vmatpush1.msra.mxu0 %v155
      %196 = vmatprep.subr.mxu0 0.0
      %197 = vmatpush1.msra.mxu0 %v156
      %198 = vmatprep.subr.mxu0 0.0
      %199 = vmatpush1.msra.mxu0 %v157
      %200 = vmatprep.subr.mxu0 0.0
      %201 = vmatpush1.msra.mxu0 %v158
      %202 = vmatprep.subr.mxu0 0.0
      %203 = vmatpush1.msra.mxu0 %v159
      %204 = vmatprep.subr.mxu0 0.0
      %205 = vmatpush1.msra.mxu0 %v160
      %206 = vmatprep.subr.mxu0 0.0
      %207 = vmatpush1.msra.mxu0 %v161
      %208 = vmatprep.subr.mxu0 0.0
      %209 = vmatpush1.msra.mxu0 %v162
      %210 = vmatprep.subr.mxu0 0.0
      %211 = vmatpush1.msra.mxu0 %v163
      %212 = vmatprep.subr.mxu0 0.0
      %213 = vmatpush1.msra.mxu0 %v164
      %214 = vmatprep.subr.mxu0 0.0
      %215 = vmatpush1.msra.mxu0 %v165
      %216 = vmatprep.subr.mxu0 0.0
      %217 = vmatpush1.msra.mxu0 %v166
      %218 = vmatprep.subr.mxu0 0.0
      %219 = vmatpush1.msra.mxu0 %v167
      %220 = vmatprep.subr.mxu0 0.0
      %221 = vmatpush1.msra.mxu0 %v168
      %222 = vmatprep.subr.mxu0 0.0
      %223 = vmatpush1.msra.mxu0 %v169
      %224 = vmatprep.subr.mxu0 0.0
      %225 = vmatpush1.msra.mxu0 %v170
      %226 = vmatprep.subr.mxu0 0.0
      %227 = vmatpush1.msra.mxu0 %v171
      %228 = vmatprep.subr.mxu0 0.0
      %229 = vmatpush1.msra.mxu0 %v172
      %230 = vmatprep.subr.mxu0 0.0
      %231 = vmatpush1.msra.mxu0 %v173
      %232 = vmatprep.subr.mxu0 0.0
      %233 = vmatpush1.msra.mxu0 %v174
      %234 = vmatprep.subr.mxu0 0.0
      %235 = vmatpush1.msra.mxu0 %v175
      %236 = vmatprep.subr.mxu0 0.0
      %237 = vmatpush1.msra.mxu0 %v176
      %238 = vmatprep.subr.mxu0 0.0
      %239 = vmatpush1.msra.mxu0 %v177
      %240 = vmatprep.subr.mxu0 0.0
      %241 = vmatpush1.msra.mxu0 %v178
      %242 = vmatprep.subr.mxu0 0.0
      %243 = vmatpush1.msra.mxu0 %v179
      %244 = vmatprep.mubr.f32.mxu0 %v145
      %245 = vmatmul.mubr.f32.gmra.mrb[0].mxu0 %v144
      %v246 = vpop.f32.mrb[0].mxu0
      %v247 = vadd.f32 0.0, %v246
      %v248 = vpop.f32.mrb[0].mxu0
      %249 = vmatprep.mubr.f32.mxu0 %v147
      %250 = vmatmul.mubr.f32.gmra.mrb[0].mxu0 %v146
      %v251 = vpop.f32.mrb[0].mxu0
      %v252 = vadd.f32 0.0, %v251
      %v253 = vpop.f32.mrb[0].mxu0
      %254 = vdwg.mxu0
      %vm255 = vcmask 64512
      %256 = vst.msk [vmem:[%s143] sm:$0xff] %vm255, %v247
      %257 = vst.msk [vmem:[%s143 + $0x8] sm:$0xff] %vm255, %v252
      %p258 = scmp.lt.s32.totalorder %s13, 23
      %s259 = scalar_select %p258, %s13, 23
      %s260 = smul.addr %s259, 2
      %s261 = smul.addr %s260, 8
      %s262 = scalar_lea.vmem %s2, %s261
      // Predicated region
      $region29: #{wavegram_encoder_forward.9} parent=27 // pred_check
        %p263 = pneg %p78
      $region30: #{wavegram_encoder_forward.9} parent=27 // pred_check_branch
        %265 = sbr.rel (%p263) target = $region32
      $region31: #{wavegram_encoder_forward.9} parent=27 // pred_region
        _
      $region32: #{wavegram_encoder_forward.9} parent=27 // pred_fallthru
        _
    $region28: #{wavegram_encoder_forward.9} parent=5 // pred_fallthru
      _
    %p266 = scmp.le.s32.totalorder 2, %s8
    // Predicated region
    $region33: #{wavegram_encoder_forward.9} parent=5 // pred_check
      %p267 = pneg %p266
    $region34: #{wavegram_encoder_forward.9} parent=5 // pred_check_branch
      %269 = sbr.rel (%p267) target = $region36
    $region35: #{wavegram_encoder_forward.9} parent=5 // pred_region
      %s270 = ssub.s32 %s8, 2
      // Predicated region
      $region37: #{wavegram_encoder_forward.9} parent=35 // pred_check
        %p271 = pneg %p84
      $region38: #{wavegram_encoder_forward.9} parent=35 // pred_check_branch
        %273 = sbr.rel (%p271) target = $region40
      $region39: #{wavegram_encoder_forward.9} parent=35 // pred_region
        %p274 = scmp.lt.s32.totalorder %s14, 23
        %s275 = scalar_select %p274, %s14, 23
        %s276 = smul.addr %s275, 2
        %s277 = smul.addr %s276, 8
        %s278 = scalar_lea.vmem %s2, %s277
      $region40: #{wavegram_encoder_forward.9} parent=35 // pred_fallthru
        _
    $region36: #{wavegram_encoder_forward.9} parent=5 // pred_fallthru
      _
  $region6: #{wavegram_encoder_forward.9} parent=0 // loop_footer
    %s12 = sadd.s32 1, %s8
  $region7: #{wavegram_encoder_forward.9} parent=0 // loop_footer_branch
    %7 = sbr.rel target = $region3
  $region8: #{wavegram_encoder_forward.9} parent=0 // loop_exit
    _

// kernel: wavegram_encoder_forward.8
$region0: #{wavegram_encoder_forward.8}
  #allocation0 [shape = 'u32[]', space=smem, size = 0x4, offset = 0x4, fixed_abs, tag = 'smem constant byte address 0x4 - core index']
  #allocation1 [shape = 'u32[144,128]{1,0:T(1,128)}', space=vmem, size = 0x12000, scoped, tag = 'internal scratch']
  %s0 = inlined_call_operand.vmem [shape: f32[8,16,256], index: 0, kind: input, shape index: {}]
  %s1 = inlined_call_operand.vmem [shape: f32[16,16], index: 1, kind: input, shape index: {}]
  %s2 = inlined_call_operand.vmem [shape: f32[16,1], index: 2, kind: input, shape index: {}]
  %s3 = inlined_call_operand.vmem [shape: f32[6,16,16], index: 3, kind: input, shape index: {}]
  %s4 = inlined_call_operand.vmem [shape: f32[2,16,1], index: 4, kind: input, shape index: {}]
  %s5 = inlined_call_operand.vmem [shape: f32[6,16,16], index: 5, kind: input, shape index: {}]
  %s6 = inlined_call_operand.vmem [shape: f32[2,16,1], index: 6, kind: input, shape index: {}]
  %s7 = inlined_call_operand.vmem [shape: f32[2,16,16], index: 7, kind: input, shape index: {}]
  %s8 = inlined_call_operand.vmem [shape: f32[2,16,1], index: 8, kind: input, shape index: {}]
  %s9 = inlined_call_operand.vmem [shape: f32[8,16,256], index: 9, kind: output, shape index: {}]
  %s10 = sld [smem:[#allocation0]]
  $region69: #{wavegram_encoder_forward.8} parent=0
    _
  %s12 = ssub.s32 1, %s10
  %s13 = scalar_select 0, %s12, %s10
  loop: start=0, step=1, limit=10
  $region2: #{wavegram_encoder_forward.8} parent=0 // loop_pre_header
    _
  $region3: #{wavegram_encoder_forward.8} parent=0 // loop_header
    %s15 = sphi 0, %s19
    %p16 = scmp.ge.s32.totalorder %s15, 10
    %s25 = sphi 0, %s27
    %s28 = sphi 0, %s25
    %s29 = sphi 0, %s28
    %s45 = sphi 0, %s29
    %s49 = sphi 0, %s49
    %s51 = sphi 0, %s49
    %s52 = sphi 0, %s51
    %s66 = sphi 0, %s52
    %s70 = sphi 0, %s70
    %s72 = sphi 0, %s70
    %s73 = sphi 0, %s72
    %s87 = sphi 0, %s73
    %s91 = sphi 0, %s91
    %s93 = sphi 0, %s91
    %s94 = sphi 0, %s93
    %s108 = sphi 0, %s94
    %s112 = sphi 0, %s112
    %s114 = sphi 0, %s112
    %s115 = sphi 0, %s114
    %s129 = sphi 0, %s115
    %s133 = sphi 0, %s133
    %s135 = sphi 0, %s133
    %s136 = sphi 0, %s135
    %s150 = sphi 0, %s136
    %s154 = sphi 0, %s154
    %s156 = sphi 0, %s154
    %s157 = sphi 0, %s156
    %s171 = sphi 0, %s157
    %s175 = sphi 0, %s175
    %s177 = sphi 0, %s175
    %s178 = sphi 0, %s177
    %s192 = sphi 0, %s178
    %s196 = sphi 0, %s196
    %s198 = sphi 0, %s196
    %s199 = sphi 0, %s198
    %s213 = sphi 0, %s199
    %s219 = sphi 0, %s221
    %s222 = sphi 0, %s219
    %s223 = sphi 0, %s222
    %s239 = sphi 0, %s223
  $region4: #{wavegram_encoder_forward.8} parent=0 // loop_header_branch
    %18 = sbr.rel (%p16) target = $region8
  $region5: #{wavegram_encoder_forward.8} parent=0 // loop_body
    %s20 = ssub.s32 %s15, 1
    %s21 = ssub.s32 %s15, 2
    %s22 = sadd.s32 %s15, 1
    %s23 = ssub.s32 %s15, %s22
    %p24 = scmp.eq.s32.totalorder %s23, 0
    %s26 = sadd.s32 %s25, 1
    %s27 = scalar_select %p24, %s25, %s26
    %p30 = pneg %p24
    %p31 = scmp.eq.s32.totalorder %s15, 7
    %p32 = por %p30, %p31
    %p33 = scmp.ne.s32.totalorder %s25, %s28
    %p34 = scmp.eq.s32.totalorder %s15, 0
    %p35 = por %p33, %p34
    %p36 = scmp.ne.s32.totalorder %s25, %s28
    %p37 = scmp.eq.s32.totalorder %s20, 7
    %p38 = por %p36, %p37
    %p39 = scmp.ne.s32.totalorder %s28, %s29
    %p40 = scmp.eq.s32.totalorder %s20, 0
    %p41 = por %p39, %p40
    %p42 = scmp.ne.s32.totalorder %s28, %s29
    %p43 = scmp.eq.s32.totalorder %s21, 7
    %p44 = por %p42, %p43
    %p46 = scmp.ne.s32.totalorder %s29, %s45
    %p47 = scmp.eq.s32.totalorder %s21, 0
    %p48 = por %p46, %p47
    %s50 = sadd.s32 %s49, 1
    %p53 = scmp.eq.s32.totalorder %s15, 7
    %p54 = scmp.ne.s32.totalorder %s49, %s51
    %p55 = scmp.eq.s32.totalorder %s15, 0
    %p56 = por %p54, %p55
    %p57 = scmp.ne.s32.totalorder %s49, %s51
    %p58 = scmp.eq.s32.totalorder %s20, 7
    %p59 = por %p57, %p58
    %p60 = scmp.ne.s32.totalorder %s51, %s52
    %p61 = scmp.eq.s32.totalorder %s20, 0
    %p62 = por %p60, %p61
    %p63 = scmp.ne.s32.totalorder %s51, %s52
    %p64 = scmp.eq.s32.totalorder %s21, 7
    %p65 = por %p63, %p64
    %p67 = scmp.ne.s32.totalorder %s52, %s66
    %p68 = scmp.eq.s32.totalorder %s21, 0
    %p69 = por %p67, %p68
    %s71 = sadd.s32 %s70, 1
    %p74 = scmp.eq.s32.totalorder %s15, 7
    %p75 = scmp.ne.s32.totalorder %s70, %s72
    %p76 = scmp.eq.s32.totalorder %s15, 0
    %p77 = por %p75, %p76
    %p78 = scmp.ne.s32.totalorder %s70, %s72
    %p79 = scmp.eq.s32.totalorder %s20, 7
    %p80 = por %p78, %p79
    %p81 = scmp.ne.s32.totalorder %s72, %s73
    %p82 = scmp.eq.s32.totalorder %s20, 0
    %p83 = por %p81, %p82
    %p84 = scmp.ne.s32.totalorder %s72, %s73
    %p85 = scmp.eq.s32.totalorder %s21, 7
    %p86 = por %p84, %p85
    %p88 = scmp.ne.s32.totalorder %s73, %s87
    %p89 = scmp.eq.s32.totalorder %s21, 0
    %p90 = por %p88, %p89
    %s92 = sadd.s32 %s91, 1
    %p95 = scmp.eq.s32.totalorder %s15, 7
    %p96 = scmp.ne.s32.totalorder %s91, %s93
    %p97 = scmp.eq.s32.totalorder %s15, 0
    %p98 = por %p96, %p97
    %p99 = scmp.ne.s32.totalorder %s91, %s93
    %p100 = scmp.eq.s32.totalorder %s20, 7
    %p101 = por %p99, %p100
    %p102 = scmp.ne.s32.totalorder %s93, %s94
    %p103 = scmp.eq.s32.totalorder %s20, 0
    %p104 = por %p102, %p103
    %p105 = scmp.ne.s32.totalorder %s93, %s94
    %p106 = scmp.eq.s32.totalorder %s21, 7
    %p107 = por %p105, %p106
    %p109 = scmp.ne.s32.totalorder %s94, %s108
    %p110 = scmp.eq.s32.totalorder %s21, 0
    %p111 = por %p109, %p110
    %s113 = sadd.s32 %s112, 1
    %p116 = scmp.eq.s32.totalorder %s15, 7
    %p117 = scmp.ne.s32.totalorder %s112, %s114
    %p118 = scmp.eq.s32.totalorder %s15, 0
    %p119 = por %p117, %p118
    %p120 = scmp.ne.s32.totalorder %s112, %s114
    %p121 = scmp.eq.s32.totalorder %s20, 7
    %p122 = por %p120, %p121
    %p123 = scmp.ne.s32.totalorder %s114, %s115
    %p124 = scmp.eq.s32.totalorder %s20, 0
    %p125 = por %p123, %p124
    %p126 = scmp.ne.s32.totalorder %s114, %s115
    %p127 = scmp.eq.s32.totalorder %s21, 7
    %p128 = por %p126, %p127
    %p130 = scmp.ne.s32.totalorder %s115, %s129
    %p131 = scmp.eq.s32.totalorder %s21, 0
    %p132 = por %p130, %p131
    %s134 = sadd.s32 %s133, 1
    %p137 = scmp.eq.s32.totalorder %s15, 7
    %p138 = scmp.ne.s32.totalorder %s133, %s135
    %p139 = scmp.eq.s32.totalorder %s15, 0
    %p140 = por %p138, %p139
    %p141 = scmp.ne.s32.totalorder %s133, %s135
    %p142 = scmp.eq.s32.totalorder %s20, 7
    %p143 = por %p141, %p142
    %p144 = scmp.ne.s32.totalorder %s135, %s136
    %p145 = scmp.eq.s32.totalorder %s20, 0
    %p146 = por %p144, %p145
    %p147 = scmp.ne.s32.totalorder %s135, %s136
    %p148 = scmp.eq.s32.totalorder %s21, 7
    %p149 = por %p147, %p148
    %p151 = scmp.ne.s32.totalorder %s136, %s150
    %p152 = scmp.eq.s32.totalorder %s21, 0
    %p153 = por %p151, %p152
    %s155 = sadd.s32 %s154, 1
    %p158 = scmp.eq.s32.totalorder %s15, 7
    %p159 = scmp.ne.s32.totalorder %s154, %s156
    %p160 = scmp.eq.s32.totalorder %s15, 0
    %p161 = por %p159, %p160
    %p162 = scmp.ne.s32.totalorder %s154, %s156
    %p163 = scmp.eq.s32.totalorder %s20, 7
    %p164 = por %p162, %p163
    %p165 = scmp.ne.s32.totalorder %s156, %s157
    %p166 = scmp.eq.s32.totalorder %s20, 0
    %p167 = por %p165, %p166
    %p168 = scmp.ne.s32.totalorder %s156, %s157
    %p169 = scmp.eq.s32.totalorder %s21, 7
    %p170 = por %p168, %p169
    %p172 = scmp.ne.s32.totalorder %s157, %s171
    %p173 = scmp.eq.s32.totalorder %s21, 0
    %p174 = por %p172, %p173
    %s176 = sadd.s32 %s175, 1
    %p179 = scmp.eq.s32.totalorder %s15, 7
    %p180 = scmp.ne.s32.totalorder %s175, %s177
    %p181 = scmp.eq.s32.totalorder %s15, 0
    %p182 = por %p180, %p181
    %p183 = scmp.ne.s32.totalorder %s175, %s177
    %p184 = scmp.eq.s32.totalorder %s20, 7
    %p185 = por %p183, %p184
    %p186 = scmp.ne.s32.totalorder %s177, %s178
    %p187 = scmp.eq.s32.totalorder %s20, 0
    %p188 = por %p186, %p187
    %p189 = scmp.ne.s32.totalorder %s177, %s178
    %p190 = scmp.eq.s32.totalorder %s21, 7
    %p191 = por %p189, %p190
    %p193 = scmp.ne.s32.totalorder %s178, %s192
    %p194 = scmp.eq.s32.totalorder %s21, 0
    %p195 = por %p193, %p194
    %s197 = sadd.s32 %s196, 1
    %p200 = scmp.eq.s32.totalorder %s15, 7
    %p201 = scmp.ne.s32.totalorder %s196, %s198
    %p202 = scmp.eq.s32.totalorder %s15, 0
    %p203 = por %p201, %p202
    %p204 = scmp.ne.s32.totalorder %s196, %s198
    %p205 = scmp.eq.s32.totalorder %s20, 7
    %p206 = por %p204, %p205
    %p207 = scmp.ne.s32.totalorder %s198, %s199
    %p208 = scmp.eq.s32.totalorder %s20, 0
    %p209 = por %p207, %p208
    %p210 = scmp.ne.s32.totalorder %s198, %s199
    %p211 = scmp.eq.s32.totalorder %s21, 7
    %p212 = por %p210, %p211
    %p214 = scmp.ne.s32.totalorder %s199, %s213
    %p215 = scmp.eq.s32.totalorder %s21, 0
    %p216 = por %p214, %p215
    %s217 = ssub.s32 %s15, %s22
    %p218 = scmp.eq.s32.totalorder %s217, 0
    %s220 = sadd.s32 %s219, 1
    %s221 = scalar_select %p218, %s219, %s220
    %p224 = pneg %p218
    %p225 = scmp.eq.s32.totalorder %s15, 7
    %p226 = por %p224, %p225
    %p227 = scmp.ne.s32.totalorder %s219, %s222
    %p228 = scmp.eq.s32.totalorder %s15, 0
    %p229 = por %p227, %p228
    %p230 = scmp.ne.s32.totalorder %s219, %s222
    %p231 = scmp.eq.s32.totalorder %s20, 7
    %p232 = por %p230, %p231
    %p233 = scmp.ne.s32.totalorder %s222, %s223
    %p234 = scmp.eq.s32.totalorder %s20, 0
    %p235 = por %p233, %p234
    %p236 = scmp.ne.s32.totalorder %s222, %s223
    %p237 = scmp.eq.s32.totalorder %s21, 7
    %p238 = por %p236, %p237
    %p240 = scmp.ne.s32.totalorder %s223, %s239
    %p241 = scmp.eq.s32.totalorder %s21, 0
    %p242 = por %p240, %p241
    %p243 = scmp.le.s32.totalorder 1, %s15
    %p244 = scmp.lt.s32.totalorder %s15, 9
    %p245 = pnand %p243, %p244
    %p246 = pneg %p245
    // Predicated region
    $region9: #{wavegram_encoder_forward.8} parent=5 // pred_check
      _
    $region10: #{wavegram_encoder_forward.8} parent=5 // pred_check_branch
      %248 = sbr.rel (%p245) target = $region12
    $region11: #{wavegram_encoder_forward.8} parent=5 // pred_region
      %s249 = ssub.s32 %s15, 1
      // Predicated region
      $region13: #{wavegram_encoder_forward.8} parent=11 // pred_check
        %p250 = pneg %p62
      $region14: #{wavegram_encoder_forward.8} parent=11 // pred_check_branch
        %252 = sbr.rel (%p250) target = $region16
      $region15: #{wavegram_encoder_forward.8} parent=11 // pred_region
        _
      $region16: #{wavegram_encoder_forward.8} parent=11 // pred_fallthru
        _
      // Predicated region
      $region17: #{wavegram_encoder_forward.8} parent=11 // pred_check
        %p253 = pneg %p83
      $region18: #{wavegram_encoder_forward.8} parent=11 // pred_check_branch
        %255 = sbr.rel (%p253) target = $region20
      $region19: #{wavegram_encoder_forward.8} parent=11 // pred_region
        _
      $region20: #{wavegram_encoder_forward.8} parent=11 // pred_fallthru
        _
      // Predicated region
      $region21: #{wavegram_encoder_forward.8} parent=11 // pred_check
        %p256 = pneg %p104
      $region22: #{wavegram_encoder_forward.8} parent=11 // pred_check_branch
        %258 = sbr.rel (%p256) target = $region24
      $region23: #{wavegram_encoder_forward.8} parent=11 // pred_region
        _
      $region24: #{wavegram_encoder_forward.8} parent=11 // pred_fallthru
        _
      // Predicated region
      $region25: #{wavegram_encoder_forward.8} parent=11 // pred_check
        %p259 = pneg %p125
      $region26: #{wavegram_encoder_forward.8} parent=11 // pred_check_branch
        %261 = sbr.rel (%p259) target = $region28
      $region27: #{wavegram_encoder_forward.8} parent=11 // pred_region
        _
      $region28: #{wavegram_encoder_forward.8} parent=11 // pred_fallthru
        _
      // Predicated region
      $region29: #{wavegram_encoder_forward.8} parent=11 // pred_check
        %p262 = pneg %p146
      $region30: #{wavegram_encoder_forward.8} parent=11 // pred_check_branch
        %264 = sbr.rel (%p262) target = $region32
      $region31: #{wavegram_encoder_forward.8} parent=11 // pred_region
        _
      $region32: #{wavegram_encoder_forward.8} parent=11 // pred_fallthru
        _
      // Predicated region
      $region33: #{wavegram_encoder_forward.8} parent=11 // pred_check
        %p265 = pneg %p167
      $region34: #{wavegram_encoder_forward.8} parent=11 // pred_check_branch
        %267 = sbr.rel (%p265) target = $region36
      $region35: #{wavegram_encoder_forward.8} parent=11 // pred_region
        _
      $region36: #{wavegram_encoder_forward.8} parent=11 // pred_fallthru
        _
      // Predicated region
      $region37: #{wavegram_encoder_forward.8} parent=11 // pred_check
        %p268 = pneg %p188
      $region38: #{wavegram_encoder_forward.8} parent=11 // pred_check_branch
        %270 = sbr.rel (%p268) target = $region40
      $region39: #{wavegram_encoder_forward.8} parent=11 // pred_region
        _
      $region40: #{wavegram_encoder_forward.8} parent=11 // pred_fallthru
        _
      // Predicated region
      $region41: #{wavegram_encoder_forward.8} parent=11 // pred_check
        %p271 = pneg %p209
      $region42: #{wavegram_encoder_forward.8} parent=11 // pred_check_branch
        %273 = sbr.rel (%p271) target = $region44
      $region43: #{wavegram_encoder_forward.8} parent=11 // pred_region
        _
      $region44: #{wavegram_encoder_forward.8} parent=11 // pred_fallthru
        _
    $region12: #{wavegram_encoder_forward.8} parent=5 // pred_fallthru
      _
    %p274 = scmp.lt.s32.totalorder %s15, 8
    // Predicated region
    $region45: #{wavegram_encoder_forward.8} parent=5 // pred_check
      %p275 = pneg %p274
    $region46: #{wavegram_encoder_forward.8} parent=5 // pred_check_branch
      %277 = sbr.rel (%p275) target = $region48
    $region47: #{wavegram_encoder_forward.8} parent=5 // pred_region
      // Predicated region
      $region49: #{wavegram_encoder_forward.8} parent=47 // pred_check
        %p278 = pneg %p35
      $region50: #{wavegram_encoder_forward.8} parent=47 // pred_check_branch
        %280 = sbr.rel (%p278) target = $region52
      $region51: #{wavegram_encoder_forward.8} parent=47 // pred_region
        %p281 = scmp.lt.s32.totalorder %s15, 7
        %s282 = scalar_select %p281, %s15, 7
        %s283 = smul.addr %s282, 4
        %s284 = smul.addr %s283, 8
        %s285 = scalar_lea.vmem %s0, %s284
      $region52: #{wavegram_encoder_forward.8} parent=47 // pred_fallthru
        _
    $region48: #{wavegram_encoder_forward.8} parent=5 // pred_fallthru
      _
    %p286 = scmp.le.s32.totalorder 1, %s15
    %p287 = scmp.lt.s32.totalorder %s15, 9
    %p288 = pnand %p286, %p287
    %p289 = pneg %p288
    // Predicated region
    $region53: #{wavegram_encoder_forward.8} parent=5 // pred_check
      _
    $region54: #{wavegram_encoder_forward.8} parent=5 // pred_check_branch
      %291 = sbr.rel (%p288) target = $region56
    $region55: #{wavegram_encoder_forward.8} parent=5 // pred_region
      %s292 = ssub.s32 %s15, 1
      %p293 = scmp.lt.s32.totalorder %s20, 7
      %s294 = scalar_select %p293, %s20, 7
      %s295 = smul.addr %s294, 4
      %s296 = smul.addr %s295, 8
      %s297 = scalar_lea.vmem %s0, %s296
      %p298 = pneg %p41
      %p299 = pneg %p38
      %p300 = pneg %p62
      %p301 = pneg %p59
      %p302 = pneg %p83
      %p303 = pneg %p80
      %p304 = pneg %p104
      %p305 = pneg %p101
      %p306 = pneg %p125
      %p307 = pneg %p122
      %p308 = pneg %p146
      %p309 = pneg %p143
      %p310 = pneg %p167
      %p311 = pneg %p164
      %p312 = pneg %p188
      %p313 = pneg %p185
      %p314 = pneg %p209
      %p315 = pneg %p206
      %p316 = pneg %p235
      %p317 = pneg %p232
      %p318 = scmp.lt.s32.totalorder %s20, 7
      %s319 = scalar_select %p318, %s20, 7
      %s320 = smul.addr %s319, 4
      %s321 = smul.addr %s320, 8
      %s322 = scalar_lea.vmem %s9, %s321
      %p323 = scmp.lt.s32.totalorder %s20, 7
      %s324 = scalar_select %p323, %s20, 7
      %s325 = smul.addr %s324, 4
      %s326 = smul.addr %s325, 8
      %s327 = scalar_lea.vmem %s0, %s326
      %p328 = scmp.lt.s32.totalorder %s20, 7
      %s329 = scalar_select %p328, %s20, 7
      %s330 = smul.addr %s329, 4
      %s331 = smul.addr %s330, 8
      %s332 = scalar_lea.vmem %s9, %s331
      %v333 = vld [vmem:[%s327] sm:$0xff]
      %v334 = vld [vmem:[%s327 + $0x8] sm:$0xff]
      %v335 = vld [vmem:[%s327 + $0x10] sm:$0xff]
      %v336 = vld [vmem:[%s327 + $0x18] sm:$0xff]
      %v337 = vld [vmem:[%s1] sm:$0xff]
      %v338 = vld [vmem:[%s1 + $0x8] sm:$0xff]
      %v339 = vld [vmem:[%s2] sm:$0xff]
      %v340 = vld [vmem:[%s2 + $0x8] sm:$0xff]
      %342 = vset.pattern.permute.xlu0 0
      %343 = vperm.xlu0 %342, %v339
      %v344 = vpop.permute.xlu0 %343
      %347 = vset.pattern.permute.xlu0 0
      %348 = vperm.xlu0 %347, %v340
      %v349 = vpop.permute.xlu0 %348
      %vm351 = vcmask 130048
      %v353 = vsel %vm351, %v337, 0
      %v356 = vsel %vm351, %v338, 0
      %358 = vmatprep.subr.mxu0 %v334
      %359 = vmatpush1.msra.mxu0 %v333
      %360 = vmatprep.subr.mxu0 %v336
      %361 = vmatpush1.msra.mxu0 %v335
      %362 = vmatprep.subr.mxu0 0.0
      %363 = vmatpush1.msra.mxu0 0.0
      %364 = vmatprep.subr.mxu0 0.0
      %365 = vmatpush1.msra.mxu0 0.0
      %366 = vmatprep.subr.mxu0 0.0
      %367 = vmatpush1.msra.mxu0 0.0
      %368 = vmatprep.subr.mxu0 0.0
      %369 = vmatpush1.msra.mxu0 0.0
      %370 = vmatprep.subr.mxu0 0.0
      %371 = vmatpush1.msra.mxu0 0.0
      %372 = vmatprep.subr.mxu0 0.0
      %373 = vmatpush1.msra.mxu0 0.0
      %374 = vmatprep.subr.mxu0 0.0
      %375 = vmatpush1.msra.mxu0 0.0
      %376 = vmatprep.subr.mxu0 0.0
      %377 = vmatpush1.msra.mxu0 0.0
      %378 = vmatprep.subr.mxu0 0.0
      %379 = vmatpush1.msra.mxu0 0.0
      %380 = vmatprep.subr.mxu0 0.0
      %381 = vmatpush1.msra.mxu0 0.0
      %382 = vmatprep.subr.mxu0 0.0
      %383 = vmatpush1.msra.mxu0 0.0
      %384 = vmatprep.subr.mxu0 0.0
      %385 = vmatpush1.msra.mxu0 0.0
      %386 = vmatprep.subr.mxu0 0.0
      %387 = vmatpush1.msra.mxu0 0.0
      %388 = vmatprep.subr.mxu0 0.0
      %389 = vmatpush1.msra.mxu0 0.0
      %390 = vmatprep.subr.mxu0 0.0
      %391 = vmatpush1.msra.mxu0 0.0
      %392 = vmatprep.subr.mxu0 0.0
      %393 = vmatpush1.msra.mxu0 0.0
      %394 = vmatprep.subr.mxu0 0.0
      %395 = vmatpush1.msra.mxu0 0.0
      %396 = vmatprep.subr.mxu0 0.0
      %397 = vmatpush1.msra.mxu0 0.0
      %398 = vmatprep.subr.mxu0 0.0
      %399 = vmatpush1.msra.mxu0 0.0
      %400 = vmatprep.subr.mxu0 0.0
      %401 = vmatpush1.msra.mxu0 0.0
      %402 = vmatprep.subr.mxu0 0.0
      %403 = vmatpush1.msra.mxu0 0.0
      %404 = vmatprep.subr.mxu0 0.0
      %405 = vmatpush1.msra.mxu0 0.0
      %406 = vmatprep.subr.mxu0 0.0
      %407 = vmatpush1.msra.mxu0 0.0
      %408 = vmatprep.subr.mxu0 0.0
      %409 = vmatpush1.msra.mxu0 0.0
      %410 = vmatprep.subr.mxu0 0.0
      %411 = vmatpush1.msra.mxu0 0.0
      %412 = vmatprep.subr.mxu0 0.0
      %413 = vmatpush1.msra.mxu0 0.0
      %414 = vmatprep.subr.mxu0 0.0
      %415 = vmatpush1.msra.mxu0 0.0
      %416 = vmatprep.subr.mxu0 0.0
      %417 = vmatpush1.msra.mxu0 0.0
      %418 = vmatprep.subr.mxu0 0.0
      %419 = vmatpush1.msra.mxu0 0.0
      %420 = vmatprep.subr.mxu0 0.0
      %421 = vmatpush1.msra.mxu0 0.0
      %422 = vmatprep.mubr.f32.mxu0 0.0
      %423 = vmatmul.mubr.f32.gmra.mrb[0].mxu0 %v353
      %v424 = vpop.f32.mrb[0].mxu0
      %v425 = vadd.f32 %v344, %v424
      %v426 = vpop.f32.mrb[0].mxu0
      %v427 = vadd.f32 %v344, %v426
      %428 = vmatprep.mubr.f32.mxu0 0.0
      %429 = vmatmul.mubr.f32.gmra.mrb[0].mxu0 %v356
      %v430 = vpop.f32.mrb[0].mxu0
      %v431 = vadd.f32 %v349, %v430
      %v432 = vpop.f32.mrb[0].mxu0
      %v433 = vadd.f32 %v349, %v432
      %434 = vdwg.mxu0
      %v435 = vlaneseq
      %v436 = vand.u32 %v435, 127
      %v437 = vadd.s32 %v436, 128
      %438 = vrot.lane.b32.xlu0 %v425, 1
      %v439 = vpop.permute.xlu0 %438
      %440 = vrot.lane.b32.xlu0 %v431, 1
      %v441 = vpop.permute.xlu0 %440
      %442 = vrot.lane.b32.xlu0 %v427, 1
      %v443 = vpop.permute.xlu0 %442
      %444 = vrot.lane.b32.xlu0 %v433, 1
      %v445 = vpop.permute.xlu0 %444
      %vm446 = vcmp.lt.s32.totalorder %v436, 1
      %v447 = vsel %vm446, %v439, %v443
      %v448 = vsel %vm446, %v441, %v445
      %v449 = vsel %vm446, %v443, %v439
      %v450 = vsel %vm446, %v445, %v441
      %vm451 = vcmp.ge.s32.totalorder %v436, 1
      %vm452 = vcmp.ge.s32.totalorder %v437, 1
      %v453 = vsel %vm451, %v449, 0.0
      %v454 = vsel %vm452, %v447, 0.0
      %v455 = vsel %vm451, %v450, 0.0
      %v456 = vsel %vm452, %v448, 0.0
      %v457 = vld [vmem:[%s3] sm:$0xff]
      %v458 = vld [vmem:[%s3 + $0x8] sm:$0xff]
      %v459 = vld [vmem:[%s5] sm:$0xff]
      %v460 = vld [vmem:[%s5 + $0x8] sm:$0xff]
      %s461 = scalar_lea.vmem %s3, 16
      %v462 = vld [vmem:[%s461] sm:$0xff]
      %v463 = vld [vmem:[%s461 + $0x8] sm:$0xff]
      %v465 = vsel %vm351, %v462, 0
      %v468 = vsel %vm351, %v463, 0
      %470 = vmatprep.subr.mxu0 %v427
      %471 = vmatpush1.msra.mxu0 %v425
      %472 = vmatprep.subr.mxu0 %v433
      %473 = vmatpush1.msra.mxu0 %v431
      %474 = vmatprep.subr.mxu0 0.0
      %475 = vmatpush1.msra.mxu0 0.0
      %476 = vmatprep.subr.mxu0 0.0
      %477 = vmatpush1.msra.mxu0 0.0
      %478 = vmatprep.subr.mxu0 0.0
      %479 = vmatpush1.msra.mxu0 0.0
      %480 = vmatprep.subr.mxu0 0.0
      %481 = vmatpush1.msra.mxu0 0.0
      %482 = vmatprep.subr.mxu0 0.0
      %483 = vmatpush1.msra.mxu0 0.0
      %484 = vmatprep.subr.mxu0 0.0
      %485 = vmatpush1.msra.mxu0 0.0
      %486 = vmatprep.subr.mxu0 0.0
      %487 = vmatpush1.msra.mxu0 0.0
      %488 = vmatprep.subr.mxu0 0.0
      %489 = vmatpush1.msra.mxu0 0.0
      %490 = vmatprep.subr.mxu0 0.0
      %491 = vmatpush1.msra.mxu0 0.0
      %492 = vmatprep.subr.mxu0 0.0
      %493 = vmatpush1.msra.mxu0 0.0
      %494 = vmatprep.subr.mxu0 0.0
      %495 = vmatpush1.msra.mxu0 0.0
      %496 = vmatprep.subr.mxu0 0.0
      %497 = vmatpush1.msra.mxu0 0.0
      %498 = vmatprep.subr.mxu0 0.0
      %499 = vmatpush1.msra.mxu0 0.0
      %500 = vmatprep.subr.mxu0 0.0
      %501 = vmatpush1.msra.mxu0 0.0
      %502 = vmatprep.subr.mxu0 0.0
      %503 = vmatpush1.msra.mxu0 0.0
      %504 = vmatprep.subr.mxu0 0.0
      %505 = vmatpush1.msra.mxu0 0.0
      %506 = vmatprep.subr.mxu0 0.0
      %507 = vmatpush1.msra.mxu0 0.0
      %508 = vmatprep.subr.mxu0 0.0
      %509 = vmatpush1.msra.mxu0 0.0
      %510 = vmatprep.subr.mxu0 0.0
      %511 = vmatpush1.msra.mxu0 0.0
      %512 = vmatprep.subr.mxu0 0.0
      %513 = vmatpush1.msra.mxu0 0.0
      %514 = vmatprep.subr.mxu0 0.0
      %515 = vmatpush1.msra.mxu0 0.0
      %516 = vmatprep.subr.mxu0 0.0
      %517 = vmatpush1.msra.mxu0 0.0
      %518 = vmatprep.subr.mxu0 0.0
      %519 = vmatpush1.msra.mxu0 0.0
      %520 = vmatprep.subr.mxu0 0.0
      %521 = vmatpush1.msra.mxu0 0.0
      %522 = vmatprep.subr.mxu0 0.0
      %523 = vmatpush1.msra.mxu0 0.0
      %524 = vmatprep.subr.mxu0 0.0
      %525 = vmatpush1.msra.mxu0 0.0
      %526 = vmatprep.subr.mxu0 0.0
      %527 = vmatpush1.msra.mxu0 0.0
      %528 = vmatprep.subr.mxu0 0.0
      %529 = vmatpush1.msra.mxu0 0.0
      %530 = vmatprep.subr.mxu0 0.0
      %531 = vmatpush1.msra.mxu0 0.0
      %532 = vmatprep.subr.mxu0 0.0
      %533 = vmatpush1.msra.mxu0 0.0
      %534 = vmatprep.mubr.f32.mxu0 0.0
      %535 = vmatmul.mubr.f32.gmra.mrb[0].mxu0 %v465
      %v536 = vpop.f32.mrb[0].mxu0
      %v537 = vadd.f32 0.0, %v536
      %v538 = vpop.f32.mrb[0].mxu0
      %v539 = vadd.f32 0.0, %v538
      %540 = vmatprep.mubr.f32.mxu0 0.0
      %541 = vmatmul.mubr.f32.gmra.mrb[0].mxu0 %v468
      %v542 = vpop.f32.mrb[0].mxu0
      %v543 = vadd.f32 0.0, %v542
      %v544 = vpop.f32.mrb[0].mxu0
      %v545 = vadd.f32 0.0, %v544
      %546 = vdwg.mxu0
      %v548 = vsel %vm351, %v457, 0
      %v551 = vsel %vm351, %v458, 0
      %553 = vmatprep.subr.mxu0 %v454
      %554 = vmatpush1.msra.mxu0 %v453
      %555 = vmatprep.subr.mxu0 %v456
      %556 = vmatpush1.msra.mxu0 %v455
      %557 = vmatprep.subr.mxu0 0.0
      %558 = vmatpush1.msra.mxu0 0.0
      %559 = vmatprep.subr.mxu0 0.0
      %560 = vmatpush1.msra.mxu0 0.0
      %561 = vmatprep.subr.mxu0 0.0
      %562 = vmatpush1.msra.mxu0 0.0
      %563 = vmatprep.subr.mxu0 0.0
      %564 = vmatpush1.msra.mxu0 0.0
      %565 = vmatprep.subr.mxu0 0.0
      %566 = vmatpush1.msra.mxu0 0.0
      %567 = vmatprep.subr.mxu0 0.0
      %568 = vmatpush1.msra.mxu0 0.0
      %569 = vmatprep.subr.mxu0 0.0
      %570 = vmatpush1.msra.mxu0 0.0
      %571 = vmatprep.subr.mxu0 0.0
      %572 = vmatpush1.msra.mxu0 0.0
      %573 = vmatprep.subr.mxu0 0.0
      %574 = vmatpush1.msra.mxu0 0.0
      %575 = vmatprep.subr.mxu0 0.0
      %576 = vmatpush1.msra.mxu0 0.0
      %577 = vmatprep.subr.mxu0 0.0
      %578 = vmatpush1.msra.mxu0 0.0
      %579 = vmatprep.subr.mxu0 0.0
      %580 = vmatpush1.msra.mxu0 0.0
      %581 = vmatprep.subr.mxu0 0.0
      %582 = vmatpush1.msra.mxu0 0.0
      %583 = vmatprep.subr.mxu0 0.0
      %584 = vmatpush1.msra.mxu0 0.0
      %585 = vmatprep.subr.mxu0 0.0
      %586 = vmatpush1.msra.mxu0 0.0
      %587 = vmatprep.subr.mxu0 0.0
      %588 = vmatpush1.msra.mxu0 0.0
      %589 = vmatprep.subr.mxu0 0.0
      %590 = vmatpush1.msra.mxu0 0.0
      %591 = vmatprep.subr.mxu0 0.0
      %592 = vmatpush1.msra.mxu0 0.0
      %593 = vmatprep.subr.mxu0 0.0
      %594 = vmatpush1.msra.mxu0 0.0
      %595 = vmatprep.subr.mxu0 0.0
      %596 = vmatpush1.msra.mxu0 0.0
      %597 = vmatprep.subr.mxu0 0.0
      %598 = vmatpush1.msra.mxu0 0.0
      %599 = vmatprep.subr.mxu0 0.0
      %600 = vmatpush1.msra.mxu0 0.0
      %601 = vmatprep.subr.mxu0 0.0
      %602 = vmatpush1.msra.mxu0 0.0
      %603 = vmatprep.subr.mxu0 0.0
      %604 = vmatpush1.msra.mxu0 0.0
      %605 = vmatprep.subr.mxu0 0.0
      %606 = vmatpush1.msra.mxu0 0.0
      %607 = vmatprep.subr.mxu0 0.0
      %608 = vmatpush1.msra.mxu0 0.0
      %609 = vmatprep.subr.mxu0 0.0
      %610 = vmatpush1.msra.mxu0 0.0
      %611 = vmatprep.subr.mxu0 0.0
      %612 = vmatpush1.msra.mxu0 0.0
      %613 = vmatprep.subr.mxu0 0.0
      %614 = vmatpush1.msra.mxu0 0.0
      %615 = vmatprep.subr.mxu0 0.0
      %616 = vmatpush1.msra.mxu0 0.0
      %617 = vmatprep.mubr.f32.mxu0 0.0
      %618 = vmatmul.mubr.f32.gmra.mrb[0].mxu0 %v548
      %v619 = vpop.f32.mrb[0].mxu0
      %v620 = vadd.f32 %v537, %v619
      %v621 = vpop.f32.mrb[0].mxu0
      %v622 = vadd.f32 %v539, %v621
      %623 = vmatprep.mubr.f32.mxu0 0.0
      %624 = vmatmul.mubr.f32.gmra.mrb[0].mxu0 %v551
      %v625 = vpop.f32.mrb[0].mxu0
      %v626 = vadd.f32 %v543, %v625
      %v627 = vpop.f32.mrb[0].mxu0
      %v628 = vadd.f32 %v545, %v627
      %629 = vdwg.mxu0
      %s630 = scalar_lea.vmem %s5, 16
      %v631 = vld [vmem:[%s630] sm:$0xff]
      %v632 = vld [vmem:[%s630 + $0x8] sm:$0xff]
      %v634 = vsel %vm351, %v631, 0
      %v637 = vsel %vm351, %v632, 0
      %639 = vmatprep.subr.mxu0 %v427
      %640 = vmatpush1.msra.mxu0 %v425
      %641 = vmatprep.subr.mxu0 %v433
      %642 = vmatpush1.msra.mxu0 %v431
      %643 = vmatprep.subr.mxu0 0.0
      %644 = vmatpush1.msra.mxu0 0.0
      %645 = vmatprep.subr.mxu0 0.0
      %646 = vmatpush1.msra.mxu0 0.0
      %647 = vmatprep.subr.mxu0 0.0
      %648 = vmatpush1.msra.mxu0 0.0
      %649 = vmatprep.subr.mxu0 0.0
      %650 = vmatpush1.msra.mxu0 0.0
      %651 = vmatprep.subr.mxu0 0.0
      %652 = vmatpush1.msra.mxu0 0.0
      %653 = vmatprep.subr.mxu0 0.0
      %654 = vmatpush1.msra.mxu0 0.0
      %655 = vmatprep.subr.mxu0 0.0
      %656 = vmatpush1.msra.mxu0 0.0
      %657 = vmatprep.subr.mxu0 0.0
      %658 = vmatpush1.msra.mxu0 0.0
      %659 = vmatprep.subr.mxu0 0.0
      %660 = vmatpush1.msra.mxu0 0.0
      %661 = vmatprep.subr.mxu0 0.0
      %662 = vmatpush1.msra.mxu0 0.0
      %663 = vmatprep.subr.mxu0 0.0
      %664 = vmatpush1.msra.mxu0 0.0
      %665 = vmatprep.subr.mxu0 0.0
      %666 = vmatpush1.msra.mxu0 0.0
      %667 = vmatprep.subr.mxu0 0.0
      %668 = vmatpush1.msra.mxu0 0.0
      %669 = vmatprep.subr.mxu0 0.0
      %670 = vmatpush1.msra.mxu0 0.0
      %671 = vmatprep.subr.mxu0 0.0
      %672 = vmatpush1.msra.mxu0 0.0
      %673 = vmatprep.subr.mxu0 0.0
      %674 = vmatpush1.msra.mxu0 0.0
      %675 = vmatprep.subr.mxu0 0.0
      %676 = vmatpush1.msra.mxu0 0.0
      %677 = vmatprep.subr.mxu0 0.0
      %678 = vmatpush1.msra.mxu0 0.0
      %679 = vmatprep.subr.mxu0 0.0
      %680 = vmatpush1.msra.mxu0 0.0
      %681 = vmatprep.subr.mxu0 0.0
      %682 = vmatpush1.msra.mxu0 0.0
      %683 = vmatprep.subr.mxu0 0.0
      %684 = vmatpush1.msra.mxu0 0.0
      %685 = vmatprep.subr.mxu0 0.0
      %686 = vmatpush1.msra.mxu0 0.0
      %687 = vmatprep.subr.mxu0 0.0
      %688 = vmatpush1.msra.mxu0 0.0
      %689 = vmatprep.subr.mxu0 0.0
      %690 = vmatpush1.msra.mxu0 0.0
      %691 = vmatprep.subr.mxu0 0.0
      %692 = vmatpush1.msra.mxu0 0.0
      %693 = vmatprep.subr.mxu0 0.0
      %694 = vmatpush1.msra.mxu0 0.0
      %695 = vmatprep.subr.mxu0 0.0
      %696 = vmatpush1.msra.mxu0 0.0
      %697 = vmatprep.subr.mxu0 0.0
      %698 = vmatpush1.msra.mxu0 0.0
      %699 = vmatprep.subr.mxu0 0.0
      %700 = vmatpush1.msra.mxu0 0.0
      %701 = vmatprep.subr.mxu0 0.0
      %702 = vmatpush1.msra.mxu0 0.0
      %703 = vmatprep.mubr.f32.mxu0 0.0
      %704 = vmatmul.mubr.f32.gmra.mrb[0].mxu0 %v634
      %v705 = vpop.f32.mrb[0].mxu0
      %v706 = vadd.f32 0.0, %v705
      %v707 = vpop.f32.mrb[0].mxu0
      %v708 = vadd.f32 0.0, %v707
      %709 = vmatprep.mubr.f32.mxu0 0.0
      %710 = vmatmul.mubr.f32.gmra.mrb[0].mxu0 %v637
      %v711 = vpop.f32.mrb[0].mxu0
      %v712 = vadd.f32 0.0, %v711
      %v713 = vpop.f32.mrb[0].mxu0
      %v714 = vadd.f32 0.0, %v713
      %715 = vdwg.mxu0
      %v717 = vsel %vm351, %v459, 0
      %v720 = vsel %vm351, %v460, 0
      %722 = vmatprep.subr.mxu0 %v454
      %723 = vmatpush1.msra.mxu0 %v453
      %724 = vmatprep.subr.mxu0 %v456
      %725 = vmatpush1.msra.mxu0 %v455
      %726 = vmatprep.subr.mxu0 0.0
      %727 = vmatpush1.msra.mxu0 0.0
      %728 = vmatprep.subr.mxu0 0.0
      %729 = vmatpush1.msra.mxu0 0.0
      %730 = vmatprep.subr.mxu0 0.0
      %731 = vmatpush1.msra.mxu0 0.0
      %732 = vmatprep.subr.mxu0 0.0
      %733 = vmatpush1.msra.mxu0 0.0
      %734 = vmatprep.subr.mxu0 0.0
      %735 = vmatpush1.msra.mxu0 0.0
      %736 = vmatprep.subr.mxu0 0.0
      %737 = vmatpush1.msra.mxu0 0.0
      %738 = vmatprep.subr.mxu0 0.0
      %739 = vmatpush1.msra.mxu0 0.0
      %740 = vmatprep.subr.mxu0 0.0
      %741 = vmatpush1.msra.mxu0 0.0
      %742 = vmatprep.subr.mxu0 0.0
      %743 = vmatpush1.msra.mxu0 0.0
      %744 = vmatprep.subr.mxu0 0.0
      %745 = vmatpush1.msra.mxu0 0.0
      %746 = vmatprep.subr.mxu0 0.0
      %747 = vmatpush1.msra.mxu0 0.0
      %748 = vmatprep.subr.mxu0 0.0
      %749 = vmatpush1.msra.mxu0 0.0
      %750 = vmatprep.subr.mxu0 0.0
      %751 = vmatpush1.msra.mxu0 0.0
      %752 = vmatprep.subr.mxu0 0.0
      %753 = vmatpush1.msra.mxu0 0.0
      %754 = vmatprep.subr.mxu0 0.0
      %755 = vmatpush1.msra.mxu0 0.0
      %756 = vmatprep.subr.mxu0 0.0
      %757 = vmatpush1.msra.mxu0 0.0
      %758 = vmatprep.subr.mxu0 0.0
      %759 = vmatpush1.msra.mxu0 0.0
      %760 = vmatprep.subr.mxu0 0.0
      %761 = vmatpush1.msra.mxu0 0.0
      %762 = vmatprep.subr.mxu0 0.0
      %763 = vmatpush1.msra.mxu0 0.0
      %764 = vmatprep.subr.mxu0 0.0
      %765 = vmatpush1.msra.mxu0 0.0
      %766 = vmatprep.subr.mxu0 0.0
      %767 = vmatpush1.msra.mxu0 0.0
      %768 = vmatprep.subr.mxu0 0.0
      %769 = vmatpush1.msra.mxu0 0.0
      %770 = vmatprep.subr.mxu0 0.0
      %771 = vmatpush1.msra.mxu0 0.0
      %772 = vmatprep.subr.mxu0 0.0
      %773 = vmatpush1.msra.mxu0 0.0
      %774 = vmatprep.subr.mxu0 0.0
      %775 = vmatpush1.msra.mxu0 0.0
      %776 = vmatprep.subr.mxu0 0.0
      %777 = vmatpush1.msra.mxu0 0.0
      %778 = vmatprep.subr.mxu0 0.0
      %779 = vmatpush1.msra.mxu0 0.0
      %780 = vmatprep.subr.mxu0 0.0
      %781 = vmatpush1.msra.mxu0 0.0
      %782 = vmatprep.subr.mxu0 0.0
      %783 = vmatpush1.msra.mxu0 0.0
      %784 = vmatprep.subr.mxu0 0.0
      %785 = vmatpush1.msra.mxu0 0.0
      %786 = vmatprep.mubr.f32.mxu0 0.0
      %787 = vmatmul.mubr.f32.gmra.mrb[0].mxu0 %v717
      %v788 = vpop.f32.mrb[0].mxu0
      %v789 = vadd.f32 %v706, %v788
      %v790 = vpop.f32.mrb[0].mxu0
      %v791 = vadd.f32 %v708, %v790
      %792 = vmatprep.mubr.f32.mxu0 0.0
      %793 = vmatmul.mubr.f32.gmra.mrb[0].mxu0 %v720
      %v794 = vpop.f32.mrb[0].mxu0
      %v795 = vadd.f32 %v712, %v794
      %v796 = vpop.f32.mrb[0].mxu0
      %v797 = vadd.f32 %v714, %v796
      %798 = vdwg.mxu0
      %799 = vrot.lane.b32.xlu0 %v425, 127
      %v800 = vpop.permute.xlu0 %799
      %801 = vrot.lane.b32.xlu0 %v431, 127
      %v802 = vpop.permute.xlu0 %801
      %803 = vrot.lane.b32.xlu0 %v427, 127
      %v804 = vpop.permute.xlu0 %803
      %805 = vrot.lane.b32.xlu0 %v433, 127
      %v806 = vpop.permute.xlu0 %805
      %vm807 = vcmp.lt.s32.totalorder %v436, 127
      %v808 = vsel %vm807, %v800, %v804
      %v809 = vsel %vm807, %v802, %v806
      %v810 = vsel %vm807, %v804, %v800
      %v811 = vsel %vm807, %v806, %v802
      %vm812 = vcmp.lt.s32.totalorder %v436, 255
      %vm813 = vcmp.lt.s32.totalorder %v437, 255
      %v814 = vsel %vm812, %v808, 0.0
      %v815 = vsel %vm813, %v810, 0.0
      %v816 = vsel %vm812, %v809, 0.0
      %v817 = vsel %vm813, %v811, 0.0
      %s818 = scalar_lea.vmem %s3, 32
      %v819 = vld [vmem:[%s818] sm:$0xff]
      %v820 = vld [vmem:[%s818 + $0x8] sm:$0xff]
      %v822 = vsel %vm351, %v819, 0
      %v825 = vsel %vm351, %v820, 0
      %827 = vmatprep.subr.mxu0 %v815
      %828 = vmatpush1.msra.mxu0 %v814
      %829 = vmatprep.subr.mxu0 %v817
      %830 = vmatpush1.msra.mxu0 %v816
      %831 = vmatprep.subr.mxu0 0.0
      %832 = vmatpush1.msra.mxu0 0.0
      %833 = vmatprep.subr.mxu0 0.0
      %834 = vmatpush1.msra.mxu0 0.0
      %835 = vmatprep.subr.mxu0 0.0
      %836 = vmatpush1.msra.mxu0 0.0
      %837 = vmatprep.subr.mxu0 0.0
      %838 = vmatpush1.msra.mxu0 0.0
      %839 = vmatprep.subr.mxu0 0.0
      %840 = vmatpush1.msra.mxu0 0.0
      %841 = vmatprep.subr.mxu0 0.0
      %842 = vmatpush1.msra.mxu0 0.0
      %843 = vmatprep.subr.mxu0 0.0
      %844 = vmatpush1.msra.mxu0 0.0
      %845 = vmatprep.subr.mxu0 0.0
      %846 = vmatpush1.msra.mxu0 0.0
      %847 = vmatprep.subr.mxu0 0.0
      %848 = vmatpush1.msra.mxu0 0.0
      %849 = vmatprep.subr.mxu0 0.0
      %850 = vmatpush1.msra.mxu0 0.0
      %851 = vmatprep.subr.mxu0 0.0
      %852 = vmatpush1.msra.mxu0 0.0
      %853 = vmatprep.subr.mxu0 0.0
      %854 = vmatpush1.msra.mxu0 0.0
      %855 = vmatprep.subr.mxu0 0.0
      %856 = vmatpush1.msra.mxu0 0.0
      %857 = vmatprep.subr.mxu0 0.0
      %858 = vmatpush1.msra.mxu0 0.0
      %859 = vmatprep.subr.mxu0 0.0
      %860 = vmatpush1.msra.mxu0 0.0
      %861 = vmatprep.subr.mxu0 0.0
      %862 = vmatpush1.msra.mxu0 0.0
      %863 = vmatprep.subr.mxu0 0.0
      %864 = vmatpush1.msra.mxu0 0.0
      %865 = vmatprep.subr.mxu0 0.0
      %866 = vmatpush1.msra.mxu0 0.0
      %867 = vmatprep.subr.mxu0 0.0
      %868 = vmatpush1.msra.mxu0 0.0
      %869 = vmatprep.subr.mxu0 0.0
      %870 = vmatpush1.msra.mxu0 0.0
      %871 = vmatprep.subr.mxu0 0.0
      %872 = vmatpush1.msra.mxu0 0.0
      %873 = vmatprep.subr.mxu0 0.0
      %874 = vmatpush1.msra.mxu0 0.0
      %875 = vmatprep.subr.mxu0 0.0
      %876 = vmatpush1.msra.mxu0 0.0
      %877 = vmatprep.subr.mxu0 0.0
      %878 = vmatpush1.msra.mxu0 0.0
      %879 = vmatprep.subr.mxu0 0.0
      %880 = vmatpush1.msra.mxu0 0.0
      %881 = vmatprep.subr.mxu0 0.0
      %882 = vmatpush1.msra.mxu0 0.0
      %883 = vmatprep.subr.mxu0 0.0
      %884 = vmatpush1.msra.mxu0 0.0
      %885 = vmatprep.subr.mxu0 0.0
      %886 = vmatpush1.msra.mxu0 0.0
      %887 = vmatprep.subr.mxu0 0.0
      %888 = vmatpush1.msra.mxu0 0.0
      %889 = vmatprep.subr.mxu0 0.0
      %890 = vmatpush1.msra.mxu0 0.0
      %891 = vmatprep.mubr.f32.mxu0 0.0
      %892 = vmatmul.mubr.f32.gmra.mrb[0].mxu0 %v822
      %v893 = vpop.f32.mrb[0].mxu0
      %v894 = vadd.f32 0.0, %v893
      %v895 = vpop.f32.mrb[0].mxu0
      %v896 = vadd.f32 0.0, %v895
      %897 = vmatprep.mubr.f32.mxu0 0.0
      %898 = vmatmul.mubr.f32.gmra.mrb[0].mxu0 %v825
      %v899 = vpop.f32.mrb[0].mxu0
      %v900 = vadd.f32 0.0, %v899
      %v901 = vpop.f32.mrb[0].mxu0
      %v902 = vadd.f32 0.0, %v901
      %903 = vdwg.mxu0
      %v904 = vadd.f32 %v620, %v894
      %v905 = vadd.f32 %v622, %v896
      %v906 = vadd.f32 %v626, %v900
      %v907 = vadd.f32 %v628, %v902
      %s908 = scalar_lea.vmem %s5, 32
      %v909 = vld [vmem:[%s908] sm:$0xff]
      %v910 = vld [vmem:[%s908 + $0x8] sm:$0xff]
      %v912 = vsel %vm351, %v909, 0
      %v915 = vsel %vm351, %v910, 0
      %917 = vmatprep.subr.mxu0 %v815
      %918 = vmatpush1.msra.mxu0 %v814
      %919 = vmatprep.subr.mxu0 %v817
      %920 = vmatpush1.msra.mxu0 %v816
      %921 = vmatprep.subr.mxu0 0.0
      %922 = vmatpush1.msra.mxu0 0.0
      %923 = vmatprep.subr.mxu0 0.0
      %924 = vmatpush1.msra.mxu0 0.0
      %925 = vmatprep.subr.mxu0 0.0
      %926 = vmatpush1.msra.mxu0 0.0
      %927 = vmatprep.subr.mxu0 0.0
      %928 = vmatpush1.msra.mxu0 0.0
      %929 = vmatprep.subr.mxu0 0.0
      %930 = vmatpush1.msra.mxu0 0.0
      %931 = vmatprep.subr.mxu0 0.0
      %932 = vmatpush1.msra.mxu0 0.0
      %933 = vmatprep.subr.mxu0 0.0
      %934 = vmatpush1.msra.mxu0 0.0
      %935 = vmatprep.subr.mxu0 0.0
      %936 = vmatpush1.msra.mxu0 0.0
      %937 = vmatprep.subr.mxu0 0.0
      %938 = vmatpush1.msra.mxu0 0.0
      %939 = vmatprep.subr.mxu0 0.0
      %940 = vmatpush1.msra.mxu0 0.0
      %941 = vmatprep.subr.mxu0 0.0
      %942 = vmatpush1.msra.mxu0 0.0
      %943 = vmatprep.subr.mxu0 0.0
      %944 = vmatpush1.msra.mxu0 0.0
      %945 = vmatprep.subr.mxu0 0.0
      %946 = vmatpush1.msra.mxu0 0.0
      %947 = vmatprep.subr.mxu0 0.0
      %948 = vmatpush1.msra.mxu0 0.0
      %949 = vmatprep.subr.mxu0 0.0
      %950 = vmatpush1.msra.mxu0 0.0
      %951 = vmatprep.subr.mxu0 0.0
      %952 = vmatpush1.msra.mxu0 0.0
      %953 = vmatprep.subr.mxu0 0.0
      %954 = vmatpush1.msra.mxu0 0.0
      %955 = vmatprep.subr.mxu0 0.0
      %956 = vmatpush1.msra.mxu0 0.0
      %957 = vmatprep.subr.mxu0 0.0
      %958 = vmatpush1.msra.mxu0 0.0
      %959 = vmatprep.subr.mxu0 0.0
      %960 = vmatpush1.msra.mxu0 0.0
      %961 = vmatprep.subr.mxu0 0.0
      %962 = vmatpush1.msra.mxu0 0.0
      %963 = vmatprep.subr.mxu0 0.0
      %964 = vmatpush1.msra.mxu0 0.0
      %965 = vmatprep.subr.mxu0 0.0
      %966 = vmatpush1.msra.mxu0 0.0
      %967 = vmatprep.subr.mxu0 0.0
      %968 = vmatpush1.msra.mxu0 0.0
      %969 = vmatprep.subr.mxu0 0.0
      %970 = vmatpush1.msra.mxu0 0.0
      %971 = vmatprep.subr.mxu0 0.0
      %972 = vmatpush1.msra.mxu0 0.0
      %973 = vmatprep.subr.mxu0 0.0
      %974 = vmatpush1.msra.mxu0 0.0
      %975 = vmatprep.subr.mxu0 0.0
      %976 = vmatpush1.msra.mxu0 0.0
      %977 = vmatprep.subr.mxu0 0.0
      %978 = vmatpush1.msra.mxu0 0.0
      %979 = vmatprep.subr.mxu0 0.0
      %980 = vmatpush1.msra.mxu0 0.0
      %981 = vmatprep.mubr.f32.mxu0 0.0
      %982 = vmatmul.mubr.f32.gmra.mrb[0].mxu0 %v912
      %v983 = vpop.f32.mrb[0].mxu0
      %v984 = vadd.f32 0.0, %v983
      %v985 = vpop.f32.mrb[0].mxu0
      %v986 = vadd.f32 0.0, %v985
      %987 = vmatprep.mubr.f32.mxu0 0.0
      %988 = vmatmul.mubr.f32.gmra.mrb[0].mxu0 %v915
      %v989 = vpop.f32.mrb[0].mxu0
      %v990 = vadd.f32 0.0, %v989
      %v991 = vpop.f32.mrb[0].mxu0
      %v992 = vadd.f32 0.0, %v991
      %993 = vdwg.mxu0
      %v994 = vadd.f32 %v789, %v984
      %v995 = vadd.f32 %v791, %v986
      %v996 = vadd.f32 %v795, %v990
      %v997 = vadd.f32 %v797, %v992
      %v998 = vld [vmem:[%s4] sm:$0xff]
      %v999 = vld [vmem:[%s4 + $0x8] sm:$0xff]
      %1001 = vset.pattern.permute.xlu0 0
      %1002 = vperm.xlu0 %1001, %v998
      %v1003 = vpop.permute.xlu0 %1002
      %1006 = vset.pattern.permute.xlu0 0
      %1007 = vperm.xlu0 %1006, %v999
      %v1008 = vpop.permute.xlu0 %1007
      %v1010 = vadd.f32 %v904, %v1003
      %v1011 = vadd.f32 %v905, %v1003
      %v1012 = vadd.f32 %v906, %v1008
      %v1013 = vadd.f32 %v907, %v1008
      %v1014 = vld [vmem:[%s6] sm:$0xff]
      %v1015 = vld [vmem:[%s6 + $0x8] sm:$0xff]
      %1017 = vset.pattern.permute.xlu0 0
      %1018 = vperm.xlu0 %1017, %v1014
      %v1019 = vpop.permute.xlu0 %1018
      %1022 = vset.pattern.permute.xlu0 0
      %1023 = vperm.xlu0 %1022, %v1015
      %v1024 = vpop.permute.xlu0 %1023
      %v1026 = vadd.f32 %v994, %v1019
      %v1027 = vadd.f32 %v995, %v1019
      %v1028 = vadd.f32 %v996, %v1024
      %v1029 = vadd.f32 %v997, %v1024
      %v1030 = vtanh.pop %v1010
      %v1031 = vtanh.pop %v1011
      %v1032 = vtanh.pop %v1012
      %v1033 = vtanh.pop %v1013
      %v1034 = vsub.f32 0.0, %v1026
      %v1035 = vsub.f32 0.0, %v1027
      %v1036 = vsub.f32 0.0, %v1028
      %v1037 = vsub.f32 0.0, %v1029
      %v1038 = vmul.f32 %v1034, 1.442695
      %v1039 = vpow.pop %v1038
      %v1040 = vmul.f32 %v1035, 1.442695
      %v1041 = vpow.pop %v1040
      %v1042 = vmul.f32 %v1036, 1.442695
      %v1043 = vpow.pop %v1042
      %v1044 = vmul.f32 %v1037, 1.442695
      %v1045 = vpow.pop %v1044
      %v1046 = vadd.f32 %v1039, 1.0
      %v1047 = vadd.f32 %v1041, 1.0
      %v1048 = vadd.f32 %v1043, 1.0
      %v1049 = vadd.f32 %v1045, 1.0
      %v1050 = vrcp.pop %v1046
      %v1051 = vmul.f32 1.0, %v1050
      %v1052 = vrcp.pop %v1047
      %v1053 = vmul.f32 1.0, %v1052
      %v1054 = vrcp.pop %v1048
      %v1055 = vmul.f32 1.0, %v1054
      %v1056 = vrcp.pop %v1049
      %v1057 = vmul.f32 1.0, %v1056
      %v1058 = vmul.f32 %v1030, %v1051
      %v1059 = vmul.f32 %v1031, %v1053
      %v1060 = vmul.f32 %v1032, %v1055
      %v1061 = vmul.f32 %v1033, %v1057
      %v1062 = vld [vmem:[%s7] sm:$0xff]
      %v1063 = vld [vmem:[%s7 + $0x8] sm:$0xff]
      %v1064 = vld [vmem:[%s8] sm:$0xff]
      %v1065 = vld [vmem:[%s8 + $0x8] sm:$0xff]
      %1067 = vset.pattern.permute.xlu0 0
      %1068 = vperm.xlu0 %1067, %v1064
      %v1069 = vpop.permute.xlu0 %1068
      %1072 = vset.pattern.permute.xlu0 0
      %1073 = vperm.xlu0 %1072, %v1065
      %v1074 = vpop.permute.xlu0 %1073
      %v1077 = vsel %vm351, %v1062, 0
      %v1080 = vsel %vm351, %v1063, 0
      %1082 = vmatprep.subr.mxu0 %v1059
      %1083 = vmatpush1.msra.mxu0 %v1058
      %1084 = vmatprep.subr.mxu0 %v1061
      %1085 = vmatpush1.msra.mxu0 %v1060
      %1086 = vmatprep.subr.mxu0 0.0
      %1087 = vmatpush1.msra.mxu0 0.0
      %1088 = vmatprep.subr.mxu0 0.0
      %1089 = vmatpush1.msra.mxu0 0.0
      %1090 = vmatprep.subr.mxu0 0.0
      %1091 = vmatpush1.msra.mxu0 0.0
      %1092 = vmatprep.subr.mxu0 0.0
      %1093 = vmatpush1.msra.mxu0 0.0
      %1094 = vmatprep.subr.mxu0 0.0
      %1095 = vmatpush1.msra.mxu0 0.0
      %1096 = vmatprep.subr.mxu0 0.0
      %1097 = vmatpush1.msra.mxu0 0.0
      %1098 = vmatprep.subr.mxu0 0.0
      %1099 = vmatpush1.msra.mxu0 0.0
      %1100 = vmatprep.subr.mxu0 0.0
      %1101 = vmatpush1.msra.mxu0 0.0
      %1102 = vmatprep.subr.mxu0 0.0
      %1103 = vmatpush1.msra.mxu0 0.0
      %1104 = vmatprep.subr.mxu0 0.0
      %1105 = vmatpush1.msra.mxu0 0.0
      %1106 = vmatprep.subr.mxu0 0.0
      %1107 = vmatpush1.msra.mxu0 0.0
      %1108 = vmatprep.subr.mxu0 0.0
      %1109 = vmatpush1.msra.mxu0 0.0
      %1110 = vmatprep.subr.mxu0 0.0
      %1111 = vmatpush1.msra.mxu0 0.0
      %1112 = vmatprep.subr.mxu0 0.0
      %1113 = vmatpush1.msra.mxu0 0.0
      %1114 = vmatprep.subr.mxu0 0.0
      %1115 = vmatpush1.msra.mxu0 0.0
      %1116 = vmatprep.subr.mxu0 0.0
      %1117 = vmatpush1.msra.mxu0 0.0
      %1118 = vmatprep.subr.mxu0 0.0
      %1119 = vmatpush1.msra.mxu0 0.0
      %1120 = vmatprep.subr.mxu0 0.0
      %1121 = vmatpush1.msra.mxu0 0.0
      %1122 = vmatprep.subr.mxu0 0.0
      %1123 = vmatpush1.msra.mxu0 0.0
      %1124 = vmatprep.subr.mxu0 0.0
      %1125 = vmatpush1.msra.mxu0 0.0
      %1126 = vmatprep.subr.mxu0 0.0
      %1127 = vmatpush1.msra.mxu0 0.0
      %1128 = vmatprep.subr.mxu0 0.0
      %1129 = vmatpush1.msra.mxu0 0.0
      %1130 = vmatprep.subr.mxu0 0.0
      %1131 = vmatpush1.msra.mxu0 0.0
      %1132 = vmatprep.subr.mxu0 0.0
      %1133 = vmatpush1.msra.mxu0 0.0
      %1134 = vmatprep.subr.mxu0 0.0
      %1135 = vmatpush1.msra.mxu0 0.0
      %1136 = vmatprep.subr.mxu0 0.0
      %1137 = vmatpush1.msra.mxu0 0.0
      %1138 = vmatprep.subr.mxu0 0.0
      %1139 = vmatpush1.msra.mxu0 0.0
      %1140 = vmatprep.subr.mxu0 0.0
      %1141 = vmatpush1.msra.mxu0 0.0
      %1142 = vmatprep.subr.mxu0 0.0
      %1143 = vmatpush1.msra.mxu0 0.0
      %1144 = vmatprep.subr.mxu0 0.0
      %1145 = vmatpush1.msra.mxu0 0.0
      %1146 = vmatprep.mubr.f32.mxu0 0.0
      %1147 = vmatmul.mubr.f32.gmra.mrb[0].mxu0 %v1077
      %v1148 = vpop.f32.mrb[0].mxu0
      %v1149 = vadd.f32 %v1069, %v1148
      %v1150 = vpop.f32.mrb[0].mxu0
      %v1151 = vadd.f32 %v1069, %v1150
      %1152 = vmatprep.mubr.f32.mxu0 0.0
      %1153 = vmatmul.mubr.f32.gmra.mrb[0].mxu0 %v1080
      %v1154 = vpop.f32.mrb[0].mxu0
      %v1155 = vadd.f32 %v1074, %v1154
      %v1156 = vpop.f32.mrb[0].mxu0
      %v1157 = vadd.f32 %v1074, %v1156
      %1158 = vdwg.mxu0
      %v1159 = vadd.f32 %v425, %v1149
      %v1160 = vadd.f32 %v427, %v1151
      %v1161 = vadd.f32 %v431, %v1155
      %v1162 = vadd.f32 %v433, %v1157
      %1163 = vrot.lane.b32.xlu0 %v1149, 2
      %v1164 = vpop.permute.xlu0 %1163
      %1165 = vrot.lane.b32.xlu0 %v1155, 2
      %v1166 = vpop.permute.xlu0 %1165
      %1167 = vrot.lane.b32.xlu0 %v1151, 2
      %v1168 = vpop.permute.xlu0 %1167
      %1169 = vrot.lane.b32.xlu0 %v1157, 2
      %v1170 = vpop.permute.xlu0 %1169
      %vm1171 = vcmp.lt.s32.totalorder %v436, 2
      %v1172 = vsel %vm1171, %v1164, %v1168
      %v1173 = vsel %vm1171, %v1166, %v1170
      %v1174 = vsel %vm1171, %v1168, %v1164
      %v1175 = vsel %vm1171, %v1170, %v1166
      %vm1176 = vcmp.ge.s32.totalorder %v436, 2
      %vm1177 = vcmp.ge.s32.totalorder %v437, 2
      %v1178 = vsel %vm1176, %v1174, 0.0
      %v1179 = vsel %vm1177, %v1172, 0.0
      %v1180 = vsel %vm1176, %v1175, 0.0
      %v1181 = vsel %vm1177, %v1173, 0.0
      %s1182 = scalar_lea.vmem %s3, 48
      %v1183 = vld [vmem:[%s1182] sm:$0xff]
      %v1184 = vld [vmem:[%s1182 + $0x8] sm:$0xff]
      %s1185 = scalar_lea.vmem %s5, 48
      %v1186 = vld [vmem:[%s1185] sm:$0xff]
      %v1187 = vld [vmem:[%s1185 + $0x8] sm:$0xff]
      %s1188 = scalar_lea.vmem %s3, 64
      %v1189 = vld [vmem:[%s1188] sm:$0xff]
      %v1190 = vld [vmem:[%s1188 + $0x8] sm:$0xff]
      %v1192 = vsel %vm351, %v1189, 0
      %v1195 = vsel %vm351, %v1190, 0
      %1197 = vmatprep.subr.mxu0 %v1151
      %1198 = vmatpush1.msra.mxu0 %v1149
      %1199 = vmatprep.subr.mxu0 %v1157
      %1200 = vmatpush1.msra.mxu0 %v1155
      %1201 = vmatprep.subr.mxu0 0.0
      %1202 = vmatpush1.msra.mxu0 0.0
      %1203 = vmatprep.subr.mxu0 0.0
      %1204 = vmatpush1.msra.mxu0 0.0
      %1205 = vmatprep.subr.mxu0 0.0
      %1206 = vmatpush1.msra.mxu0 0.0
      %1207 = vmatprep.subr.mxu0 0.0
      %1208 = vmatpush1.msra.mxu0 0.0
      %1209 = vmatprep.subr.mxu0 0.0
      %1210 = vmatpush1.msra.mxu0 0.0
      %1211 = vmatprep.subr.mxu0 0.0
      %1212 = vmatpush1.msra.mxu0 0.0
      %1213 = vmatprep.subr.mxu0 0.0
      %1214 = vmatpush1.msra.mxu0 0.0
      %1215 = vmatprep.subr.mxu0 0.0
      %1216 = vmatpush1.msra.mxu0 0.0
      %1217 = vmatprep.subr.mxu0 0.0
      %1218 = vmatpush1.msra.mxu0 0.0
      %1219 = vmatprep.subr.mxu0 0.0
      %1220 = vmatpush1.msra.mxu0 0.0
      %1221 = vmatprep.subr.mxu0 0.0
      %1222 = vmatpush1.msra.mxu0 0.0
      %1223 = vmatprep.subr.mxu0 0.0
      %1224 = vmatpush1.msra.mxu0 0.0
      %1225 = vmatprep.subr.mxu0 0.0
      %1226 = vmatpush1.msra.mxu0 0.0
      %1227 = vmatprep.subr.mxu0 0.0
      %1228 = vmatpush1.msra.mxu0 0.0
      %1229 = vmatprep.subr.mxu0 0.0
      %1230 = vmatpush1.msra.mxu0 0.0
      %1231 = vmatprep.subr.mxu0 0.0
      %1232 = vmatpush1.msra.mxu0 0.0
      %1233 = vmatprep.subr.mxu0 0.0
      %1234 = vmatpush1.msra.mxu0 0.0
      %1235 = vmatprep.subr.mxu0 0.0
      %1236 = vmatpush1.msra.mxu0 0.0
      %1237 = vmatprep.subr.mxu0 0.0
      %1238 = vmatpush1.msra.mxu0 0.0
      %1239 = vmatprep.subr.mxu0 0.0
      %1240 = vmatpush1.msra.mxu0 0.0
      %1241 = vmatprep.subr.mxu0 0.0
      %1242 = vmatpush1.msra.mxu0 0.0
      %1243 = vmatprep.subr.mxu0 0.0
      %1244 = vmatpush1.msra.mxu0 0.0
      %1245 = vmatprep.subr.mxu0 0.0
      %1246 = vmatpush1.msra.mxu0 0.0
      %1247 = vmatprep.subr.mxu0 0.0
      %1248 = vmatpush1.msra.mxu0 0.0
      %1249 = vmatprep.subr.mxu0 0.0
      %1250 = vmatpush1.msra.mxu0 0.0
      %1251 = vmatprep.subr.mxu0 0.0
      %1252 = vmatpush1.msra.mxu0 0.0
      %1253 = vmatprep.subr.mxu0 0.0
      %1254 = vmatpush1.msra.mxu0 0.0
      %1255 = vmatprep.subr.mxu0 0.0
      %1256 = vmatpush1.msra.mxu0 0.0
      %1257 = vmatprep.subr.mxu0 0.0
      %1258 = vmatpush1.msra.mxu0 0.0
      %1259 = vmatprep.subr.mxu0 0.0
      %1260 = vmatpush1.msra.mxu0 0.0
      %1261 = vmatprep.mubr.f32.mxu0 0.0
      %1262 = vmatmul.mubr.f32.gmra.mrb[0].mxu0 %v1192
      %v1263 = vpop.f32.mrb[0].mxu0
      %v1264 = vadd.f32 0.0, %v1263
      %v1265 = vpop.f32.mrb[0].mxu0
      %v1266 = vadd.f32 0.0, %v1265
      %1267 = vmatprep.mubr.f32.mxu0 0.0
      %1268 = vmatmul.mubr.f32.gmra.mrb[0].mxu0 %v1195
      %v1269 = vpop.f32.mrb[0].mxu0
      %v1270 = vadd.f32 0.0, %v1269
      %v1271 = vpop.f32.mrb[0].mxu0
      %v1272 = vadd.f32 0.0, %v1271
      %1273 = vdwg.mxu0
      %v1275 = vsel %vm351, %v1183, 0
      %v1278 = vsel %vm351, %v1184, 0
      %1280 = vmatprep.subr.mxu0 %v1179
      %1281 = vmatpush1.msra.mxu0 %v1178
      %1282 = vmatprep.subr.mxu0 %v1181
      %1283 = vmatpush1.msra.mxu0 %v1180
      %1284 = vmatprep.subr.mxu0 0.0
      %1285 = vmatpush1.msra.mxu0 0.0
      %1286 = vmatprep.subr.mxu0 0.0
      %1287 = vmatpush1.msra.mxu0 0.0
      %1288 = vmatprep.subr.mxu0 0.0
      %1289 = vmatpush1.msra.mxu0 0.0
      %1290 = vmatprep.subr.mxu0 0.0
      %1291 = vmatpush1.msra.mxu0 0.0
      %1292 = vmatprep.subr.mxu0 0.0
      %1293 = vmatpush1.msra.mxu0 0.0
      %1294 = vmatprep.subr.mxu0 0.0
      %1295 = vmatpush1.msra.mxu0 0.0
      %1296 = vmatprep.subr.mxu0 0.0
      %1297 = vmatpush1.msra.mxu0 0.0
      %1298 = vmatprep.subr.mxu0 0.0
      %1299 = vmatpush1.msra.mxu0 0.0
      %1300 = vmatprep.subr.mxu0 0.0
      %1301 = vmatpush1.msra.mxu0 0.0
      %1302 = vmatprep.subr.mxu0 0.0
      %1303 = vmatpush1.msra.mxu0 0.0
      %1304 = vmatprep.subr.mxu0 0.0
      %1305 = vmatpush1.msra.mxu0 0.0
      %1306 = vmatprep.subr.mxu0 0.0
      %1307 = vmatpush1.msra.mxu0 0.0
      %1308 = vmatprep.subr.mxu0 0.0
      %1309 = vmatpush1.msra.mxu0 0.0
      %1310 = vmatprep.subr.mxu0 0.0
      %1311 = vmatpush1.msra.mxu0 0.0
      %1312 = vmatprep.subr.mxu0 0.0
      %1313 = vmatpush1.msra.mxu0 0.0
      %1314 = vmatprep.subr.mxu0 0.0
      %1315 = vmatpush1.msra.mxu0 0.0
      %1316 = vmatprep.subr.mxu0 0.0
      %1317 = vmatpush1.msra.mxu0 0.0
      %1318 = vmatprep.subr.mxu0 0.0
      %1319 = vmatpush1.msra.mxu0 0.0
      %1320 = vmatprep.subr.mxu0 0.0
      %1321 = vmatpush1.msra.mxu0 0.0
      %1322 = vmatprep.subr.mxu0 0.0
      %1323 = vmatpush1.msra.mxu0 0.0
      %1324 = vmatprep.subr.mxu0 0.0
      %1325 = vmatpush1.msra.mxu0 0.0
      %1326 = vmatprep.subr.mxu0 0.0
      %1327 = vmatpush1.msra.mxu0 0.0
      %1328 = vmatprep.subr.mxu0 0.0
      %1329 = vmatpush1.msra.mxu0 0.0
      %1330 = vmatprep.subr.mxu0 0.0
      %1331 = vmatpush1.msra.mxu0 0.0
      %1332 = vmatprep.subr.mxu0 0.0
      %1333 = vmatpush1.msra.mxu0 0.0
      %1334 = vmatprep.subr.mxu0 0.0
      %1335 = vmatpush1.msra.mxu0 0.0
      %1336 = vmatprep.subr.mxu0 0.0
      %1337 = vmatpush1.msra.mxu0 0.0
      %1338 = vmatprep.subr.mxu0 0.0
      %1339 = vmatpush1.msra.mxu0 0.0
      %1340 = vmatprep.subr.mxu0 0.0
      %1341 = vmatpush1.msra.mxu0 0.0
      %1342 = vmatprep.subr.mxu0 0.0
      %1343 = vmatpush1.msra.mxu0 0.0
      %1344 = vmatprep.mubr.f32.mxu0 0.0
      %1345 = vmatmul.mubr.f32.gmra.mrb[0].mxu0 %v1275
      %v1346 = vpop.f32.mrb[0].mxu0
      %v1347 = vadd.f32 %v1264, %v1346
      %v1348 = vpop.f32.mrb[0].mxu0
      %v1349 = vadd.f32 %v1266, %v1348
      %1350 = vmatprep.mubr.f32.mxu0 0.0
      %1351 = vmatmul.mubr.f32.gmra.mrb[0].mxu0 %v1278
      %v1352 = vpop.f32.mrb[0].mxu0
      %v1353 = vadd.f32 %v1270, %v1352
      %v1354 = vpop.f32.mrb[0].mxu0
      %v1355 = vadd.f32 %v1272, %v1354
      %1356 = vdwg.mxu0
      %s1357 = scalar_lea.vmem %s5, 64
      %v1358 = vld [vmem:[%s1357] sm:$0xff]
      %v1359 = vld [vmem:[%s1357 + $0x8] sm:$0xff]
      %v1361 = vsel %vm351, %v1358, 0
      %v1364 = vsel %vm351, %v1359, 0
      %1366 = vmatprep.subr.mxu0 %v1151
      %1367 = vmatpush1.msra.mxu0 %v1149
      %1368 = vmatprep.subr.mxu0 %v1157
      %1369 = vmatpush1.msra.mxu0 %v1155
      %1370 = vmatprep.subr.mxu0 0.0
      %1371 = vmatpush1.msra.mxu0 0.0
      %1372 = vmatprep.subr.mxu0 0.0
      %1373 = vmatpush1.msra.mxu0 0.0
      %1374 = vmatprep.subr.mxu0 0.0
      %1375 = vmatpush1.msra.mxu0 0.0
      %1376 = vmatprep.subr.mxu0 0.0
      %1377 = vmatpush1.msra.mxu0 0.0
      %1378 = vmatprep.subr.mxu0 0.0
      %1379 = vmatpush1.msra.mxu0 0.0
      %1380 = vmatprep.subr.mxu0 0.0
      %1381 = vmatpush1.msra.mxu0 0.0
      %1382 = vmatprep.subr.mxu0 0.0
      %1383 = vmatpush1.msra.mxu0 0.0
      %1384 = vmatprep.subr.mxu0 0.0
      %1385 = vmatpush1.msra.mxu0 0.0
      %1386 = vmatprep.subr.mxu0 0.0
      %1387 = vmatpush1.msra.mxu0 0.0
      %1388 = vmatprep.subr.mxu0 0.0
      %1389 = vmatpush1.msra.mxu0 0.0
      %1390 = vmatprep.subr.mxu0 0.0
      %1391 = vmatpush1.msra.mxu0 0.0
      %1392 = vmatprep.subr.mxu0 0.0
      %1393 = vmatpush1.msra.mxu0 0.0
      %1394 = vmatprep.subr.mxu0 0.0
      %1395 = vmatpush1.msra.mxu0 0.0
      %1396 = vmatprep.subr.mxu0 0.0
      %1397 = vmatpush1.msra.mxu0 0.0
      %1398 = vmatprep.subr.mxu0 0.0
      %1399 = vmatpush1.msra.mxu0 0.0
      %1400 = vmatprep.subr.mxu0 0.0
      %1401 = vmatpush1.msra.mxu0 0.0
      %1402 = vmatprep.subr.mxu0 0.0
      %1403 = vmatpush1.msra.mxu0 0.0
      %1404 = vmatprep.subr.mxu0 0.0
      %1405 = vmatpush1.msra.mxu0 0.0
      %1406 = vmatprep.subr.mxu0 0.0
      %1407 = vmatpush1.msra.mxu0 0.0
      %1408 = vmatprep.subr.mxu0 0.0
      %1409 = vmatpush1.msra.mxu0 0.0
      %1410 = vmatprep.subr.mxu0 0.0
      %1411 = vmatpush1.msra.mxu0 0.0
      %1412 = vmatprep.subr.mxu0 0.0
      %1413 = vmatpush1.msra.mxu0 0.0
      %1414 = vmatprep.subr.mxu0 0.0
      %1415 = vmatpush1.msra.mxu0 0.0
      %1416 = vmatprep.subr.mxu0 0.0
      %1417 = vmatpush1.msra.mxu0 0.0
      %1418 = vmatprep.subr.mxu0 0.0
      %1419 = vmatpush1.msra.mxu0 0.0
      %1420 = vmatprep.subr.mxu0 0.0
      %1421 = vmatpush1.msra.mxu0 0.0
      %1422 = vmatprep.subr.mxu0 0.0
      %1423 = vmatpush1.msra.mxu0 0.0
      %1424 = vmatprep.subr.mxu0 0.0
      %1425 = vmatpush1.msra.mxu0 0.0
      %1426 = vmatprep.subr.mxu0 0.0
      %1427 = vmatpush1.msra.mxu0 0.0
      %1428 = vmatprep.subr.mxu0 0.0
      %1429 = vmatpush1.msra.mxu0 0.0
      %1430 = vmatprep.mubr.f32.mxu0 0.0
      %1431 = vmatmul.mubr.f32.gmra.mrb[0].mxu0 %v1361
      %v1432 = vpop.f32.mrb[0].mxu0
      %v1433 = vadd.f32 0.0, %v1432
      %v1434 = vpop.f32.mrb[0].mxu0
      %v1435 = vadd.f32 0.0, %v1434
      %1436 = vmatprep.mubr.f32.mxu0 0.0
      %1437 = vmatmul.mubr.f32.gmra.mrb[0].mxu0 %v1364
      %v1438 = vpop.f32.mrb[0].mxu0
      %v1439 = vadd.f32 0.0, %v1438
      %v1440 = vpop.f32.mrb[0].mxu0
      %v1441 = vadd.f32 0.0, %v1440
      %1442 = vdwg.mxu0
      %v1444 = vsel %vm351, %v1186, 0
      %v1447 = vsel %vm351, %v1187, 0
      %1449 = vmatprep.subr.mxu0 %v1179
      %1450 = vmatpush1.msra.mxu0 %v1178
      %1451 = vmatprep.subr.mxu0 %v1181
      %1452 = vmatpush1.msra.mxu0 %v1180
      %1453 = vmatprep.subr.mxu0 0.0
      %1454 = vmatpush1.msra.mxu0 0.0
      %1455 = vmatprep.subr.mxu0 0.0
      %1456 = vmatpush1.msra.mxu0 0.0
      %1457 = vmatprep.subr.mxu0 0.0
      %1458 = vmatpush1.msra.mxu0 0.0
      %1459 = vmatprep.subr.mxu0 0.0
      %1460 = vmatpush1.msra.mxu0 0.0
      %1461 = vmatprep.subr.mxu0 0.0
      %1462 = vmatpush1.msra.mxu0 0.0
      %1463 = vmatprep.subr.mxu0 0.0
      %1464 = vmatpush1.msra.mxu0 0.0
      %1465 = vmatprep.subr.mxu0 0.0
      %1466 = vmatpush1.msra.mxu0 0.0
      %1467 = vmatprep.subr.mxu0 0.0
      %1468 = vmatpush1.msra.mxu0 0.0
      %1469 = vmatprep.subr.mxu0 0.0
      %1470 = vmatpush1.msra.mxu0 0.0
      %1471 = vmatprep.subr.mxu0 0.0
      %1472 = vmatpush1.msra.mxu0 0.0
      %1473 = vmatprep.subr.mxu0 0.0
      %1474 = vmatpush1.msra.mxu0 0.0
      %1475 = vmatprep.subr.mxu0 0.0
      %1476 = vmatpush1.msra.mxu0 0.0
      %1477 = vmatprep.subr.mxu0 0.0
      %1478 = vmatpush1.msra.mxu0 0.0
      %1479 = vmatprep.subr.mxu0 0.0
      %1480 = vmatpush1.msra.mxu0 0.0
      %1481 = vmatprep.subr.mxu0 0.0
      %1482 = vmatpush1.msra.mxu0 0.0
      %1483 = vmatprep.subr.mxu0 0.0
      %1484 = vmatpush1.msra.mxu0 0.0
      %1485 = vmatprep.subr.mxu0 0.0
      %1486 = vmatpush1.msra.mxu0 0.0
      %1487 = vmatprep.subr.mxu0 0.0
      %1488 = vmatpush1.msra.mxu0 0.0
      %1489 = vmatprep.subr.mxu0 0.0
      %1490 = vmatpush1.msra.mxu0 0.0
      %1491 = vmatprep.subr.mxu0 0.0
      %1492 = vmatpush1.msra.mxu0 0.0
      %1493 = vmatprep.subr.mxu0 0.0
      %1494 = vmatpush1.msra.mxu0 0.0
      %1495 = vmatprep.subr.mxu0 0.0
      %1496 = vmatpush1.msra.mxu0 0.0
      %1497 = vmatprep.subr.mxu0 0.0
      %1498 = vmatpush1.msra.mxu0 0.0
      %1499 = vmatprep.subr.mxu0 0.0
      %1500 = vmatpush1.msra.mxu0 0.0
      %1501 = vmatprep.subr.mxu0 0.0
      %1502 = vmatpush1.msra.mxu0 0.0
      %1503 = vmatprep.subr.mxu0 0.0
      %1504 = vmatpush1.msra.mxu0 0.0
      %1505 = vmatprep.subr.mxu0 0.0
      %1506 = vmatpush1.msra.mxu0 0.0
      %1507 = vmatprep.subr.mxu0 0.0
      %1508 = vmatpush1.msra.mxu0 0.0
      %1509 = vmatprep.subr.mxu0 0.0
      %1510 = vmatpush1.msra.mxu0 0.0
      %1511 = vmatprep.subr.mxu0 0.0
      %1512 = vmatpush1.msra.mxu0 0.0
      %1513 = vmatprep.mubr.f32.mxu0 0.0
      %1514 = vmatmul.mubr.f32.gmra.mrb[0].mxu0 %v1444
      %v1515 = vpop.f32.mrb[0].mxu0
      %v1516 = vadd.f32 %v1433, %v1515
      %v1517 = vpop.f32.mrb[0].mxu0
      %v1518 = vadd.f32 %v1435, %v1517
      %1519 = vmatprep.mubr.f32.mxu0 0.0
      %1520 = vmatmul.mubr.f32.gmra.mrb[0].mxu0 %v1447
      %v1521 = vpop.f32.mrb[0].mxu0
      %v1522 = vadd.f32 %v1439, %v1521
      %v1523 = vpop.f32.mrb[0].mxu0
      %v1524 = vadd.f32 %v1441, %v1523
      %1525 = vdwg.mxu0
      %1526 = vrot.lane.b32.xlu0 %v1149, 126
      %v1527 = vpop.permute.xlu0 %1526
      %1528 = vrot.lane.b32.xlu0 %v1155, 126
      %v1529 = vpop.permute.xlu0 %1528
      %1530 = vrot.lane.b32.xlu0 %v1151, 126
      %v1531 = vpop.permute.xlu0 %1530
      %1532 = vrot.lane.b32.xlu0 %v1157, 126
      %v1533 = vpop.permute.xlu0 %1532
      %vm1534 = vcmp.lt.s32.totalorder %v436, 126
      %v1535 = vsel %vm1534, %v1527, %v1531
      %v1536 = vsel %vm1534, %v1529, %v1533
      %v1537 = vsel %vm1534, %v1531, %v1527
      %v1538 = vsel %vm1534, %v1533, %v1529
      %vm1539 = vcmp.lt.s32.totalorder %v436, 254
      %vm1540 = vcmp.lt.s32.totalorder %v437, 254
      %v1541 = vsel %vm1539, %v1535, 0.0
      %v1542 = vsel %vm1540, %v1537, 0.0
      %v1543 = vsel %vm1539, %v1536, 0.0
      %v1544 = vsel %vm1540, %v1538, 0.0
      %s1545 = scalar_lea.vmem %s3, 80
      %v1546 = vld [vmem:[%s1545] sm:$0xff]
      %v1547 = vld [vmem:[%s1545 + $0x8] sm:$0xff]
      %v1549 = vsel %vm351, %v1546, 0
      %v1552 = vsel %vm351, %v1547, 0
      %1554 = vmatprep.subr.mxu0 %v1542
      %1555 = vmatpush1.msra.mxu0 %v1541
      %1556 = vmatprep.subr.mxu0 %v1544
      %1557 = vmatpush1.msra.mxu0 %v1543
      %1558 = vmatprep.subr.mxu0 0.0
      %1559 = vmatpush1.msra.mxu0 0.0
      %1560 = vmatprep.subr.mxu0 0.0
      %1561 = vmatpush1.msra.mxu0 0.0
      %1562 = vmatprep.subr.mxu0 0.0
      %1563 = vmatpush1.msra.mxu0 0.0
      %1564 = vmatprep.subr.mxu0 0.0
      %1565 = vmatpush1.msra.mxu0 0.0
      %1566 = vmatprep.subr.mxu0 0.0
      %1567 = vmatpush1.msra.mxu0 0.0
      %1568 = vmatprep.subr.mxu0 0.0
      %1569 = vmatpush1.msra.mxu0 0.0
      %1570 = vmatprep.subr.mxu0 0.0
      %1571 = vmatpush1.msra.mxu0 0.0
      %1572 = vmatprep.subr.mxu0 0.0
      %1573 = vmatpush1.msra.mxu0 0.0
      %1574 = vmatprep.subr.mxu0 0.0
      %1575 = vmatpush1.msra.mxu0 0.0
      %1576 = vmatprep.subr.mxu0 0.0
      %1577 = vmatpush1.msra.mxu0 0.0
      %1578 = vmatprep.subr.mxu0 0.0
      %1579 = vmatpush1.msra.mxu0 0.0
      %1580 = vmatprep.subr.mxu0 0.0
      %1581 = vmatpush1.msra.mxu0 0.0
      %1582 = vmatprep.subr.mxu0 0.0
      %1583 = vmatpush1.msra.mxu0 0.0
      %1584 = vmatprep.subr.mxu0 0.0
      %1585 = vmatpush1.msra.mxu0 0.0
      %1586 = vmatprep.subr.mxu0 0.0
      %1587 = vmatpush1.msra.mxu0 0.0
      %1588 = vmatprep.subr.mxu0 0.0
      %1589 = vmatpush1.msra.mxu0 0.0
      %1590 = vmatprep.subr.mxu0 0.0
      %1591 = vmatpush1.msra.mxu0 0.0
      %1592 = vmatprep.subr.mxu0 0.0
      %1593 = vmatpush1.msra.mxu0 0.0
      %1594 = vmatprep.subr.mxu0 0.0
      %1595 = vmatpush1.msra.mxu0 0.0
      %1596 = vmatprep.subr.mxu0 0.0
      %1597 = vmatpush1.msra.mxu0 0.0
      %1598 = vmatprep.subr.mxu0 0.0
      %1599 = vmatpush1.msra.mxu0 0.0
      %1600 = vmatprep.subr.mxu0 0.0
      %1601 = vmatpush1.msra.mxu0 0.0
      %1602 = vmatprep.subr.mxu0 0.0
      %1603 = vmatpush1.msra.mxu0 0.0
      %1604 = vmatprep.subr.mxu0 0.0
      %1605 = vmatpush1.msra.mxu0 0.0
      %1606 = vmatprep.subr.mxu0 0.0
      %1607 = vmatpush1.msra.mxu0 0.0
      %1608 = vmatprep.subr.mxu0 0.0
      %1609 = vmatpush1.msra.mxu0 0.0
      %1610 = vmatprep.subr.mxu0 0.0
      %1611 = vmatpush1.msra.mxu0 0.0
      %1612 = vmatprep.subr.mxu0 0.0
      %1613 = vmatpush1.msra.mxu0 0.0
      %1614 = vmatprep.subr.mxu0 0.0
      %1615 = vmatpush1.msra.mxu0 0.0
      %1616 = vmatprep.subr.mxu0 0.0
      %1617 = vmatpush1.msra.mxu0 0.0
      %1618 = vmatprep.mubr.f32.mxu0 0.0
      %1619 = vmatmul.mubr.f32.gmra.mrb[0].mxu0 %v1549
      %v1620 = vpop.f32.mrb[0].mxu0
      %v1621 = vadd.f32 0.0, %v1620
      %v1622 = vpop.f32.mrb[0].mxu0
      %v1623 = vadd.f32 0.0, %v1622
      %1624 = vmatprep.mubr.f32.mxu0 0.0
      %1625 = vmatmul.mubr.f32.gmra.mrb[0].mxu0 %v1552
      %v1626 = vpop.f32.mrb[0].mxu0
      %v1627 = vadd.f32 0.0, %v1626
      %v1628 = vpop.f32.mrb[0].mxu0
      %v1629 = vadd.f32 0.0, %v1628
      %1630 = vdwg.mxu0
      %v1631 = vadd.f32 %v1347, %v1621
      %v1632 = vadd.f32 %v1349, %v1623
      %v1633 = vadd.f32 %v1353, %v1627
      %v1634 = vadd.f32 %v1355, %v1629
      %s1635 = scalar_lea.vmem %s5, 80
      %v1636 = vld [vmem:[%s1635] sm:$0xff]
      %v1637 = vld [vmem:[%s1635 + $0x8] sm:$0xff]
      %v1639 = vsel %vm351, %v1636, 0
      %v1642 = vsel %vm351, %v1637, 0
      %1644 = vmatprep.subr.mxu0 %v1542
      %1645 = vmatpush1.msra.mxu0 %v1541
      %1646 = vmatprep.subr.mxu0 %v1544
      %1647 = vmatpush1.msra.mxu0 %v1543
      %1648 = vmatprep.subr.mxu0 0.0
      %1649 = vmatpush1.msra.mxu0 0.0
      %1650 = vmatprep.subr.mxu0 0.0
      %1651 = vmatpush1.msra.mxu0 0.0
      %1652 = vmatprep.subr.mxu0 0.0
      %1653 = vmatpush1.msra.mxu0 0.0
      %1654 = vmatprep.subr.mxu0 0.0
      %1655 = vmatpush1.msra.mxu0 0.0
      %1656 = vmatprep.subr.mxu0 0.0
      %1657 = vmatpush1.msra.mxu0 0.0
      %1658 = vmatprep.subr.mxu0 0.0
      %1659 = vmatpush1.msra.mxu0 0.0
      %1660 = vmatprep.subr.mxu0 0.0
      %1661 = vmatpush1.msra.mxu0 0.0
      %1662 = vmatprep.subr.mxu0 0.0
      %1663 = vmatpush1.msra.mxu0 0.0
      %1664 = vmatprep.subr.mxu0 0.0
      %1665 = vmatpush1.msra.mxu0 0.0
      %1666 = vmatprep.subr.mxu0 0.0
      %1667 = vmatpush1.msra.mxu0 0.0
      %1668 = vmatprep.subr.mxu0 0.0
      %1669 = vmatpush1.msra.mxu0 0.0
      %1670 = vmatprep.subr.mxu0 0.0
      %1671 = vmatpush1.msra.mxu0 0.0
      %1672 = vmatprep.subr.mxu0 0.0
      %1673 = vmatpush1.msra.mxu0 0.0
      %1674 = vmatprep.subr.mxu0 0.0
      %1675 = vmatpush1.msra.mxu0 0.0
      %1676 = vmatprep.subr.mxu0 0.0
      %1677 = vmatpush1.msra.mxu0 0.0
      %1678 = vmatprep.subr.mxu0 0.0
      %1679 = vmatpush1.msra.mxu0 0.0
      %1680 = vmatprep.subr.mxu0 0.0
      %1681 = vmatpush1.msra.mxu0 0.0
      %1682 = vmatprep.subr.mxu0 0.0
      %1683 = vmatpush1.msra.mxu0 0.0
      %1684 = vmatprep.subr.mxu0 0.0
      %1685 = vmatpush1.msra.mxu0 0.0
      %1686 = vmatprep.subr.mxu0 0.0
      %1687 = vmatpush1.msra.mxu0 0.0
      %1688 = vmatprep.subr.mxu0 0.0
      %1689 = vmatpush1.msra.mxu0 0.0
      %1690 = vmatprep.subr.mxu0 0.0
      %1691 = vmatpush1.msra.mxu0 0.0
      %1692 = vmatprep.subr.mxu0 0.0
      %1693 = vmatpush1.msra.mxu0 0.0
      %1694 = vmatprep.subr.mxu0 0.0
      %1695 = vmatpush1.msra.mxu0 0.0
      %1696 = vmatprep.subr.mxu0 0.0
      %1697 = vmatpush1.msra.mxu0 0.0
      %1698 = vmatprep.subr.mxu0 0.0
      %1699 = vmatpush1.msra.mxu0 0.0
      %1700 = vmatprep.subr.mxu0 0.0
      %1701 = vmatpush1.msra.mxu0 0.0
      %1702 = vmatprep.subr.mxu0 0.0
      %1703 = vmatpush1.msra.mxu0 0.0
      %1704 = vmatprep.subr.mxu0 0.0
      %1705 = vmatpush1.msra.mxu0 0.0
      %1706 = vmatprep.subr.mxu0 0.0
      %1707 = vmatpush1.msra.mxu0 0.0
      %1708 = vmatprep.mubr.f32.mxu0 0.0
      %1709 = vmatmul.mubr.f32.gmra.mrb[0].mxu0 %v1639
      %v1710 = vpop.f32.mrb[0].mxu0
      %v1711 = vadd.f32 0.0, %v1710
      %v1712 = vpop.f32.mrb[0].mxu0
      %v1713 = vadd.f32 0.0, %v1712
      %1714 = vmatprep.mubr.f32.mxu0 0.0
      %1715 = vmatmul.mubr.f32.gmra.mrb[0].mxu0 %v1642
      %v1716 = vpop.f32.mrb[0].mxu0
      %v1717 = vadd.f32 0.0, %v1716
      %v1718 = vpop.f32.mrb[0].mxu0
      %v1719 = vadd.f32 0.0, %v1718
      %1720 = vdwg.mxu0
      %v1721 = vadd.f32 %v1516, %v1711
      %v1722 = vadd.f32 %v1518, %v1713
      %v1723 = vadd.f32 %v1522, %v1717
      %v1724 = vadd.f32 %v1524, %v1719
      %s1725 = scalar_lea.vmem %s4, 16
      %v1726 = vld [vmem:[%s1725] sm:$0xff]
      %v1727 = vld [vmem:[%s1725 + $0x8] sm:$0xff]
      %1729 = vset.pattern.permute.xlu0 0
      %1730 = vperm.xlu0 %1729, %v1726
      %v1731 = vpop.permute.xlu0 %1730
      %1734 = vset.pattern.permute.xlu0 0
      %1735 = vperm.xlu0 %1734, %v1727
      %v1736 = vpop.permute.xlu0 %1735
      %v1738 = vadd.f32 %v1631, %v1731
      %v1739 = vadd.f32 %v1632, %v1731
      %v1740 = vadd.f32 %v1633, %v1736
      %v1741 = vadd.f32 %v1634, %v1736
      %s1742 = scalar_lea.vmem %s6, 16
      %v1743 = vld [vmem:[%s1742] sm:$0xff]
      %v1744 = vld [vmem:[%s1742 + $0x8] sm:$0xff]
      %1746 = vset.pattern.permute.xlu0 0
      %1747 = vperm.xlu0 %1746, %v1743
      %v1748 = vpop.permute.xlu0 %1747
      %1751 = vset.pattern.permute.xlu0 0
      %1752 = vperm.xlu0 %1751, %v1744
      %v1753 = vpop.permute.xlu0 %1752
      %v1755 = vadd.f32 %v1721, %v1748
      %v1756 = vadd.f32 %v1722, %v1748
      %v1757 = vadd.f32 %v1723, %v1753
      %v1758 = vadd.f32 %v1724, %v1753
      %v1759 = vtanh.pop %v1738
      %v1760 = vtanh.pop %v1739
      %v1761 = vtanh.pop %v1740
      %v1762 = vtanh.pop %v1741
      %v1763 = vsub.f32 0.0, %v1755
      %v1764 = vsub.f32 0.0, %v1756
      %v1765 = vsub.f32 0.0, %v1757
      %v1766 = vsub.f32 0.0, %v1758
      %v1767 = vmul.f32 %v1763, 1.442695
      %v1768 = vpow.pop %v1767
      %v1769 = vmul.f32 %v1764, 1.442695
      %v1770 = vpow.pop %v1769
      %v1771 = vmul.f32 %v1765, 1.442695
      %v1772 = vpow.pop %v1771
      %v1773 = vmul.f32 %v1766, 1.442695
      %v1774 = vpow.pop %v1773
      %v1775 = vadd.f32 %v1768, 1.0
      %v1776 = vadd.f32 %v1770, 1.0
      %v1777 = vadd.f32 %v1772, 1.0
      %v1778 = vadd.f32 %v1774, 1.0
      %v1779 = vrcp.pop %v1775
      %v1780 = vmul.f32 1.0, %v1779
      %v1781 = vrcp.pop %v1776
      %v1782 = vmul.f32 1.0, %v1781
      %v1783 = vrcp.pop %v1777
      %v1784 = vmul.f32 1.0, %v1783
      %v1785 = vrcp.pop %v1778
      %v1786 = vmul.f32 1.0, %v1785
      %v1787 = vmul.f32 %v1759, %v1780
      %v1788 = vmul.f32 %v1760, %v1782
      %v1789 = vmul.f32 %v1761, %v1784
      %v1790 = vmul.f32 %v1762, %v1786
      %s1791 = scalar_lea.vmem %s7, 16
      %v1792 = vld [vmem:[%s1791] sm:$0xff]
      %v1793 = vld [vmem:[%s1791 + $0x8] sm:$0xff]
      %s1794 = scalar_lea.vmem %s8, 16
      %v1795 = vld [vmem:[%s1794] sm:$0xff]
      %v1796 = vld [vmem:[%s1794 + $0x8] sm:$0xff]
      %1798 = vset.pattern.permute.xlu0 0
      %1799 = vperm.xlu0 %1798, %v1795
      %v1800 = vpop.permute.xlu0 %1799
      %1803 = vset.pattern.permute.xlu0 0
      %1804 = vperm.xlu0 %1803, %v1796
      %v1805 = vpop.permute.xlu0 %1804
      %v1808 = vsel %vm351, %v1792, 0
      %v1811 = vsel %vm351, %v1793, 0
      %1813 = vmatprep.subr.mxu0 %v1788
      %1814 = vmatpush1.msra.mxu0 %v1787
      %1815 = vmatprep.subr.mxu0 %v1790
      %1816 = vmatpush1.msra.mxu0 %v1789
      %1817 = vmatprep.subr.mxu0 0.0
      %1818 = vmatpush1.msra.mxu0 0.0
      %1819 = vmatprep.subr.mxu0 0.0
      %1820 = vmatpush1.msra.mxu0 0.0
      %1821 = vmatprep.subr.mxu0 0.0
      %1822 = vmatpush1.msra.mxu0 0.0
      %1823 = vmatprep.subr.mxu0 0.0
      %1824 = vmatpush1.msra.mxu0 0.0
      %1825 = vmatprep.subr.mxu0 0.0
      %1826 = vmatpush1.msra.mxu0 0.0
      %1827 = vmatprep.subr.mxu0 0.0
      %1828 = vmatpush1.msra.mxu0 0.0
      %1829 = vmatprep.subr.mxu0 0.0
      %1830 = vmatpush1.msra.mxu0 0.0
      %1831 = vmatprep.subr.mxu0 0.0
      %1832 = vmatpush1.msra.mxu0 0.0
      %1833 = vmatprep.subr.mxu0 0.0
      %1834 = vmatpush1.msra.mxu0 0.0
      %1835 = vmatprep.subr.mxu0 0.0
      %1836 = vmatpush1.msra.mxu0 0.0
      %1837 = vmatprep.subr.mxu0 0.0
      %1838 = vmatpush1.msra.mxu0 0.0
      %1839 = vmatprep.subr.mxu0 0.0
      %1840 = vmatpush1.msra.mxu0 0.0
      %1841 = vmatprep.subr.mxu0 0.0
      %1842 = vmatpush1.msra.mxu0 0.0
      %1843 = vmatprep.subr.mxu0 0.0
      %1844 = vmatpush1.msra.mxu0 0.0
      %1845 = vmatprep.subr.mxu0 0.0
      %1846 = vmatpush1.msra.mxu0 0.0
      %1847 = vmatprep.subr.mxu0 0.0
      %1848 = vmatpush1.msra.mxu0 0.0
      %1849 = vmatprep.subr.mxu0 0.0
      %1850 = vmatpush1.msra.mxu0 0.0
      %1851 = vmatprep.subr.mxu0 0.0
      %1852 = vmatpush1.msra.mxu0 0.0
      %1853 = vmatprep.subr.mxu0 0.0
      %1854 = vmatpush1.msra.mxu0 0.0
      %1855 = vmatprep.subr.mxu0 0.0
      %1856 = vmatpush1.msra.mxu0 0.0
      %1857 = vmatprep.subr.mxu0 0.0
      %1858 = vmatpush1.msra.mxu0 0.0
      %1859 = vmatprep.subr.mxu0 0.0
      %1860 = vmatpush1.msra.mxu0 0.0
      %1861 = vmatprep.subr.mxu0 0.0
      %1862 = vmatpush1.msra.mxu0 0.0
      %1863 = vmatprep.subr.mxu0 0.0
      %1864 = vmatpush1.msra.mxu0 0.0
      %1865 = vmatprep.subr.mxu0 0.0
      %1866 = vmatpush1.msra.mxu0 0.0
      %1867 = vmatprep.subr.mxu0 0.0
      %1868 = vmatpush1.msra.mxu0 0.0
      %1869 = vmatprep.subr.mxu0 0.0
      %1870 = vmatpush1.msra.mxu0 0.0
      %1871 = vmatprep.subr.mxu0 0.0
      %1872 = vmatpush1.msra.mxu0 0.0
      %1873 = vmatprep.subr.mxu0 0.0
      %1874 = vmatpush1.msra.mxu0 0.0
      %1875 = vmatprep.subr.mxu0 0.0
      %1876 = vmatpush1.msra.mxu0 0.0
      %1877 = vmatprep.mubr.f32.mxu0 0.0
      %1878 = vmatmul.mubr.f32.gmra.mrb[0].mxu0 %v1808
      %v1879 = vpop.f32.mrb[0].mxu0
      %v1880 = vadd.f32 %v1800, %v1879
      %v1881 = vpop.f32.mrb[0].mxu0
      %v1882 = vadd.f32 %v1800, %v1881
      %1883 = vmatprep.mubr.f32.mxu0 0.0
      %1884 = vmatmul.mubr.f32.gmra.mrb[0].mxu0 %v1811
      %v1885 = vpop.f32.mrb[0].mxu0
      %v1886 = vadd.f32 %v1805, %v1885
      %v1887 = vpop.f32.mrb[0].mxu0
      %v1888 = vadd.f32 %v1805, %v1887
      %1889 = vdwg.mxu0
      %v1890 = vadd.f32 %v1159, %v1880
      %v1891 = vadd.f32 %v1160, %v1882
      %v1892 = vadd.f32 %v1161, %v1886
      %v1893 = vadd.f32 %v1162, %v1888
      %1894 = vst [vmem:[%s332] sm:$0xff] %v1890
      %1895 = vst [vmem:[%s332 + $0x8] sm:$0xff] %v1891
      %1896 = vst [vmem:[%s332 + $0x10] sm:$0xff] %v1892
      %1897 = vst [vmem:[%s332 + $0x18] sm:$0xff] %v1893
      %p1898 = scmp.lt.s32.totalorder %s20, 7
      %s1899 = scalar_select %p1898, %s20, 7
      %s1900 = smul.addr %s1899, 4
      %s1901 = smul.addr %s1900, 8
      %s1902 = scalar_lea.vmem %s9, %s1901
      // Predicated region
      $region57: #{wavegram_encoder_forward.8} parent=55 // pred_check
        %p1903 = pneg %p232
      $region58: #{wavegram_encoder_forward.8} parent=55 // pred_check_branch
        %1905 = sbr.rel (%p1903) target = $region60
      $region59: #{wavegram_encoder_forward.8} parent=55 // pred_region
        _
      $region60: #{wavegram_encoder_forward.8} parent=55 // pred_fallthru
        _
    $region56: #{wavegram_encoder_forward.8} parent=5 // pred_fallthru
      _
    %p1906 = scmp.le.s32.totalorder 2, %s15
    // Predicated region
    $region61: #{wavegram_encoder_forward.8} parent=5 // pred_check
      %p1907 = pneg %p1906
    $region62: #{wavegram_encoder_forward.8} parent=5 // pred_check_branch
      %1909 = sbr.rel (%p1907) target = $region64
    $region63: #{wavegram_encoder_forward.8} parent=5 // pred_region
      %s1910 = ssub.s32 %s15, 2
      // Predicated region
      $region65: #{wavegram_encoder_forward.8} parent=63 // pred_check
        %p1911 = pneg %p238
      $region66: #{wavegram_encoder_forward.8} parent=63 // pred_check_branch
        %1913 = sbr.rel (%p1911) target = $region68
      $region67: #{wavegram_encoder_forward.8} parent=63 // pred_region
        %p1914 = scmp.lt.s32.totalorder %s21, 7
        %s1915 = scalar_select %p1914, %s21, 7
        %s1916 = smul.addr %s1915, 4
        %s1917 = smul.addr %s1916, 8
        %s1918 = scalar_lea.vmem %s9, %s1917
      $region68: #{wavegram_encoder_forward.8} parent=63 // pred_fallthru
        _
    $region64: #{wavegram_encoder_forward.8} parent=5 // pred_fallthru
      _
  $region6: #{wavegram_encoder_forward.8} parent=0 // loop_footer
    %s19 = sadd.s32 1, %s15
  $region7: #{wavegram_encoder_forward.8} parent=0 // loop_footer_branch
    %14 = sbr.rel target = $region3
  $region8: #{wavegram_encoder_forward.8} parent=0 // loop_exit
    _

</llo_original>
